<compile_context>
chip_gen: v5e
topology: v5e:2x2
jax: 0.10.0
libtpu: 0.0.40
codegen_flags: <defaults>
</compile_context>

<pallas_src>
import functools
import math

import numpy as np
import jax
import jax.numpy as jnp
from jax.experimental import pallas as pl
from jax.experimental.pallas import tpu as pltpu

TILE = 1024   # rays per grid step (sweep 512-2048 on real workloads)
LANE = 128    # lane width; output / pose slabs are padded to this multiple


# --------------------------------------------------------------------------
# Parameter / buffer setup (matches CTKNet.__init__) — plain JAX
# --------------------------------------------------------------------------
def compute_bezier_coefficient_mat(num_pts, order_curve):
    t = jnp.linspace(0.0, 1.0, num_pts)
    coeffs = []
    for i in range(order_curve + 1):
        binom = float(math.comb(order_curve, i))
        coeffs.append(binom * (1.0 - t) ** (order_curve - i) * t ** i)
    return jnp.stack(coeffs, axis=-1).astype(jnp.float32)  # (num_pts, order+1)


def _hat(w):
    x, y, z = w[..., 0], w[..., 1], w[..., 2]
    zeros = jnp.zeros_like(x)
    return jnp.stack(
        [
            jnp.stack([zeros, -z, y], -1),
            jnp.stack([z, zeros, -x], -1),
            jnp.stack([-y, x, zeros], -1),
        ],
        -2,
    )


def _se3_to_mat(se3):
    """se3: (..., 6) = [log_translation, log_rotation]  (pytorch3d convention).

    Returns (..., 4, 4) matrices in the module's (transposed / column-vector)
    convention: [[R^T, V @ t], [0, 1]] — mirrors se3_exp_map followed by
    transpose(-1, -2) in CTKNet.se3_to_mat.
    """
    t = se3[..., :3]
    w = se3[..., 3:]
    theta2 = jnp.sum(w * w, axis=-1, keepdims=True)
    theta = jnp.sqrt(theta2)
    small = theta < 1e-4
    safe_t = jnp.where(small, 1.0, theta)
    safe_t2 = jnp.where(small, 1.0, theta2)
    A = jnp.where(small, 1.0 - theta2 / 6.0, jnp.sin(theta) / safe_t)
    B = jnp.where(small, 0.5 - theta2 / 24.0, (1.0 - jnp.cos(theta)) / safe_t2)
    C = jnp.where(small, 1.0 / 6.0 - theta2 / 120.0,
                  (theta - jnp.sin(theta)) / (safe_t2 * safe_t))

    H = _hat(w)
    H2 = H @ H
    eye3 = jnp.broadcast_to(jnp.eye(3, dtype=se3.dtype), H.shape)
    R = eye3 + A[..., None] * H + B[..., None] * H2
    V = eye3 + B[..., None] * H + C[..., None] * H2
    trans = (V @ t[..., None])[..., 0]

    batch = se3.shape[:-1]
    mat = jnp.zeros(batch + (4, 4), dtype=se3.dtype)
    mat = mat.at[..., :3, :3].set(jnp.swapaxes(R, -1, -2))    # R^T
    mat = mat.at[..., :3, 3].set(trans)
    mat = mat.at[..., 3, 3].set(1.0)
    return mat


def compute_poses_trajectory(control_points, poses_init, bezier_coeff, order_curve):
    """Returns (num_imgs, num_pts, 4, 4). Mirrors CTKNet.compute_poses_trajectory
    with recenter_traj=False."""
    num_imgs = poses_init.shape[0]
    weighted = bezier_coeff[None, :, :, None] * control_points[:, None, :, :]
    mats = _se3_to_mat(weighted)                              # (ni, np, o+1, 4, 4)
    delta = jnp.broadcast_to(jnp.eye(4, dtype=jnp.float32), mats.shape[:2] + (4, 4))
    for k in range(order_curve + 1):
        delta = mats[:, :, k] @ delta
    poses_44 = (jnp.zeros((num_imgs, 4, 4), jnp.float32)
                .at[:, :3, :4].set(poses_init)
                .at[:, 3, 3].set(1.0))
    return delta @ poses_44[:, None]                          # (ni, np, 4, 4)


def _pose_slabs(poses_traj, num_pts, lpad):
    """Pack per-image trajectory poses into four lane-padded column slabs.

    Column layout inside each slab is the FINAL bundle layout
    col = 6*p + 2*c + s   (p = trajectory sample, c = xyz component,
    s = 0 -> ray_o, s = 1 -> ray_d).
    Slabs A/B/C hold R[:, c, 0..2] at the s=1 columns (zeros elsewhere),
    slab T holds the translation at the s=0 columns, so the kernel output
    dx*A + dy*B - C + T is directly the interleaved (ray_o, ray_d) bundle.
    Returns (num_imgs, 4*lpad) with each slab on a 128-lane boundary.
    """
    ni = poses_traj.shape[0]
    p = jnp.arange(num_pts)[:, None]
    c = jnp.arange(3)[None, :]
    col_d = (6 * p + 2 * c + 1).reshape(-1)    # rays_d columns
    col_o = (6 * p + 2 * c).reshape(-1)        # rays_o columns

    def scatter(vals, cols):
        slab = jnp.zeros((ni, lpad), jnp.float32)
        return slab.at[:, cols].set(vals.reshape(ni, -1))

    A = scatter(poses_traj[:, :, :3, 0], col_d)
    B = scatter(poses_traj[:, :, :3, 1], col_d)
    C = scatter(poses_traj[:, :, :3, 2], col_d)
    T = scatter(poses_traj[:, :, :3, 3], col_o)
    return jnp.concatenate([A, B, C, T], axis=-1)             # (ni, 4*lpad)


# --------------------------------------------------------------------------
# Pallas kernel: per-ray direction + pose gather + interleaved bundle slab
# --------------------------------------------------------------------------
def ray_kernel(rays_ref, kp_ref, slabs_ref, out_ref, *, num_imgs, lpad):
    fx = kp_ref[0]
    fy = kp_ref[1]
    cx = kp_ref[2]
    cy = kp_ref[3]

    rays = rays_ref[...]                          # (TILE, 3) = [img_idx, x, y]
    idx = rays[:, 0:1].astype(jnp.int32)          # (TILE, 1)
    dx = (rays[:, 1:2] - cx) / fx                 # (TILE, 1)
    dy = -(rays[:, 2:3] - cy) / fy                # (TILE, 1)

    # Per-ray pose-slab gather via one-hot matmul. num_imgs is tiny so MXU
    # utilization is low, but the MXU slot is otherwise idle in this kernel.
    img_iota = jax.lax.broadcasted_iota(jnp.int32, (idx.shape[0], num_imgs), 1)
    onehot = (idx == img_iota).astype(jnp.float32)
    g = jnp.dot(onehot, slabs_ref[...],
                preferred_element_type=jnp.float32)           # (TILE, 4*lpad)

    # Lane-aligned (multiple-of-128) views — free.
    a = g[:, 0 * lpad:1 * lpad]     # R column 0 (at ray_d slots)
    b = g[:, 1 * lpad:2 * lpad]     # R column 1
    c = g[:, 2 * lpad:3 * lpad]     # R column 2
    t = g[:, 3 * lpad:4 * lpad]     # translation (at ray_o slots)

    # Lane-dense store: col 6p+2c   = rays_o component c (= t)
    #                   col 6p+2c+1 = rays_d component c (= dx*a + dy*b - c)
    out_ref[...] = dx * a + dy * b - c + t


def _rays_pallas(rays_packed, kparams, slabs, num_imgs, lpad, tile=TILE):
    N = rays_packed.shape[0]
    n_pad = pl.cdiv(N, tile) * tile
    rays_p = jnp.pad(rays_packed, ((0, n_pad - N), (0, 0)))

    kernel = functools.partial(ray_kernel, num_imgs=num_imgs, lpad=lpad)
    out = pl.pallas_call(
        kernel,
        out_shape=jax.ShapeDtypeStruct((n_pad, lpad), jnp.float32),
        grid=(n_pad // tile,),
        in_specs=[
            pl.BlockSpec((tile, 3), lambda i: (i, 0)),              # packed rays
            pl.BlockSpec(memory_space=pltpu.MemorySpace.SMEM),      # [fx,fy,cx,cy]
            pl.BlockSpec((num_imgs, 4 * lpad), lambda i: (0, 0)),   # pose slabs
        ],
        out_specs=pl.BlockSpec((tile, lpad), lambda i: (i, 0)),
        compiler_params=pltpu.CompilerParams(
            dimension_semantics=("parallel",)),
    )(rays_p, kparams, slabs)
    return out[:N]


# --------------------------------------------------------------------------
# CTKNet.forward equivalent
# --------------------------------------------------------------------------
def ctknet_forward(H, W, K, rays_x, rays_y, img_idx, control_points, poses,
                   bezier_coeff, num_pts, order_curve, tile=TILE):
    del H, W  # unused by the reference forward as well
    num_imgs = poses.shape[0]
    lpad = max(LANE, pl.cdiv(6 * num_pts, LANE) * LANE)

    # TODO(synk): init_poses_se3 / se3_log_map in __init__ produces an unused
    # local in the reference module; skipped here.
    poses_traj = compute_poses_trajectory(control_points, poses, bezier_coeff,
                                          order_curve)        # (ni, np, 4, 4)
    slabs = _pose_slabs(poses_traj, num_pts, lpad)            # (ni, 4*lpad)
    kparams = jnp.array([K[0, 0], K[1, 1], K[0, 2], K[1, 2]], jnp.float32)

    # One packed ray input: [img_idx (exact small int as f32), x, y]
    rays_packed = jnp.concatenate(
        [img_idx.astype(jnp.float32),
         rays_x.astype(jnp.float32),
         rays_y.astype(jnp.float32)], axis=-1)                # (N, 3)

    out = _rays_pallas(rays_packed, kparams, slabs, num_imgs, lpad, tile)

    N = rays_x.shape[0]
    # Kernel already emits the interleaved (o, d) layout; just drop lane pad.
    bundle = out[:, :6 * num_pts].reshape(N, num_pts, 3, 2)
    weights = jnp.full((N, num_pts), 1.0 / num_pts, jnp.float32)
    return bundle, weights, None


# --------------------------------------------------------------------------
if __name__ == "__main__":
    num_imgs, num_pts, order_curve = 4, 9, 5
    N = 2000          # non-multiple of TILE -> exercises the padded tail
    H = W = 16

    key = jax.random.PRNGKey(0)
    k1, k2, k3, k4, k5 = jax.random.split(key, 5)

    poses = jax.random.normal(k1, (num_imgs, 3, 4), jnp.float32)  # colmap [R|t]
    # learnable parameter (zeros at init in the reference); small random values
    # here so the se(3)/bezier path is exercised non-trivially.
    control_points = 0.01 * jax.random.normal(
        k5, (num_imgs, order_curve + 1, 6), jnp.float32)
    bezier_coeff = compute_bezier_coefficient_mat(num_pts, order_curve)

    K = jnp.array([[20.0, 0.0, 8.0],
                   [0.0, 20.0, 8.0],
                   [0.0, 0.0, 1.0]], jnp.float32)
    rays_x = jax.random.uniform(k2, (N, 1), jnp.float32, 0.0, float(W))
    rays_y = jax.random.uniform(k3, (N, 1), jnp.float32, 0.0, float(H))
    img_idx = jax.random.randint(k4, (N, 1), 0, num_imgs, jnp.int32)

    bundle, weights, loss_align = ctknet_forward(
        H, W, K, rays_x, rays_y, img_idx, control_points, poses,
        bezier_coeff, num_pts, order_curve)
    jax.block_until_ready(bundle)
    jax.block_until_ready(weights)

    # Pure-JAX reference for the ray / pose-gather hot path
    poses_traj = compute_poses_trajectory(control_points, poses, bezier_coeff,
                                          order_curve)
    poses_rays = poses_traj[img_idx[:, 0]]
    fx, fy, cx, cy = K[0, 0], K[1, 1], K[0, 2], K[1, 2]
    dx = (rays_x[:, 0] - cx) / fx
    dy = -(rays_y[:, 0] - cy) / fy
    dirs = jnp.stack([dx, dy, -jnp.ones_like(dx)], -1)
    rays_d_ref = jnp.sum(dirs[:, None, None, :] * poses_rays[:, :, :3, :3], -1)
    rays_o_ref = poses_rays[:, :, :3, 3]
    ref_bundle = jnp.stack([rays_o_ref, rays_d_ref], axis=-1)

    assert bundle.shape == (N, num_pts, 3, 2)
    assert weights.shape == (N, num_pts)
    assert loss_align is None
    np.testing.assert_allclose(np.asarray(bundle), np.asarray(ref_bundle),
                               rtol=1e-5, atol=1e-5)
    np.testing.assert_allclose(np.asarray(weights), 1.0 / num_pts, rtol=1e-6)

    print("KERNEL_OK")
</pallas_src>

<mosaic_0001>
module attributes {stable_mosaic.version = 11 : i64} {
  func.func @ray_kernel(%arg0: i32, %arg1: memref<1024x3xf32, #tpu.memory_space<vmem>>, %arg2: memref<4xf32, #tpu.memory_space<smem>>, %arg3: memref<4x512xf32, #tpu.memory_space<vmem>>, %arg4: memref<1024x128xf32, #tpu.memory_space<vmem>>) attributes {dimension_semantics = [#tpu.dimension_semantics<parallel>], iteration_bounds = array<i64: 2>, scalar_prefetch = 0 : i64, scratch_operands = 0 : i64, tpu.core_type = #tpu.core_type<tc>, window_params = [{transform_indices = @transform_0, window_bounds = array<i64: 1024, 3>}, {transform_indices = @transform_1, window_bounds = array<i64: 4>}, {pipeline_mode = #tpu.pipeline_mode<synchronous>, transform_indices = @transform_2, window_bounds = array<i64: 4, 512>}, {transform_indices = @transform_3, window_bounds = array<i64: 1024, 128>}]} {
    %c0 = arith.constant 0 : index
    %0 = memref.load %arg2[%c0] : memref<4xf32, #tpu.memory_space<smem>>
    %c1 = arith.constant 1 : index
    %1 = memref.load %arg2[%c1] : memref<4xf32, #tpu.memory_space<smem>>
    %c2 = arith.constant 2 : index
    %2 = memref.load %arg2[%c2] : memref<4xf32, #tpu.memory_space<smem>>
    %c3 = arith.constant 3 : index
    %3 = memref.load %arg2[%c3] : memref<4xf32, #tpu.memory_space<smem>>
    %c0_0 = arith.constant 0 : index
    %c0_1 = arith.constant 0 : index
    %4 = vector.load %arg1[%c0_0, %c0_1] : memref<1024x3xf32, #tpu.memory_space<vmem>>, vector<1024x3xf32>
    %5 = vector.extract_strided_slice %4 {offsets = [0, 0], sizes = [1024, 1], strides = [1, 1]} : vector<1024x3xf32> to vector<1024x1xf32>
    %6 = arith.fptosi %5 : vector<1024x1xf32> to vector<1024x1xi32>
    %7 = vector.extract_strided_slice %4 {offsets = [0, 1], sizes = [1024, 1], strides = [1, 1]} : vector<1024x3xf32> to vector<1024x1xf32>
    %8 = vector.broadcast %2 : f32 to vector<1024x1xf32>
    %9 = arith.subf %7, %8 : vector<1024x1xf32>
    %10 = vector.broadcast %0 : f32 to vector<1024x1xf32>
    %11 = arith.divf %9, %10 : vector<1024x1xf32>
    %12 = vector.extract_strided_slice %4 {offsets = [0, 2], sizes = [1024, 1], strides = [1, 1]} : vector<1024x3xf32> to vector<1024x1xf32>
    %13 = vector.broadcast %3 : f32 to vector<1024x1xf32>
    %14 = arith.subf %12, %13 : vector<1024x1xf32>
    %cst = arith.constant 0.000000e+00 : f32
    %15 = vector.broadcast %cst : f32 to vector<1024x1xf32>
    %16 = arith.subf %15, %14 : vector<1024x1xf32>
    %17 = vector.broadcast %1 : f32 to vector<1024x1xf32>
    %18 = arith.divf %16, %17 : vector<1024x1xf32>
    %19 = tpu.iota {dimensions = array<i32: 1>} : vector<1024x4xi32>
    %20 = vector.broadcast %6 : vector<1024x1xi32> to vector<1024x4xi32>
    %21 = arith.cmpi eq, %20, %19 : vector<1024x4xi32>
    %22 = arith.extui %21 : vector<1024x4xi1> to vector<1024x4xi32>
    %23 = arith.sitofp %22 : vector<1024x4xi32> to vector<1024x4xf32>
    %c0_2 = arith.constant 0 : index
    %c0_3 = arith.constant 0 : index
    %24 = vector.load %arg3[%c0_2, %c0_3] : memref<4x512xf32, #tpu.memory_space<vmem>>, vector<4x512xf32>
    %cst_4 = arith.constant dense<0.000000e+00> : vector<1024x512xf32>
    %25 = tpu.matmul %23, %24, %cst_4 {dimension_numbers = #tpu.dot_dimension_numbers<[1], [0], [0], [1], [0, 0, 1, 1], [], []>} : vector<1024x4xf32>, vector<4x512xf32>, vector<1024x512xf32> -> vector<1024x512xf32>
    %26 = vector.extract_strided_slice %25 {offsets = [0, 0], sizes = [1024, 128], strides = [1, 1]} : vector<1024x512xf32> to vector<1024x128xf32>
    %27 = vector.extract_strided_slice %25 {offsets = [0, 128], sizes = [1024, 128], strides = [1, 1]} : vector<1024x512xf32> to vector<1024x128xf32>
    %28 = vector.extract_strided_slice %25 {offsets = [0, 256], sizes = [1024, 128], strides = [1, 1]} : vector<1024x512xf32> to vector<1024x128xf32>
    %29 = vector.extract_strided_slice %25 {offsets = [0, 384], sizes = [1024, 128], strides = [1, 1]} : vector<1024x512xf32> to vector<1024x128xf32>
    %30 = vector.broadcast %11 : vector<1024x1xf32> to vector<1024x128xf32>
    %31 = arith.mulf %30, %26 : vector<1024x128xf32>
    %32 = vector.broadcast %18 : vector<1024x1xf32> to vector<1024x128xf32>
    %33 = arith.mulf %32, %27 : vector<1024x128xf32>
    %34 = arith.addf %31, %33 : vector<1024x128xf32>
    %35 = arith.subf %34, %28 : vector<1024x128xf32>
    %36 = arith.addf %35, %29 : vector<1024x128xf32>
    %c0_5 = arith.constant 0 : index
    %c0_6 = arith.constant 0 : index
    %37 = vector.load %arg4[%c0_5, %c0_6] : memref<1024x128xf32, #tpu.memory_space<vmem>>, vector<1024x128xf32>
    tpu.vector_store %arg4[%c0_5, %c0_6], %36 {strides = array<i32>} : memref<1024x128xf32, #tpu.memory_space<vmem>>, vector<1024x128xf32>,
    return
  }
  func.func @transform_0(%arg0: i32) -> (i32, i32) {
    %c0_i32 = arith.constant 0 : i32
    %c0_i32_0 = arith.constant 0 : i32
    return %arg0, %c0_i32 : i32, i32
  }
  func.func @transform_1(%arg0: i32) -> i32 {
    %c0_i32 = arith.constant 0 : i32
    %c0_i32_0 = arith.constant 0 : i32
    return %c0_i32 : i32
  }
  func.func @transform_2(%arg0: i32) -> (i32, i32) {
    %c0_i32 = arith.constant 0 : i32
    %c0_i32_0 = arith.constant 0 : i32
    %c0_i32_1 = arith.constant 0 : i32
    return %c0_i32, %c0_i32_0 : i32, i32
  }
  func.func @transform_3(%arg0: i32) -> (i32, i32) {
    %c0_i32 = arith.constant 0 : i32
    %c0_i32_0 = arith.constant 0 : i32
    return %arg0, %c0_i32 : i32, i32
  }
}

</mosaic_0001>

<llo_original>
// kernel: tpu_custom_call.1
$region0: #{tpu_custom_call.1}
  #allocation0 [shape = 'u32[]', space=smem, size = 0x4, offset = 0x4, fixed_abs, tag = 'smem constant byte address 0x4 - core index']
  #allocation1 [shape = 'u32[72,128]{1,0:T(1,128)}', space=vmem, size = 0x9000, scoped, tag = 'internal scratch']
  %s0 = inlined_call_operand.vmem [shape: f32[2048,3], index: 0, kind: input, shape index: {}]
  %s1 = inlined_call_operand.vmem [shape: f32[4], index: 1, kind: input, shape index: {}]
  %s2 = inlined_call_operand.vmem [shape: f32[4,512], index: 2, kind: input, shape index: {}]
  %s3 = inlined_call_operand.hbm [shape: f32[2048,128], index: 3, kind: output, shape index: {}]
  %s4 = sld [smem:[#allocation0]]
  $region49: #{tpu_custom_call.1} parent=0
    _
  %s6 = ssub.s32 1, %s4
  %s7 = scalar_select 0, %s6, %s4
  $region1: #{tpu_custom_call.1} parent=0
    #allocation2 [shape = 'u8[512]{0}', space=smem, size = 0x200, scoped, tag = 'input window, operand 1, single buffered']
    #allocation3 [shape = 's32[2]{0}', space=sflag, size = 0x8, scoped, tag = 'scoped memory for tpu_custom_call.1']
    #allocation4 [shape = 's32[2]{0}', space=sflag, size = 0x8, scoped, tag = 'scoped memory for tpu_custom_call.1']
    #allocation5 [shape = 'u8[1048576]{0}', space=vmem, size = 0x100000, scoped, tag = 'output window, operand 0']
    %8 = vsyncpa [#allocation4], 0
    %9 = vsyncpa [#allocation3], 0
    %s10 = scalar_lea.sflag [#allocation3], 1
    %11 = vsyncpa %s10, 0
    loop: start=0, step=1, limit=4
    $region2: #{tpu_custom_call.1} parent=1 // loop_pre_header
      _
    $region3: #{tpu_custom_call.1} parent=1 // loop_header
      %s13 = sphi 0, %s17
      %p14 = scmp.ge.s32.totalorder %s13, 4
      %s23 = sphi 0, %s25
      %s26 = sphi 0, %s23
      %s27 = sphi 0, %s26
      %s43 = sphi 0, %s27
      %s47 = sphi 0, %s47
      %s49 = sphi 0, %s47
      %s50 = sphi 0, %s49
      %s64 = sphi 0, %s50
      %s68 = sphi 0, %s68
      %s70 = sphi 0, %s68
      %s71 = sphi 0, %s70
      %s85 = sphi 0, %s71
      %s91 = sphi 0, %s93
      %s94 = sphi 0, %s91
      %s95 = sphi 0, %s94
      %s111 = sphi 0, %s95
    $region4: #{tpu_custom_call.1} parent=1 // loop_header_branch
      %16 = sbr.rel (%p14) target = $region8
    $region5: #{tpu_custom_call.1} parent=1 // loop_body
      %s18 = ssub.s32 %s13, 1
      %s19 = ssub.s32 %s13, 2
      %s20 = sadd.s32 %s13, 1
      %s21 = ssub.s32 %s13, %s20
      %p22 = scmp.eq.s32.totalorder %s21, 0
      %s24 = sadd.s32 %s23, 1
      %s25 = scalar_select %p22, %s23, %s24
      %p28 = pneg %p22
      %p29 = scmp.eq.s32.totalorder %s13, 1
      %p30 = por %p28, %p29
      %p31 = scmp.ne.s32.totalorder %s23, %s26
      %p32 = scmp.eq.s32.totalorder %s13, 0
      %p33 = por %p31, %p32
      %p34 = scmp.ne.s32.totalorder %s23, %s26
      %p35 = scmp.eq.s32.totalorder %s18, 1
      %p36 = por %p34, %p35
      %p37 = scmp.ne.s32.totalorder %s26, %s27
      %p38 = scmp.eq.s32.totalorder %s18, 0
      %p39 = por %p37, %p38
      %p40 = scmp.ne.s32.totalorder %s26, %s27
      %p41 = scmp.eq.s32.totalorder %s19, 1
      %p42 = por %p40, %p41
      %p44 = scmp.ne.s32.totalorder %s27, %s43
      %p45 = scmp.eq.s32.totalorder %s19, 0
      %p46 = por %p44, %p45
      %s48 = sadd.s32 %s47, 1
      %p51 = scmp.eq.s32.totalorder %s13, 1
      %p52 = scmp.ne.s32.totalorder %s47, %s49
      %p53 = scmp.eq.s32.totalorder %s13, 0
      %p54 = por %p52, %p53
      %p55 = scmp.ne.s32.totalorder %s47, %s49
      %p56 = scmp.eq.s32.totalorder %s18, 1
      %p57 = por %p55, %p56
      %p58 = scmp.ne.s32.totalorder %s49, %s50
      %p59 = scmp.eq.s32.totalorder %s18, 0
      %p60 = por %p58, %p59
      %p61 = scmp.ne.s32.totalorder %s49, %s50
      %p62 = scmp.eq.s32.totalorder %s19, 1
      %p63 = por %p61, %p62
      %p65 = scmp.ne.s32.totalorder %s50, %s64
      %p66 = scmp.eq.s32.totalorder %s19, 0
      %p67 = por %p65, %p66
      %s69 = sadd.s32 %s68, 1
      %p72 = scmp.eq.s32.totalorder %s13, 1
      %p73 = scmp.ne.s32.totalorder %s68, %s70
      %p74 = scmp.eq.s32.totalorder %s13, 0
      %p75 = por %p73, %p74
      %p76 = scmp.ne.s32.totalorder %s68, %s70
      %p77 = scmp.eq.s32.totalorder %s18, 1
      %p78 = por %p76, %p77
      %p79 = scmp.ne.s32.totalorder %s70, %s71
      %p80 = scmp.eq.s32.totalorder %s18, 0
      %p81 = por %p79, %p80
      %p82 = scmp.ne.s32.totalorder %s70, %s71
      %p83 = scmp.eq.s32.totalorder %s19, 1
      %p84 = por %p82, %p83
      %p86 = scmp.ne.s32.totalorder %s71, %s85
      %p87 = scmp.eq.s32.totalorder %s19, 0
      %p88 = por %p86, %p87
      %s89 = ssub.s32 %s13, %s20
      %p90 = scmp.eq.s32.totalorder %s89, 0
      %s92 = sadd.s32 %s91, 1
      %s93 = scalar_select %p90, %s91, %s92
      %p96 = pneg %p90
      %p97 = scmp.eq.s32.totalorder %s13, 1
      %p98 = por %p96, %p97
      %p99 = scmp.ne.s32.totalorder %s91, %s94
      %p100 = scmp.eq.s32.totalorder %s13, 0
      %p101 = por %p99, %p100
      %p102 = scmp.ne.s32.totalorder %s91, %s94
      %p103 = scmp.eq.s32.totalorder %s18, 1
      %p104 = por %p102, %p103
      %p105 = scmp.ne.s32.totalorder %s94, %s95
      %p106 = scmp.eq.s32.totalorder %s18, 0
      %p107 = por %p105, %p106
      %p108 = scmp.ne.s32.totalorder %s94, %s95
      %p109 = scmp.eq.s32.totalorder %s19, 1
      %p110 = por %p108, %p109
      %p112 = scmp.ne.s32.totalorder %s95, %s111
      %p113 = scmp.eq.s32.totalorder %s19, 0
      %p114 = por %p112, %p113
      %p115 = scmp.le.s32.totalorder 1, %s13
      %p116 = scmp.lt.s32.totalorder %s13, 3
      %p117 = pnand %p115, %p116
      %p118 = pneg %p117
      // Predicated region
      $region9: #{tpu_custom_call.1} parent=5 // pred_check
        _
      $region10: #{tpu_custom_call.1} parent=5 // pred_check_branch
        %120 = sbr.rel (%p117) target = $region12
      $region11: #{tpu_custom_call.1} parent=5 // pred_region
        %s121 = ssub.s32 %s13, 1
        // Predicated region
        $region13: #{tpu_custom_call.1} parent=11 // pred_check
          %p122 = pneg %p60
        $region14: #{tpu_custom_call.1} parent=11 // pred_check_branch
          %124 = sbr.rel (%p122) target = $region16
        $region15: #{tpu_custom_call.1} parent=11 // pred_region
          %126 = vsyncadd [#allocation4], 0
          %s128 = sshll.u32 %s1, 4
          %s129 = int_to_ptr.vmem [resolvable:$true] %s128
          %131 = dma.vmem_to_smem %s129, 16, [#allocation2], [#allocation4]
        $region16: #{tpu_custom_call.1} parent=11 // pred_fallthru
          _
        // Predicated region
        $region17: #{tpu_custom_call.1} parent=11 // pred_check
          %p132 = pneg %p81
        $region18: #{tpu_custom_call.1} parent=11 // pred_check_branch
          %134 = sbr.rel (%p132) target = $region20
        $region19: #{tpu_custom_call.1} parent=11 // pred_region
          _
        $region20: #{tpu_custom_call.1} parent=11 // pred_fallthru
          _
      $region12: #{tpu_custom_call.1} parent=5 // pred_fallthru
        _
      %p135 = scmp.lt.s32.totalorder %s13, 2
      // Predicated region
      $region21: #{tpu_custom_call.1} parent=5 // pred_check
        %p136 = pneg %p135
      $region22: #{tpu_custom_call.1} parent=5 // pred_check_branch
        %138 = sbr.rel (%p136) target = $region24
      $region23: #{tpu_custom_call.1} parent=5 // pred_region
        // Predicated region
        $region25: #{tpu_custom_call.1} parent=23 // pred_check
          %p139 = pneg %p33
        $region26: #{tpu_custom_call.1} parent=23 // pred_check_branch
          %141 = sbr.rel (%p139) target = $region28
        $region27: #{tpu_custom_call.1} parent=23 // pred_region
          %s142 = smul.u32 128, %s13
          %p143 = scmp.lt.s32.totalorder %s142, 255
          %s144 = scalar_select %p143, %s142, 255
          %s145 = smul.addr %s144, 8
          %s146 = scalar_lea.vmem %s0, %s145
          %s147 = smul.u32 128, %s13
        $region28: #{tpu_custom_call.1} parent=23 // pred_fallthru
          _
      $region24: #{tpu_custom_call.1} parent=5 // pred_fallthru
        _
      %p148 = scmp.le.s32.totalorder 1, %s13
      %p149 = scmp.lt.s32.totalorder %s13, 3
      %p150 = pnand %p148, %p149
      %p151 = pneg %p150
      // Predicated region
      $region29: #{tpu_custom_call.1} parent=5 // pred_check
        _
      $region30: #{tpu_custom_call.1} parent=5 // pred_check_branch
        %153 = sbr.rel (%p150) target = $region32
      $region31: #{tpu_custom_call.1} parent=5 // pred_region
        %s154 = ssub.s32 %s13, 1
        // Predicated region
        $region33: #{tpu_custom_call.1} parent=31 // pred_check
          %p155 = pneg %p60
        $region34: #{tpu_custom_call.1} parent=31 // pred_check_branch
          %157 = sbr.rel (%p155) target = $region36
        $region35: #{tpu_custom_call.1} parent=31 // pred_region
          %159 = dma.done [#allocation4], 16
        $region36: #{tpu_custom_call.1} parent=31 // pred_fallthru
          _
        %160 = sfence
        %s161 = smul.u32 128, %s18
        %p162 = scmp.lt.s32.totalorder %s161, 255
        %s163 = scalar_select %p162, %s161, 255
        %s164 = smul.addr %s163, 8
        %s165 = scalar_lea.vmem %s0, %s164
        %p166 = pneg %p39
        %p167 = pneg %p36
        %p168 = pneg %p60
        %p169 = pneg %p57
        %p170 = pneg %p81
        %p171 = pneg %p78
        %p172 = pneg %p107
        %p173 = pneg %p104
        %s174 = sand.u32 %s94, 1
        %s175 = scalar_lea.sflag [#allocation3], %s174
        %s176 = sand.u32 %s94, 1
        %s177 = smul.addr %s176, 1024
        %s178 = scalar_lea.vmem [#allocation5], %s177
        %s179 = smul.u32 128, %s18
        %p180 = scmp.lt.s32.totalorder %s179, 255
        %s181 = scalar_select %p180, %s179, 255
        %s182 = smul.addr %s181, 8
        %s183 = scalar_lea.vmem %s0, %s182
        %s184 = smul.u32 128, %s18
        %s185 = smul.u32 128, %s18
        %s186 = sld [smem:[#allocation2]]
        %s187 = sld [smem:[#allocation2 + $0x1]]
        %s188 = sld [smem:[#allocation2 + $0x2]]
        %s189 = sld [smem:[#allocation2 + $0x3]]
        %v190 = vld [vmem:[%s183] sm:$0xff]
        %v191 = vld [vmem:[%s183 + $0x8] sm:$0xff]
        %v192 = vld [vmem:[%s183 + $0x10] sm:$0xff]
        %v193 = vld [vmem:[%s183 + $0x18] sm:$0xff]
        %v194 = vld [vmem:[%s183 + $0x20] sm:$0xff]
        %v195 = vld [vmem:[%s183 + $0x28] sm:$0xff]
        %v196 = vld [vmem:[%s183 + $0x30] sm:$0xff]
        %v197 = vld [vmem:[%s183 + $0x38] sm:$0xff]
        %v198 = vld [vmem:[%s183 + $0x40] sm:$0xff]
        %v199 = vld [vmem:[%s183 + $0x48] sm:$0xff]
        %v200 = vld [vmem:[%s183 + $0x50] sm:$0xff]
        %v201 = vld [vmem:[%s183 + $0x58] sm:$0xff]
        %v202 = vld [vmem:[%s183 + $0x60] sm:$0xff]
        %v203 = vld [vmem:[%s183 + $0x68] sm:$0xff]
        %v204 = vld [vmem:[%s183 + $0x70] sm:$0xff]
        %v205 = vld [vmem:[%s183 + $0x78] sm:$0xff]
        %v206 = vld [vmem:[%s183 + $0x80] sm:$0xff]
        %v207 = vld [vmem:[%s183 + $0x88] sm:$0xff]
        %v208 = vld [vmem:[%s183 + $0x90] sm:$0xff]
        %v209 = vld [vmem:[%s183 + $0x98] sm:$0xff]
        %v210 = vld [vmem:[%s183 + $0xa0] sm:$0xff]
        %v211 = vld [vmem:[%s183 + $0xa8] sm:$0xff]
        %v212 = vld [vmem:[%s183 + $0xb0] sm:$0xff]
        %v213 = vld [vmem:[%s183 + $0xb8] sm:$0xff]
        %v214 = vld [vmem:[%s183 + $0xc0] sm:$0xff]
        %v215 = vld [vmem:[%s183 + $0xc8] sm:$0xff]
        %v216 = vld [vmem:[%s183 + $0xd0] sm:$0xff]
        %v217 = vld [vmem:[%s183 + $0xd8] sm:$0xff]
        %v218 = vld [vmem:[%s183 + $0xe0] sm:$0xff]
        %v219 = vld [vmem:[%s183 + $0xe8] sm:$0xff]
        %v220 = vld [vmem:[%s183 + $0xf0] sm:$0xff]
        %v221 = vld [vmem:[%s183 + $0xf8] sm:$0xff]
        %v222 = vld [vmem:[%s183 + $0x100] sm:$0xff]
        %v223 = vld [vmem:[%s183 + $0x108] sm:$0xff]
        %v224 = vld [vmem:[%s183 + $0x110] sm:$0xff]
        %v225 = vld [vmem:[%s183 + $0x118] sm:$0xff]
        %v226 = vld [vmem:[%s183 + $0x120] sm:$0xff]
        %v227 = vld [vmem:[%s183 + $0x128] sm:$0xff]
        %v228 = vld [vmem:[%s183 + $0x130] sm:$0xff]
        %v229 = vld [vmem:[%s183 + $0x138] sm:$0xff]
        %v230 = vld [vmem:[%s183 + $0x140] sm:$0xff]
        %v231 = vld [vmem:[%s183 + $0x148] sm:$0xff]
        %v232 = vld [vmem:[%s183 + $0x150] sm:$0xff]
        %v233 = vld [vmem:[%s183 + $0x158] sm:$0xff]
        %v234 = vld [vmem:[%s183 + $0x160] sm:$0xff]
        %v235 = vld [vmem:[%s183 + $0x168] sm:$0xff]
        %v236 = vld [vmem:[%s183 + $0x170] sm:$0xff]
        %v237 = vld [vmem:[%s183 + $0x178] sm:$0xff]
        %v238 = vld [vmem:[%s183 + $0x180] sm:$0xff]
        %v239 = vld [vmem:[%s183 + $0x188] sm:$0xff]
        %v240 = vld [vmem:[%s183 + $0x190] sm:$0xff]
        %v241 = vld [vmem:[%s183 + $0x198] sm:$0xff]
        %v242 = vld [vmem:[%s183 + $0x1a0] sm:$0xff]
        %v243 = vld [vmem:[%s183 + $0x1a8] sm:$0xff]
        %v244 = vld [vmem:[%s183 + $0x1b0] sm:$0xff]
        %v245 = vld [vmem:[%s183 + $0x1b8] sm:$0xff]
        %v246 = vld [vmem:[%s183 + $0x1c0] sm:$0xff]
        %v247 = vld [vmem:[%s183 + $0x1c8] sm:$0xff]
        %v248 = vld [vmem:[%s183 + $0x1d0] sm:$0xff]
        %v249 = vld [vmem:[%s183 + $0x1d8] sm:$0xff]
        %v250 = vld [vmem:[%s183 + $0x1e0] sm:$0xff]
        %v251 = vld [vmem:[%s183 + $0x1e8] sm:$0xff]
        %v252 = vld [vmem:[%s183 + $0x1f0] sm:$0xff]
        %v253 = vld [vmem:[%s183 + $0x1f8] sm:$0xff]
        %v254 = vld [vmem:[%s183 + $0x200] sm:$0xff]
        %v255 = vld [vmem:[%s183 + $0x208] sm:$0xff]
        %v256 = vld [vmem:[%s183 + $0x210] sm:$0xff]
        %v257 = vld [vmem:[%s183 + $0x218] sm:$0xff]
        %v258 = vld [vmem:[%s183 + $0x220] sm:$0xff]
        %v259 = vld [vmem:[%s183 + $0x228] sm:$0xff]
        %v260 = vld [vmem:[%s183 + $0x230] sm:$0xff]
        %v261 = vld [vmem:[%s183 + $0x238] sm:$0xff]
        %v262 = vld [vmem:[%s183 + $0x240] sm:$0xff]
        %v263 = vld [vmem:[%s183 + $0x248] sm:$0xff]
        %v264 = vld [vmem:[%s183 + $0x250] sm:$0xff]
        %v265 = vld [vmem:[%s183 + $0x258] sm:$0xff]
        %v266 = vld [vmem:[%s183 + $0x260] sm:$0xff]
        %v267 = vld [vmem:[%s183 + $0x268] sm:$0xff]
        %v268 = vld [vmem:[%s183 + $0x270] sm:$0xff]
        %v269 = vld [vmem:[%s183 + $0x278] sm:$0xff]
        %v270 = vld [vmem:[%s183 + $0x280] sm:$0xff]
        %v271 = vld [vmem:[%s183 + $0x288] sm:$0xff]
        %v272 = vld [vmem:[%s183 + $0x290] sm:$0xff]
        %v273 = vld [vmem:[%s183 + $0x298] sm:$0xff]
        %v274 = vld [vmem:[%s183 + $0x2a0] sm:$0xff]
        %v275 = vld [vmem:[%s183 + $0x2a8] sm:$0xff]
        %v276 = vld [vmem:[%s183 + $0x2b0] sm:$0xff]
        %v277 = vld [vmem:[%s183 + $0x2b8] sm:$0xff]
        %v278 = vld [vmem:[%s183 + $0x2c0] sm:$0xff]
        %v279 = vld [vmem:[%s183 + $0x2c8] sm:$0xff]
        %v280 = vld [vmem:[%s183 + $0x2d0] sm:$0xff]
        %v281 = vld [vmem:[%s183 + $0x2d8] sm:$0xff]
        %v282 = vld [vmem:[%s183 + $0x2e0] sm:$0xff]
        %v283 = vld [vmem:[%s183 + $0x2e8] sm:$0xff]
        %v284 = vld [vmem:[%s183 + $0x2f0] sm:$0xff]
        %v285 = vld [vmem:[%s183 + $0x2f8] sm:$0xff]
        %v286 = vld [vmem:[%s183 + $0x300] sm:$0xff]
        %v287 = vld [vmem:[%s183 + $0x308] sm:$0xff]
        %v288 = vld [vmem:[%s183 + $0x310] sm:$0xff]
        %v289 = vld [vmem:[%s183 + $0x318] sm:$0xff]
        %v290 = vld [vmem:[%s183 + $0x320] sm:$0xff]
        %v291 = vld [vmem:[%s183 + $0x328] sm:$0xff]
        %v292 = vld [vmem:[%s183 + $0x330] sm:$0xff]
        %v293 = vld [vmem:[%s183 + $0x338] sm:$0xff]
        %v294 = vld [vmem:[%s183 + $0x340] sm:$0xff]
        %v295 = vld [vmem:[%s183 + $0x348] sm:$0xff]
        %v296 = vld [vmem:[%s183 + $0x350] sm:$0xff]
        %v297 = vld [vmem:[%s183 + $0x358] sm:$0xff]
        %v298 = vld [vmem:[%s183 + $0x360] sm:$0xff]
        %v299 = vld [vmem:[%s183 + $0x368] sm:$0xff]
        %v300 = vld [vmem:[%s183 + $0x370] sm:$0xff]
        %v301 = vld [vmem:[%s183 + $0x378] sm:$0xff]
        %v302 = vld [vmem:[%s183 + $0x380] sm:$0xff]
        %v303 = vld [vmem:[%s183 + $0x388] sm:$0xff]
        %v304 = vld [vmem:[%s183 + $0x390] sm:$0xff]
        %v305 = vld [vmem:[%s183 + $0x398] sm:$0xff]
        %v306 = vld [vmem:[%s183 + $0x3a0] sm:$0xff]
        %v307 = vld [vmem:[%s183 + $0x3a8] sm:$0xff]
        %v308 = vld [vmem:[%s183 + $0x3b0] sm:$0xff]
        %v309 = vld [vmem:[%s183 + $0x3b8] sm:$0xff]
        %v310 = vld [vmem:[%s183 + $0x3c0] sm:$0xff]
        %v311 = vld [vmem:[%s183 + $0x3c8] sm:$0xff]
        %v312 = vld [vmem:[%s183 + $0x3d0] sm:$0xff]
        %v313 = vld [vmem:[%s183 + $0x3d8] sm:$0xff]
        %v314 = vld [vmem:[%s183 + $0x3e0] sm:$0xff]
        %v315 = vld [vmem:[%s183 + $0x3e8] sm:$0xff]
        %v316 = vld [vmem:[%s183 + $0x3f0] sm:$0xff]
        %v317 = vld [vmem:[%s183 + $0x3f8] sm:$0xff]
        %v318 = vcvt.f32.s32.to.zero.pseudo %v190
        %v319 = vcvt.f32.s32.to.zero.pseudo %v191
        %v320 = vcvt.f32.s32.to.zero.pseudo %v192
        %v321 = vcvt.f32.s32.to.zero.pseudo %v193
        %v322 = vcvt.f32.s32.to.zero.pseudo %v194
        %v323 = vcvt.f32.s32.to.zero.pseudo %v195
        %v324 = vcvt.f32.s32.to.zero.pseudo %v196
        %v325 = vcvt.f32.s32.to.zero.pseudo %v197
        %v326 = vcvt.f32.s32.to.zero.pseudo %v198
        %v327 = vcvt.f32.s32.to.zero.pseudo %v199
        %v328 = vcvt.f32.s32.to.zero.pseudo %v200
        %v329 = vcvt.f32.s32.to.zero.pseudo %v201
        %v330 = vcvt.f32.s32.to.zero.pseudo %v202
        %v331 = vcvt.f32.s32.to.zero.pseudo %v203
        %v332 = vcvt.f32.s32.to.zero.pseudo %v204
        %v333 = vcvt.f32.s32.to.zero.pseudo %v205
        %v334 = vcvt.f32.s32.to.zero.pseudo %v206
        %v335 = vcvt.f32.s32.to.zero.pseudo %v207
        %v336 = vcvt.f32.s32.to.zero.pseudo %v208
        %v337 = vcvt.f32.s32.to.zero.pseudo %v209
        %v338 = vcvt.f32.s32.to.zero.pseudo %v210
        %v339 = vcvt.f32.s32.to.zero.pseudo %v211
        %v340 = vcvt.f32.s32.to.zero.pseudo %v212
        %v341 = vcvt.f32.s32.to.zero.pseudo %v213
        %v342 = vcvt.f32.s32.to.zero.pseudo %v214
        %v343 = vcvt.f32.s32.to.zero.pseudo %v215
        %v344 = vcvt.f32.s32.to.zero.pseudo %v216
        %v345 = vcvt.f32.s32.to.zero.pseudo %v217
        %v346 = vcvt.f32.s32.to.zero.pseudo %v218
        %v347 = vcvt.f32.s32.to.zero.pseudo %v219
        %v348 = vcvt.f32.s32.to.zero.pseudo %v220
        %v349 = vcvt.f32.s32.to.zero.pseudo %v221
        %v350 = vcvt.f32.s32.to.zero.pseudo %v222
        %v351 = vcvt.f32.s32.to.zero.pseudo %v223
        %v352 = vcvt.f32.s32.to.zero.pseudo %v224
        %v353 = vcvt.f32.s32.to.zero.pseudo %v225
        %v354 = vcvt.f32.s32.to.zero.pseudo %v226
        %v355 = vcvt.f32.s32.to.zero.pseudo %v227
        %v356 = vcvt.f32.s32.to.zero.pseudo %v228
        %v357 = vcvt.f32.s32.to.zero.pseudo %v229
        %v358 = vcvt.f32.s32.to.zero.pseudo %v230
        %v359 = vcvt.f32.s32.to.zero.pseudo %v231
        %v360 = vcvt.f32.s32.to.zero.pseudo %v232
        %v361 = vcvt.f32.s32.to.zero.pseudo %v233
        %v362 = vcvt.f32.s32.to.zero.pseudo %v234
        %v363 = vcvt.f32.s32.to.zero.pseudo %v235
        %v364 = vcvt.f32.s32.to.zero.pseudo %v236
        %v365 = vcvt.f32.s32.to.zero.pseudo %v237
        %v366 = vcvt.f32.s32.to.zero.pseudo %v238
        %v367 = vcvt.f32.s32.to.zero.pseudo %v239
        %v368 = vcvt.f32.s32.to.zero.pseudo %v240
        %v369 = vcvt.f32.s32.to.zero.pseudo %v241
        %v370 = vcvt.f32.s32.to.zero.pseudo %v242
        %v371 = vcvt.f32.s32.to.zero.pseudo %v243
        %v372 = vcvt.f32.s32.to.zero.pseudo %v244
        %v373 = vcvt.f32.s32.to.zero.pseudo %v245
        %v374 = vcvt.f32.s32.to.zero.pseudo %v246
        %v375 = vcvt.f32.s32.to.zero.pseudo %v247
        %v376 = vcvt.f32.s32.to.zero.pseudo %v248
        %v377 = vcvt.f32.s32.to.zero.pseudo %v249
        %v378 = vcvt.f32.s32.to.zero.pseudo %v250
        %v379 = vcvt.f32.s32.to.zero.pseudo %v251
        %v380 = vcvt.f32.s32.to.zero.pseudo %v252
        %v381 = vcvt.f32.s32.to.zero.pseudo %v253
        %v382 = vcvt.f32.s32.to.zero.pseudo %v254
        %v383 = vcvt.f32.s32.to.zero.pseudo %v255
        %v384 = vcvt.f32.s32.to.zero.pseudo %v256
        %v385 = vcvt.f32.s32.to.zero.pseudo %v257
        %v386 = vcvt.f32.s32.to.zero.pseudo %v258
        %v387 = vcvt.f32.s32.to.zero.pseudo %v259
        %v388 = vcvt.f32.s32.to.zero.pseudo %v260
        %v389 = vcvt.f32.s32.to.zero.pseudo %v261
        %v390 = vcvt.f32.s32.to.zero.pseudo %v262
        %v391 = vcvt.f32.s32.to.zero.pseudo %v263
        %v392 = vcvt.f32.s32.to.zero.pseudo %v264
        %v393 = vcvt.f32.s32.to.zero.pseudo %v265
        %v394 = vcvt.f32.s32.to.zero.pseudo %v266
        %v395 = vcvt.f32.s32.to.zero.pseudo %v267
        %v396 = vcvt.f32.s32.to.zero.pseudo %v268
        %v397 = vcvt.f32.s32.to.zero.pseudo %v269
        %v398 = vcvt.f32.s32.to.zero.pseudo %v270
        %v399 = vcvt.f32.s32.to.zero.pseudo %v271
        %v400 = vcvt.f32.s32.to.zero.pseudo %v272
        %v401 = vcvt.f32.s32.to.zero.pseudo %v273
        %v402 = vcvt.f32.s32.to.zero.pseudo %v274
        %v403 = vcvt.f32.s32.to.zero.pseudo %v275
        %v404 = vcvt.f32.s32.to.zero.pseudo %v276
        %v405 = vcvt.f32.s32.to.zero.pseudo %v277
        %v406 = vcvt.f32.s32.to.zero.pseudo %v278
        %v407 = vcvt.f32.s32.to.zero.pseudo %v279
        %v408 = vcvt.f32.s32.to.zero.pseudo %v280
        %v409 = vcvt.f32.s32.to.zero.pseudo %v281
        %v410 = vcvt.f32.s32.to.zero.pseudo %v282
        %v411 = vcvt.f32.s32.to.zero.pseudo %v283
        %v412 = vcvt.f32.s32.to.zero.pseudo %v284
        %v413 = vcvt.f32.s32.to.zero.pseudo %v285
        %v414 = vcvt.f32.s32.to.zero.pseudo %v286
        %v415 = vcvt.f32.s32.to.zero.pseudo %v287
        %v416 = vcvt.f32.s32.to.zero.pseudo %v288
        %v417 = vcvt.f32.s32.to.zero.pseudo %v289
        %v418 = vcvt.f32.s32.to.zero.pseudo %v290
        %v419 = vcvt.f32.s32.to.zero.pseudo %v291
        %v420 = vcvt.f32.s32.to.zero.pseudo %v292
        %v421 = vcvt.f32.s32.to.zero.pseudo %v293
        %v422 = vcvt.f32.s32.to.zero.pseudo %v294
        %v423 = vcvt.f32.s32.to.zero.pseudo %v295
        %v424 = vcvt.f32.s32.to.zero.pseudo %v296
        %v425 = vcvt.f32.s32.to.zero.pseudo %v297
        %v426 = vcvt.f32.s32.to.zero.pseudo %v298
        %v427 = vcvt.f32.s32.to.zero.pseudo %v299
        %v428 = vcvt.f32.s32.to.zero.pseudo %v300
        %v429 = vcvt.f32.s32.to.zero.pseudo %v301
        %v430 = vcvt.f32.s32.to.zero.pseudo %v302
        %v431 = vcvt.f32.s32.to.zero.pseudo %v303
        %v432 = vcvt.f32.s32.to.zero.pseudo %v304
        %v433 = vcvt.f32.s32.to.zero.pseudo %v305
        %v434 = vcvt.f32.s32.to.zero.pseudo %v306
        %v435 = vcvt.f32.s32.to.zero.pseudo %v307
        %v436 = vcvt.f32.s32.to.zero.pseudo %v308
        %v437 = vcvt.f32.s32.to.zero.pseudo %v309
        %v438 = vcvt.f32.s32.to.zero.pseudo %v310
        %v439 = vcvt.f32.s32.to.zero.pseudo %v311
        %v440 = vcvt.f32.s32.to.zero.pseudo %v312
        %v441 = vcvt.f32.s32.to.zero.pseudo %v313
        %v442 = vcvt.f32.s32.to.zero.pseudo %v314
        %v443 = vcvt.f32.s32.to.zero.pseudo %v315
        %v444 = vcvt.f32.s32.to.zero.pseudo %v316
        %v445 = vcvt.f32.s32.to.zero.pseudo %v317
        %v446 = vstv %s188
        %v447 = vsub.f32 %v190, %v446
        %v448 = vsub.f32 %v191, %v446
        %v449 = vsub.f32 %v192, %v446
        %v450 = vsub.f32 %v193, %v446
        %v451 = vsub.f32 %v194, %v446
        %v452 = vsub.f32 %v195, %v446
        %v453 = vsub.f32 %v196, %v446
        %v454 = vsub.f32 %v197, %v446
        %v455 = vsub.f32 %v198, %v446
        %v456 = vsub.f32 %v199, %v446
        %v457 = vsub.f32 %v200, %v446
        %v458 = vsub.f32 %v201, %v446
        %v459 = vsub.f32 %v202, %v446
        %v460 = vsub.f32 %v203, %v446
        %v461 = vsub.f32 %v204, %v446
        %v462 = vsub.f32 %v205, %v446
        %v463 = vsub.f32 %v206, %v446
        %v464 = vsub.f32 %v207, %v446
        %v465 = vsub.f32 %v208, %v446
        %v466 = vsub.f32 %v209, %v446
        %v467 = vsub.f32 %v210, %v446
        %v468 = vsub.f32 %v211, %v446
        %v469 = vsub.f32 %v212, %v446
        %v470 = vsub.f32 %v213, %v446
        %v471 = vsub.f32 %v214, %v446
        %v472 = vsub.f32 %v215, %v446
        %v473 = vsub.f32 %v216, %v446
        %v474 = vsub.f32 %v217, %v446
        %v475 = vsub.f32 %v218, %v446
        %v476 = vsub.f32 %v219, %v446
        %v477 = vsub.f32 %v220, %v446
        %v478 = vsub.f32 %v221, %v446
        %v479 = vsub.f32 %v222, %v446
        %v480 = vsub.f32 %v223, %v446
        %v481 = vsub.f32 %v224, %v446
        %v482 = vsub.f32 %v225, %v446
        %v483 = vsub.f32 %v226, %v446
        %v484 = vsub.f32 %v227, %v446
        %v485 = vsub.f32 %v228, %v446
        %v486 = vsub.f32 %v229, %v446
        %v487 = vsub.f32 %v230, %v446
        %v488 = vsub.f32 %v231, %v446
        %v489 = vsub.f32 %v232, %v446
        %v490 = vsub.f32 %v233, %v446
        %v491 = vsub.f32 %v234, %v446
        %v492 = vsub.f32 %v235, %v446
        %v493 = vsub.f32 %v236, %v446
        %v494 = vsub.f32 %v237, %v446
        %v495 = vsub.f32 %v238, %v446
        %v496 = vsub.f32 %v239, %v446
        %v497 = vsub.f32 %v240, %v446
        %v498 = vsub.f32 %v241, %v446
        %v499 = vsub.f32 %v242, %v446
        %v500 = vsub.f32 %v243, %v446
        %v501 = vsub.f32 %v244, %v446
        %v502 = vsub.f32 %v245, %v446
        %v503 = vsub.f32 %v246, %v446
        %v504 = vsub.f32 %v247, %v446
        %v505 = vsub.f32 %v248, %v446
        %v506 = vsub.f32 %v249, %v446
        %v507 = vsub.f32 %v250, %v446
        %v508 = vsub.f32 %v251, %v446
        %v509 = vsub.f32 %v252, %v446
        %v510 = vsub.f32 %v253, %v446
        %v511 = vsub.f32 %v254, %v446
        %v512 = vsub.f32 %v255, %v446
        %v513 = vsub.f32 %v256, %v446
        %v514 = vsub.f32 %v257, %v446
        %v515 = vsub.f32 %v258, %v446
        %v516 = vsub.f32 %v259, %v446
        %v517 = vsub.f32 %v260, %v446
        %v518 = vsub.f32 %v261, %v446
        %v519 = vsub.f32 %v262, %v446
        %v520 = vsub.f32 %v263, %v446
        %v521 = vsub.f32 %v264, %v446
        %v522 = vsub.f32 %v265, %v446
        %v523 = vsub.f32 %v266, %v446
        %v524 = vsub.f32 %v267, %v446
        %v525 = vsub.f32 %v268, %v446
        %v526 = vsub.f32 %v269, %v446
        %v527 = vsub.f32 %v270, %v446
        %v528 = vsub.f32 %v271, %v446
        %v529 = vsub.f32 %v272, %v446
        %v530 = vsub.f32 %v273, %v446
        %v531 = vsub.f32 %v274, %v446
        %v532 = vsub.f32 %v275, %v446
        %v533 = vsub.f32 %v276, %v446
        %v534 = vsub.f32 %v277, %v446
        %v535 = vsub.f32 %v278, %v446
        %v536 = vsub.f32 %v279, %v446
        %v537 = vsub.f32 %v280, %v446
        %v538 = vsub.f32 %v281, %v446
        %v539 = vsub.f32 %v282, %v446
        %v540 = vsub.f32 %v283, %v446
        %v541 = vsub.f32 %v284, %v446
        %v542 = vsub.f32 %v285, %v446
        %v543 = vsub.f32 %v286, %v446
        %v544 = vsub.f32 %v287, %v446
        %v545 = vsub.f32 %v288, %v446
        %v546 = vsub.f32 %v289, %v446
        %v547 = vsub.f32 %v290, %v446
        %v548 = vsub.f32 %v291, %v446
        %v549 = vsub.f32 %v292, %v446
        %v550 = vsub.f32 %v293, %v446
        %v551 = vsub.f32 %v294, %v446
        %v552 = vsub.f32 %v295, %v446
        %v553 = vsub.f32 %v296, %v446
        %v554 = vsub.f32 %v297, %v446
        %v555 = vsub.f32 %v298, %v446
        %v556 = vsub.f32 %v299, %v446
        %v557 = vsub.f32 %v300, %v446
        %v558 = vsub.f32 %v301, %v446
        %v559 = vsub.f32 %v302, %v446
        %v560 = vsub.f32 %v303, %v446
        %v561 = vsub.f32 %v304, %v446
        %v562 = vsub.f32 %v305, %v446
        %v563 = vsub.f32 %v306, %v446
        %v564 = vsub.f32 %v307, %v446
        %v565 = vsub.f32 %v308, %v446
        %v566 = vsub.f32 %v309, %v446
        %v567 = vsub.f32 %v310, %v446
        %v568 = vsub.f32 %v311, %v446
        %v569 = vsub.f32 %v312, %v446
        %v570 = vsub.f32 %v313, %v446
        %v571 = vsub.f32 %v314, %v446
        %v572 = vsub.f32 %v315, %v446
        %v573 = vsub.f32 %v316, %v446
        %v574 = vsub.f32 %v317, %v446
        %v575 = vstv %s186
        %v576 = vrcp.pop %v575
        %v577 = vmul.f32 %v575, %v576
        %v578 = vsub.f32 1.0, %v577
        %v579 = vmul.f32 %v576, %v578
        %v580 = vadd.f32 %v576, %v579
        %vm581 = vweird.f32 %v575
        %vm582 = vweird.f32 %v576
        %vm583 = vmor %vm581, %vm582
        %v584 = vsel %vm583, %v576, %v580
        %v585 = vand.u32 2147483647, %v575
        %vm586 = vcmp.eq.f32.partialorder %v585, 8.507059e+37
        %v587 = vand.u32 %v575, 2147483648
        %v588 = vor.u32 1.1754944e-38, %v587
        %v589 = vsel %vm586, %v588, %v584
        %v590 = vmul.f32 %v447, %v589
        %v591 = vmul.f32 %v448, %v589
        %v592 = vmul.f32 %v449, %v589
        %v593 = vmul.f32 %v450, %v589
        %v594 = vmul.f32 %v451, %v589
        %v595 = vmul.f32 %v452, %v589
        %v596 = vmul.f32 %v453, %v589
        %v597 = vmul.f32 %v454, %v589
        %v598 = vmul.f32 %v455, %v589
        %v599 = vmul.f32 %v456, %v589
        %v600 = vmul.f32 %v457, %v589
        %v601 = vmul.f32 %v458, %v589
        %v602 = vmul.f32 %v459, %v589
        %v603 = vmul.f32 %v460, %v589
        %v604 = vmul.f32 %v461, %v589
        %v605 = vmul.f32 %v462, %v589
        %v606 = vmul.f32 %v463, %v589
        %v607 = vmul.f32 %v464, %v589
        %v608 = vmul.f32 %v465, %v589
        %v609 = vmul.f32 %v466, %v589
        %v610 = vmul.f32 %v467, %v589
        %v611 = vmul.f32 %v468, %v589
        %v612 = vmul.f32 %v469, %v589
        %v613 = vmul.f32 %v470, %v589
        %v614 = vmul.f32 %v471, %v589
        %v615 = vmul.f32 %v472, %v589
        %v616 = vmul.f32 %v473, %v589
        %v617 = vmul.f32 %v474, %v589
        %v618 = vmul.f32 %v475, %v589
        %v619 = vmul.f32 %v476, %v589
        %v620 = vmul.f32 %v477, %v589
        %v621 = vmul.f32 %v478, %v589
        %v622 = vmul.f32 %v479, %v589
        %v623 = vmul.f32 %v480, %v589
        %v624 = vmul.f32 %v481, %v589
        %v625 = vmul.f32 %v482, %v589
        %v626 = vmul.f32 %v483, %v589
        %v627 = vmul.f32 %v484, %v589
        %v628 = vmul.f32 %v485, %v589
        %v629 = vmul.f32 %v486, %v589
        %v630 = vmul.f32 %v487, %v589
        %v631 = vmul.f32 %v488, %v589
        %v632 = vmul.f32 %v489, %v589
        %v633 = vmul.f32 %v490, %v589
        %v634 = vmul.f32 %v491, %v589
        %v635 = vmul.f32 %v492, %v589
        %v636 = vmul.f32 %v493, %v589
        %v637 = vmul.f32 %v494, %v589
        %v638 = vmul.f32 %v495, %v589
        %v639 = vmul.f32 %v496, %v589
        %v640 = vmul.f32 %v497, %v589
        %v641 = vmul.f32 %v498, %v589
        %v642 = vmul.f32 %v499, %v589
        %v643 = vmul.f32 %v500, %v589
        %v644 = vmul.f32 %v501, %v589
        %v645 = vmul.f32 %v502, %v589
        %v646 = vmul.f32 %v503, %v589
        %v647 = vmul.f32 %v504, %v589
        %v648 = vmul.f32 %v505, %v589
        %v649 = vmul.f32 %v506, %v589
        %v650 = vmul.f32 %v507, %v589
        %v651 = vmul.f32 %v508, %v589
        %v652 = vmul.f32 %v509, %v589
        %v653 = vmul.f32 %v510, %v589
        %v654 = vmul.f32 %v511, %v589
        %v655 = vmul.f32 %v512, %v589
        %v656 = vmul.f32 %v513, %v589
        %v657 = vmul.f32 %v514, %v589
        %v658 = vmul.f32 %v515, %v589
        %v659 = vmul.f32 %v516, %v589
        %v660 = vmul.f32 %v517, %v589
        %v661 = vmul.f32 %v518, %v589
        %v662 = vmul.f32 %v519, %v589
        %v663 = vmul.f32 %v520, %v589
        %v664 = vmul.f32 %v521, %v589
        %v665 = vmul.f32 %v522, %v589
        %v666 = vmul.f32 %v523, %v589
        %v667 = vmul.f32 %v524, %v589
        %v668 = vmul.f32 %v525, %v589
        %v669 = vmul.f32 %v526, %v589
        %v670 = vmul.f32 %v527, %v589
        %v671 = vmul.f32 %v528, %v589
        %v672 = vmul.f32 %v529, %v589
        %v673 = vmul.f32 %v530, %v589
        %v674 = vmul.f32 %v531, %v589
        %v675 = vmul.f32 %v532, %v589
        %v676 = vmul.f32 %v533, %v589
        %v677 = vmul.f32 %v534, %v589
        %v678 = vmul.f32 %v535, %v589
        %v679 = vmul.f32 %v536, %v589
        %v680 = vmul.f32 %v537, %v589
        %v681 = vmul.f32 %v538, %v589
        %v682 = vmul.f32 %v539, %v589
        %v683 = vmul.f32 %v540, %v589
        %v684 = vmul.f32 %v541, %v589
        %v685 = vmul.f32 %v542, %v589
        %v686 = vmul.f32 %v543, %v589
        %v687 = vmul.f32 %v544, %v589
        %v688 = vmul.f32 %v545, %v589
        %v689 = vmul.f32 %v546, %v589
        %v690 = vmul.f32 %v547, %v589
        %v691 = vmul.f32 %v548, %v589
        %v692 = vmul.f32 %v549, %v589
        %v693 = vmul.f32 %v550, %v589
        %v694 = vmul.f32 %v551, %v589
        %v695 = vmul.f32 %v552, %v589
        %v696 = vmul.f32 %v553, %v589
        %v697 = vmul.f32 %v554, %v589
        %v698 = vmul.f32 %v555, %v589
        %v699 = vmul.f32 %v556, %v589
        %v700 = vmul.f32 %v557, %v589
        %v701 = vmul.f32 %v558, %v589
        %v702 = vmul.f32 %v559, %v589
        %v703 = vmul.f32 %v560, %v589
        %v704 = vmul.f32 %v561, %v589
        %v705 = vmul.f32 %v562, %v589
        %v706 = vmul.f32 %v563, %v589
        %v707 = vmul.f32 %v564, %v589
        %v708 = vmul.f32 %v565, %v589
        %v709 = vmul.f32 %v566, %v589
        %v710 = vmul.f32 %v567, %v589
        %v711 = vmul.f32 %v568, %v589
        %v712 = vmul.f32 %v569, %v589
        %v713 = vmul.f32 %v570, %v589
        %v714 = vmul.f32 %v571, %v589
        %v715 = vmul.f32 %v572, %v589
        %v716 = vmul.f32 %v573, %v589
        %v717 = vmul.f32 %v574, %v589
        %v718 = vstv %s189
        %v719 = vsub.f32 %v190, %v718
        %v720 = vsub.f32 %v191, %v718
        %v721 = vsub.f32 %v192, %v718
        %v722 = vsub.f32 %v193, %v718
        %v723 = vsub.f32 %v194, %v718
        %v724 = vsub.f32 %v195, %v718
        %v725 = vsub.f32 %v196, %v718
        %v726 = vsub.f32 %v197, %v718
        %v727 = vsub.f32 %v198, %v718
        %v728 = vsub.f32 %v199, %v718
        %v729 = vsub.f32 %v200, %v718
        %v730 = vsub.f32 %v201, %v718
        %v731 = vsub.f32 %v202, %v718
        %v732 = vsub.f32 %v203, %v718
        %v733 = vsub.f32 %v204, %v718
        %v734 = vsub.f32 %v205, %v718
        %v735 = vsub.f32 %v206, %v718
        %v736 = vsub.f32 %v207, %v718
        %v737 = vsub.f32 %v208, %v718
        %v738 = vsub.f32 %v209, %v718
        %v739 = vsub.f32 %v210, %v718
        %v740 = vsub.f32 %v211, %v718
        %v741 = vsub.f32 %v212, %v718
        %v742 = vsub.f32 %v213, %v718
        %v743 = vsub.f32 %v214, %v718
        %v744 = vsub.f32 %v215, %v718
        %v745 = vsub.f32 %v216, %v718
        %v746 = vsub.f32 %v217, %v718
        %v747 = vsub.f32 %v218, %v718
        %v748 = vsub.f32 %v219, %v718
        %v749 = vsub.f32 %v220, %v718
        %v750 = vsub.f32 %v221, %v718
        %v751 = vsub.f32 %v222, %v718
        %v752 = vsub.f32 %v223, %v718
        %v753 = vsub.f32 %v224, %v718
        %v754 = vsub.f32 %v225, %v718
        %v755 = vsub.f32 %v226, %v718
        %v756 = vsub.f32 %v227, %v718
        %v757 = vsub.f32 %v228, %v718
        %v758 = vsub.f32 %v229, %v718
        %v759 = vsub.f32 %v230, %v718
        %v760 = vsub.f32 %v231, %v718
        %v761 = vsub.f32 %v232, %v718
        %v762 = vsub.f32 %v233, %v718
        %v763 = vsub.f32 %v234, %v718
        %v764 = vsub.f32 %v235, %v718
        %v765 = vsub.f32 %v236, %v718
        %v766 = vsub.f32 %v237, %v718
        %v767 = vsub.f32 %v238, %v718
        %v768 = vsub.f32 %v239, %v718
        %v769 = vsub.f32 %v240, %v718
        %v770 = vsub.f32 %v241, %v718
        %v771 = vsub.f32 %v242, %v718
        %v772 = vsub.f32 %v243, %v718
        %v773 = vsub.f32 %v244, %v718
        %v774 = vsub.f32 %v245, %v718
        %v775 = vsub.f32 %v246, %v718
        %v776 = vsub.f32 %v247, %v718
        %v777 = vsub.f32 %v248, %v718
        %v778 = vsub.f32 %v249, %v718
        %v779 = vsub.f32 %v250, %v718
        %v780 = vsub.f32 %v251, %v718
        %v781 = vsub.f32 %v252, %v718
        %v782 = vsub.f32 %v253, %v718
        %v783 = vsub.f32 %v254, %v718
        %v784 = vsub.f32 %v255, %v718
        %v785 = vsub.f32 %v256, %v718
        %v786 = vsub.f32 %v257, %v718
        %v787 = vsub.f32 %v258, %v718
        %v788 = vsub.f32 %v259, %v718
        %v789 = vsub.f32 %v260, %v718
        %v790 = vsub.f32 %v261, %v718
        %v791 = vsub.f32 %v262, %v718
        %v792 = vsub.f32 %v263, %v718
        %v793 = vsub.f32 %v264, %v718
        %v794 = vsub.f32 %v265, %v718
        %v795 = vsub.f32 %v266, %v718
        %v796 = vsub.f32 %v267, %v718
        %v797 = vsub.f32 %v268, %v718
        %v798 = vsub.f32 %v269, %v718
        %v799 = vsub.f32 %v270, %v718
        %v800 = vsub.f32 %v271, %v718
        %v801 = vsub.f32 %v272, %v718
        %v802 = vsub.f32 %v273, %v718
        %v803 = vsub.f32 %v274, %v718
        %v804 = vsub.f32 %v275, %v718
        %v805 = vsub.f32 %v276, %v718
        %v806 = vsub.f32 %v277, %v718
        %v807 = vsub.f32 %v278, %v718
        %v808 = vsub.f32 %v279, %v718
        %v809 = vsub.f32 %v280, %v718
        %v810 = vsub.f32 %v281, %v718
        %v811 = vsub.f32 %v282, %v718
        %v812 = vsub.f32 %v283, %v718
        %v813 = vsub.f32 %v284, %v718
        %v814 = vsub.f32 %v285, %v718
        %v815 = vsub.f32 %v286, %v718
        %v816 = vsub.f32 %v287, %v718
        %v817 = vsub.f32 %v288, %v718
        %v818 = vsub.f32 %v289, %v718
        %v819 = vsub.f32 %v290, %v718
        %v820 = vsub.f32 %v291, %v718
        %v821 = vsub.f32 %v292, %v718
        %v822 = vsub.f32 %v293, %v718
        %v823 = vsub.f32 %v294, %v718
        %v824 = vsub.f32 %v295, %v718
        %v825 = vsub.f32 %v296, %v718
        %v826 = vsub.f32 %v297, %v718
        %v827 = vsub.f32 %v298, %v718
        %v828 = vsub.f32 %v299, %v718
        %v829 = vsub.f32 %v300, %v718
        %v830 = vsub.f32 %v301, %v718
        %v831 = vsub.f32 %v302, %v718
        %v832 = vsub.f32 %v303, %v718
        %v833 = vsub.f32 %v304, %v718
        %v834 = vsub.f32 %v305, %v718
        %v835 = vsub.f32 %v306, %v718
        %v836 = vsub.f32 %v307, %v718
        %v837 = vsub.f32 %v308, %v718
        %v838 = vsub.f32 %v309, %v718
        %v839 = vsub.f32 %v310, %v718
        %v840 = vsub.f32 %v311, %v718
        %v841 = vsub.f32 %v312, %v718
        %v842 = vsub.f32 %v313, %v718
        %v843 = vsub.f32 %v314, %v718
        %v844 = vsub.f32 %v315, %v718
        %v845 = vsub.f32 %v316, %v718
        %v846 = vsub.f32 %v317, %v718
        %v847 = vsub.f32 0.0, %v719
        %v848 = vsub.f32 0.0, %v720
        %v849 = vsub.f32 0.0, %v721
        %v850 = vsub.f32 0.0, %v722
        %v851 = vsub.f32 0.0, %v723
        %v852 = vsub.f32 0.0, %v724
        %v853 = vsub.f32 0.0, %v725
        %v854 = vsub.f32 0.0, %v726
        %v855 = vsub.f32 0.0, %v727
        %v856 = vsub.f32 0.0, %v728
        %v857 = vsub.f32 0.0, %v729
        %v858 = vsub.f32 0.0, %v730
        %v859 = vsub.f32 0.0, %v731
        %v860 = vsub.f32 0.0, %v732
        %v861 = vsub.f32 0.0, %v733
        %v862 = vsub.f32 0.0, %v734
        %v863 = vsub.f32 0.0, %v735
        %v864 = vsub.f32 0.0, %v736
        %v865 = vsub.f32 0.0, %v737
        %v866 = vsub.f32 0.0, %v738
        %v867 = vsub.f32 0.0, %v739
        %v868 = vsub.f32 0.0, %v740
        %v869 = vsub.f32 0.0, %v741
        %v870 = vsub.f32 0.0, %v742
        %v871 = vsub.f32 0.0, %v743
        %v872 = vsub.f32 0.0, %v744
        %v873 = vsub.f32 0.0, %v745
        %v874 = vsub.f32 0.0, %v746
        %v875 = vsub.f32 0.0, %v747
        %v876 = vsub.f32 0.0, %v748
        %v877 = vsub.f32 0.0, %v749
        %v878 = vsub.f32 0.0, %v750
        %v879 = vsub.f32 0.0, %v751
        %v880 = vsub.f32 0.0, %v752
        %v881 = vsub.f32 0.0, %v753
        %v882 = vsub.f32 0.0, %v754
        %v883 = vsub.f32 0.0, %v755
        %v884 = vsub.f32 0.0, %v756
        %v885 = vsub.f32 0.0, %v757
        %v886 = vsub.f32 0.0, %v758
        %v887 = vsub.f32 0.0, %v759
        %v888 = vsub.f32 0.0, %v760
        %v889 = vsub.f32 0.0, %v761
        %v890 = vsub.f32 0.0, %v762
        %v891 = vsub.f32 0.0, %v763
        %v892 = vsub.f32 0.0, %v764
        %v893 = vsub.f32 0.0, %v765
        %v894 = vsub.f32 0.0, %v766
        %v895 = vsub.f32 0.0, %v767
        %v896 = vsub.f32 0.0, %v768
        %v897 = vsub.f32 0.0, %v769
        %v898 = vsub.f32 0.0, %v770
        %v899 = vsub.f32 0.0, %v771
        %v900 = vsub.f32 0.0, %v772
        %v901 = vsub.f32 0.0, %v773
        %v902 = vsub.f32 0.0, %v774
        %v903 = vsub.f32 0.0, %v775
        %v904 = vsub.f32 0.0, %v776
        %v905 = vsub.f32 0.0, %v777
        %v906 = vsub.f32 0.0, %v778
        %v907 = vsub.f32 0.0, %v779
        %v908 = vsub.f32 0.0, %v780
        %v909 = vsub.f32 0.0, %v781
        %v910 = vsub.f32 0.0, %v782
        %v911 = vsub.f32 0.0, %v783
        %v912 = vsub.f32 0.0, %v784
        %v913 = vsub.f32 0.0, %v785
        %v914 = vsub.f32 0.0, %v786
        %v915 = vsub.f32 0.0, %v787
        %v916 = vsub.f32 0.0, %v788
        %v917 = vsub.f32 0.0, %v789
        %v918 = vsub.f32 0.0, %v790
        %v919 = vsub.f32 0.0, %v791
        %v920 = vsub.f32 0.0, %v792
        %v921 = vsub.f32 0.0, %v793
        %v922 = vsub.f32 0.0, %v794
        %v923 = vsub.f32 0.0, %v795
        %v924 = vsub.f32 0.0, %v796
        %v925 = vsub.f32 0.0, %v797
        %v926 = vsub.f32 0.0, %v798
        %v927 = vsub.f32 0.0, %v799
        %v928 = vsub.f32 0.0, %v800
        %v929 = vsub.f32 0.0, %v801
        %v930 = vsub.f32 0.0, %v802
        %v931 = vsub.f32 0.0, %v803
        %v932 = vsub.f32 0.0, %v804
        %v933 = vsub.f32 0.0, %v805
        %v934 = vsub.f32 0.0, %v806
        %v935 = vsub.f32 0.0, %v807
        %v936 = vsub.f32 0.0, %v808
        %v937 = vsub.f32 0.0, %v809
        %v938 = vsub.f32 0.0, %v810
        %v939 = vsub.f32 0.0, %v811
        %v940 = vsub.f32 0.0, %v812
        %v941 = vsub.f32 0.0, %v813
        %v942 = vsub.f32 0.0, %v814
        %v943 = vsub.f32 0.0, %v815
        %v944 = vsub.f32 0.0, %v816
        %v945 = vsub.f32 0.0, %v817
        %v946 = vsub.f32 0.0, %v818
        %v947 = vsub.f32 0.0, %v819
        %v948 = vsub.f32 0.0, %v820
        %v949 = vsub.f32 0.0, %v821
        %v950 = vsub.f32 0.0, %v822
        %v951 = vsub.f32 0.0, %v823
        %v952 = vsub.f32 0.0, %v824
        %v953 = vsub.f32 0.0, %v825
        %v954 = vsub.f32 0.0, %v826
        %v955 = vsub.f32 0.0, %v827
        %v956 = vsub.f32 0.0, %v828
        %v957 = vsub.f32 0.0, %v829
        %v958 = vsub.f32 0.0, %v830
        %v959 = vsub.f32 0.0, %v831
        %v960 = vsub.f32 0.0, %v832
        %v961 = vsub.f32 0.0, %v833
        %v962 = vsub.f32 0.0, %v834
        %v963 = vsub.f32 0.0, %v835
        %v964 = vsub.f32 0.0, %v836
        %v965 = vsub.f32 0.0, %v837
        %v966 = vsub.f32 0.0, %v838
        %v967 = vsub.f32 0.0, %v839
        %v968 = vsub.f32 0.0, %v840
        %v969 = vsub.f32 0.0, %v841
        %v970 = vsub.f32 0.0, %v842
        %v971 = vsub.f32 0.0, %v843
        %v972 = vsub.f32 0.0, %v844
        %v973 = vsub.f32 0.0, %v845
        %v974 = vsub.f32 0.0, %v846
        %v975 = vstv %s187
        %v976 = vrcp.pop %v975
        %v977 = vmul.f32 %v975, %v976
        %v978 = vsub.f32 1.0, %v977
        %v979 = vmul.f32 %v976, %v978
        %v980 = vadd.f32 %v976, %v979
        %vm981 = vweird.f32 %v975
        %vm982 = vweird.f32 %v976
        %vm983 = vmor %vm981, %vm982
        %v984 = vsel %vm983, %v976, %v980
        %v985 = vand.u32 2147483647, %v975
        %vm986 = vcmp.eq.f32.partialorder %v985, 8.507059e+37
        %v987 = vand.u32 %v975, 2147483648
        %v988 = vor.u32 1.1754944e-38, %v987
        %v989 = vsel %vm986, %v988, %v984
        %v990 = vmul.f32 %v847, %v989
        %v991 = vmul.f32 %v848, %v989
        %v992 = vmul.f32 %v849, %v989
        %v993 = vmul.f32 %v850, %v989
        %v994 = vmul.f32 %v851, %v989
        %v995 = vmul.f32 %v852, %v989
        %v996 = vmul.f32 %v853, %v989
        %v997 = vmul.f32 %v854, %v989
        %v998 = vmul.f32 %v855, %v989
        %v999 = vmul.f32 %v856, %v989
        %v1000 = vmul.f32 %v857, %v989
        %v1001 = vmul.f32 %v858, %v989
        %v1002 = vmul.f32 %v859, %v989
        %v1003 = vmul.f32 %v860, %v989
        %v1004 = vmul.f32 %v861, %v989
        %v1005 = vmul.f32 %v862, %v989
        %v1006 = vmul.f32 %v863, %v989
        %v1007 = vmul.f32 %v864, %v989
        %v1008 = vmul.f32 %v865, %v989
        %v1009 = vmul.f32 %v866, %v989
        %v1010 = vmul.f32 %v867, %v989
        %v1011 = vmul.f32 %v868, %v989
        %v1012 = vmul.f32 %v869, %v989
        %v1013 = vmul.f32 %v870, %v989
        %v1014 = vmul.f32 %v871, %v989
        %v1015 = vmul.f32 %v872, %v989
        %v1016 = vmul.f32 %v873, %v989
        %v1017 = vmul.f32 %v874, %v989
        %v1018 = vmul.f32 %v875, %v989
        %v1019 = vmul.f32 %v876, %v989
        %v1020 = vmul.f32 %v877, %v989
        %v1021 = vmul.f32 %v878, %v989
        %v1022 = vmul.f32 %v879, %v989
        %v1023 = vmul.f32 %v880, %v989
        %v1024 = vmul.f32 %v881, %v989
        %v1025 = vmul.f32 %v882, %v989
        %v1026 = vmul.f32 %v883, %v989
        %v1027 = vmul.f32 %v884, %v989
        %v1028 = vmul.f32 %v885, %v989
        %v1029 = vmul.f32 %v886, %v989
        %v1030 = vmul.f32 %v887, %v989
        %v1031 = vmul.f32 %v888, %v989
        %v1032 = vmul.f32 %v889, %v989
        %v1033 = vmul.f32 %v890, %v989
        %v1034 = vmul.f32 %v891, %v989
        %v1035 = vmul.f32 %v892, %v989
        %v1036 = vmul.f32 %v893, %v989
        %v1037 = vmul.f32 %v894, %v989
        %v1038 = vmul.f32 %v895, %v989
        %v1039 = vmul.f32 %v896, %v989
        %v1040 = vmul.f32 %v897, %v989
        %v1041 = vmul.f32 %v898, %v989
        %v1042 = vmul.f32 %v899, %v989
        %v1043 = vmul.f32 %v900, %v989
        %v1044 = vmul.f32 %v901, %v989
        %v1045 = vmul.f32 %v902, %v989
        %v1046 = vmul.f32 %v903, %v989
        %v1047 = vmul.f32 %v904, %v989
        %v1048 = vmul.f32 %v905, %v989
        %v1049 = vmul.f32 %v906, %v989
        %v1050 = vmul.f32 %v907, %v989
        %v1051 = vmul.f32 %v908, %v989
        %v1052 = vmul.f32 %v909, %v989
        %v1053 = vmul.f32 %v910, %v989
        %v1054 = vmul.f32 %v911, %v989
        %v1055 = vmul.f32 %v912, %v989
        %v1056 = vmul.f32 %v913, %v989
        %v1057 = vmul.f32 %v914, %v989
        %v1058 = vmul.f32 %v915, %v989
        %v1059 = vmul.f32 %v916, %v989
        %v1060 = vmul.f32 %v917, %v989
        %v1061 = vmul.f32 %v918, %v989
        %v1062 = vmul.f32 %v919, %v989
        %v1063 = vmul.f32 %v920, %v989
        %v1064 = vmul.f32 %v921, %v989
        %v1065 = vmul.f32 %v922, %v989
        %v1066 = vmul.f32 %v923, %v989
        %v1067 = vmul.f32 %v924, %v989
        %v1068 = vmul.f32 %v925, %v989
        %v1069 = vmul.f32 %v926, %v989
        %v1070 = vmul.f32 %v927, %v989
        %v1071 = vmul.f32 %v928, %v989
        %v1072 = vmul.f32 %v929, %v989
        %v1073 = vmul.f32 %v930, %v989
        %v1074 = vmul.f32 %v931, %v989
        %v1075 = vmul.f32 %v932, %v989
        %v1076 = vmul.f32 %v933, %v989
        %v1077 = vmul.f32 %v934, %v989
        %v1078 = vmul.f32 %v935, %v989
        %v1079 = vmul.f32 %v936, %v989
        %v1080 = vmul.f32 %v937, %v989
        %v1081 = vmul.f32 %v938, %v989
        %v1082 = vmul.f32 %v939, %v989
        %v1083 = vmul.f32 %v940, %v989
        %v1084 = vmul.f32 %v941, %v989
        %v1085 = vmul.f32 %v942, %v989
        %v1086 = vmul.f32 %v943, %v989
        %v1087 = vmul.f32 %v944, %v989
        %v1088 = vmul.f32 %v945, %v989
        %v1089 = vmul.f32 %v946, %v989
        %v1090 = vmul.f32 %v947, %v989
        %v1091 = vmul.f32 %v948, %v989
        %v1092 = vmul.f32 %v949, %v989
        %v1093 = vmul.f32 %v950, %v989
        %v1094 = vmul.f32 %v951, %v989
        %v1095 = vmul.f32 %v952, %v989
        %v1096 = vmul.f32 %v953, %v989
        %v1097 = vmul.f32 %v954, %v989
        %v1098 = vmul.f32 %v955, %v989
        %v1099 = vmul.f32 %v956, %v989
        %v1100 = vmul.f32 %v957, %v989
        %v1101 = vmul.f32 %v958, %v989
        %v1102 = vmul.f32 %v959, %v989
        %v1103 = vmul.f32 %v960, %v989
        %v1104 = vmul.f32 %v961, %v989
        %v1105 = vmul.f32 %v962, %v989
        %v1106 = vmul.f32 %v963, %v989
        %v1107 = vmul.f32 %v964, %v989
        %v1108 = vmul.f32 %v965, %v989
        %v1109 = vmul.f32 %v966, %v989
        %v1110 = vmul.f32 %v967, %v989
        %v1111 = vmul.f32 %v968, %v989
        %v1112 = vmul.f32 %v969, %v989
        %v1113 = vmul.f32 %v970, %v989
        %v1114 = vmul.f32 %v971, %v989
        %v1115 = vmul.f32 %v972, %v989
        %v1116 = vmul.f32 %v973, %v989
        %v1117 = vmul.f32 %v974, %v989
        %v1118 = vlaneseq
        %v1119 = vand.u32 %v1118, 127
        %1120 = vset.pattern.permute.xlu0 0
        %1121 = vperm.xlu0 %1120, %v318
        %v1122 = vpop.permute.xlu0 %1121
        %1123 = vset.pattern.permute.xlu0 0
        %1124 = vperm.xlu0 %1123, %v319
        %v1125 = vpop.permute.xlu0 %1124
        %1126 = vset.pattern.permute.xlu0 0
        %1127 = vperm.xlu0 %1126, %v320
        %v1128 = vpop.permute.xlu0 %1127
        %1129 = vset.pattern.permute.xlu0 0
        %1130 = vperm.xlu0 %1129, %v321
        %v1131 = vpop.permute.xlu0 %1130
        %1132 = vset.pattern.permute.xlu0 0
        %1133 = vperm.xlu0 %1132, %v322
        %v1134 = vpop.permute.xlu0 %1133
        %1135 = vset.pattern.permute.xlu0 0
        %1136 = vperm.xlu0 %1135, %v323
        %v1137 = vpop.permute.xlu0 %1136
        %1138 = vset.pattern.permute.xlu0 0
        %1139 = vperm.xlu0 %1138, %v324
        %v1140 = vpop.permute.xlu0 %1139
        %1141 = vset.pattern.permute.xlu0 0
        %1142 = vperm.xlu0 %1141, %v325
        %v1143 = vpop.permute.xlu0 %1142
        %1144 = vset.pattern.permute.xlu0 0
        %1145 = vperm.xlu0 %1144, %v326
        %v1146 = vpop.permute.xlu0 %1145
        %1147 = vset.pattern.permute.xlu0 0
        %1148 = vperm.xlu0 %1147, %v327
        %v1149 = vpop.permute.xlu0 %1148
        %1150 = vset.pattern.permute.xlu0 0
        %1151 = vperm.xlu0 %1150, %v328
        %v1152 = vpop.permute.xlu0 %1151
        %1153 = vset.pattern.permute.xlu0 0
        %1154 = vperm.xlu0 %1153, %v329
        %v1155 = vpop.permute.xlu0 %1154
        %1156 = vset.pattern.permute.xlu0 0
        %1157 = vperm.xlu0 %1156, %v330
        %v1158 = vpop.permute.xlu0 %1157
        %1159 = vset.pattern.permute.xlu0 0
        %1160 = vperm.xlu0 %1159, %v331
        %v1161 = vpop.permute.xlu0 %1160
        %1162 = vset.pattern.permute.xlu0 0
        %1163 = vperm.xlu0 %1162, %v332
        %v1164 = vpop.permute.xlu0 %1163
        %1165 = vset.pattern.permute.xlu0 0
        %1166 = vperm.xlu0 %1165, %v333
        %v1167 = vpop.permute.xlu0 %1166
        %1168 = vset.pattern.permute.xlu0 0
        %1169 = vperm.xlu0 %1168, %v334
        %v1170 = vpop.permute.xlu0 %1169
        %1171 = vset.pattern.permute.xlu0 0
        %1172 = vperm.xlu0 %1171, %v335
        %v1173 = vpop.permute.xlu0 %1172
        %1174 = vset.pattern.permute.xlu0 0
        %1175 = vperm.xlu0 %1174, %v336
        %v1176 = vpop.permute.xlu0 %1175
        %1177 = vset.pattern.permute.xlu0 0
        %1178 = vperm.xlu0 %1177, %v337
        %v1179 = vpop.permute.xlu0 %1178
        %1180 = vset.pattern.permute.xlu0 0
        %1181 = vperm.xlu0 %1180, %v338
        %v1182 = vpop.permute.xlu0 %1181
        %1183 = vset.pattern.permute.xlu0 0
        %1184 = vperm.xlu0 %1183, %v339
        %v1185 = vpop.permute.xlu0 %1184
        %1186 = vset.pattern.permute.xlu0 0
        %1187 = vperm.xlu0 %1186, %v340
        %v1188 = vpop.permute.xlu0 %1187
        %1189 = vset.pattern.permute.xlu0 0
        %1190 = vperm.xlu0 %1189, %v341
        %v1191 = vpop.permute.xlu0 %1190
        %1192 = vset.pattern.permute.xlu0 0
        %1193 = vperm.xlu0 %1192, %v342
        %v1194 = vpop.permute.xlu0 %1193
        %1195 = vset.pattern.permute.xlu0 0
        %1196 = vperm.xlu0 %1195, %v343
        %v1197 = vpop.permute.xlu0 %1196
        %1198 = vset.pattern.permute.xlu0 0
        %1199 = vperm.xlu0 %1198, %v344
        %v1200 = vpop.permute.xlu0 %1199
        %1201 = vset.pattern.permute.xlu0 0
        %1202 = vperm.xlu0 %1201, %v345
        %v1203 = vpop.permute.xlu0 %1202
        %1204 = vset.pattern.permute.xlu0 0
        %1205 = vperm.xlu0 %1204, %v346
        %v1206 = vpop.permute.xlu0 %1205
        %1207 = vset.pattern.permute.xlu0 0
        %1208 = vperm.xlu0 %1207, %v347
        %v1209 = vpop.permute.xlu0 %1208
        %1210 = vset.pattern.permute.xlu0 0
        %1211 = vperm.xlu0 %1210, %v348
        %v1212 = vpop.permute.xlu0 %1211
        %1213 = vset.pattern.permute.xlu0 0
        %1214 = vperm.xlu0 %1213, %v349
        %v1215 = vpop.permute.xlu0 %1214
        %1216 = vset.pattern.permute.xlu0 0
        %1217 = vperm.xlu0 %1216, %v350
        %v1218 = vpop.permute.xlu0 %1217
        %1219 = vset.pattern.permute.xlu0 0
        %1220 = vperm.xlu0 %1219, %v351
        %v1221 = vpop.permute.xlu0 %1220
        %1222 = vset.pattern.permute.xlu0 0
        %1223 = vperm.xlu0 %1222, %v352
        %v1224 = vpop.permute.xlu0 %1223
        %1225 = vset.pattern.permute.xlu0 0
        %1226 = vperm.xlu0 %1225, %v353
        %v1227 = vpop.permute.xlu0 %1226
        %1228 = vset.pattern.permute.xlu0 0
        %1229 = vperm.xlu0 %1228, %v354
        %v1230 = vpop.permute.xlu0 %1229
        %1231 = vset.pattern.permute.xlu0 0
        %1232 = vperm.xlu0 %1231, %v355
        %v1233 = vpop.permute.xlu0 %1232
        %1234 = vset.pattern.permute.xlu0 0
        %1235 = vperm.xlu0 %1234, %v356
        %v1236 = vpop.permute.xlu0 %1235
        %1237 = vset.pattern.permute.xlu0 0
        %1238 = vperm.xlu0 %1237, %v357
        %v1239 = vpop.permute.xlu0 %1238
        %1240 = vset.pattern.permute.xlu0 0
        %1241 = vperm.xlu0 %1240, %v358
        %v1242 = vpop.permute.xlu0 %1241
        %1243 = vset.pattern.permute.xlu0 0
        %1244 = vperm.xlu0 %1243, %v359
        %v1245 = vpop.permute.xlu0 %1244
        %1246 = vset.pattern.permute.xlu0 0
        %1247 = vperm.xlu0 %1246, %v360
        %v1248 = vpop.permute.xlu0 %1247
        %1249 = vset.pattern.permute.xlu0 0
        %1250 = vperm.xlu0 %1249, %v361
        %v1251 = vpop.permute.xlu0 %1250
        %1252 = vset.pattern.permute.xlu0 0
        %1253 = vperm.xlu0 %1252, %v362
        %v1254 = vpop.permute.xlu0 %1253
        %1255 = vset.pattern.permute.xlu0 0
        %1256 = vperm.xlu0 %1255, %v363
        %v1257 = vpop.permute.xlu0 %1256
        %1258 = vset.pattern.permute.xlu0 0
        %1259 = vperm.xlu0 %1258, %v364
        %v1260 = vpop.permute.xlu0 %1259
        %1261 = vset.pattern.permute.xlu0 0
        %1262 = vperm.xlu0 %1261, %v365
        %v1263 = vpop.permute.xlu0 %1262
        %1264 = vset.pattern.permute.xlu0 0
        %1265 = vperm.xlu0 %1264, %v366
        %v1266 = vpop.permute.xlu0 %1265
        %1267 = vset.pattern.permute.xlu0 0
        %1268 = vperm.xlu0 %1267, %v367
        %v1269 = vpop.permute.xlu0 %1268
        %1270 = vset.pattern.permute.xlu0 0
        %1271 = vperm.xlu0 %1270, %v368
        %v1272 = vpop.permute.xlu0 %1271
        %1273 = vset.pattern.permute.xlu0 0
        %1274 = vperm.xlu0 %1273, %v369
        %v1275 = vpop.permute.xlu0 %1274
        %1276 = vset.pattern.permute.xlu0 0
        %1277 = vperm.xlu0 %1276, %v370
        %v1278 = vpop.permute.xlu0 %1277
        %1279 = vset.pattern.permute.xlu0 0
        %1280 = vperm.xlu0 %1279, %v371
        %v1281 = vpop.permute.xlu0 %1280
        %1282 = vset.pattern.permute.xlu0 0
        %1283 = vperm.xlu0 %1282, %v372
        %v1284 = vpop.permute.xlu0 %1283
        %1285 = vset.pattern.permute.xlu0 0
        %1286 = vperm.xlu0 %1285, %v373
        %v1287 = vpop.permute.xlu0 %1286
        %1288 = vset.pattern.permute.xlu0 0
        %1289 = vperm.xlu0 %1288, %v374
        %v1290 = vpop.permute.xlu0 %1289
        %1291 = vset.pattern.permute.xlu0 0
        %1292 = vperm.xlu0 %1291, %v375
        %v1293 = vpop.permute.xlu0 %1292
        %1294 = vset.pattern.permute.xlu0 0
        %1295 = vperm.xlu0 %1294, %v376
        %v1296 = vpop.permute.xlu0 %1295
        %1297 = vset.pattern.permute.xlu0 0
        %1298 = vperm.xlu0 %1297, %v377
        %v1299 = vpop.permute.xlu0 %1298
        %1300 = vset.pattern.permute.xlu0 0
        %1301 = vperm.xlu0 %1300, %v378
        %v1302 = vpop.permute.xlu0 %1301
        %1303 = vset.pattern.permute.xlu0 0
        %1304 = vperm.xlu0 %1303, %v379
        %v1305 = vpop.permute.xlu0 %1304
        %1306 = vset.pattern.permute.xlu0 0
        %1307 = vperm.xlu0 %1306, %v380
        %v1308 = vpop.permute.xlu0 %1307
        %1309 = vset.pattern.permute.xlu0 0
        %1310 = vperm.xlu0 %1309, %v381
        %v1311 = vpop.permute.xlu0 %1310
        %1312 = vset.pattern.permute.xlu0 0
        %1313 = vperm.xlu0 %1312, %v382
        %v1314 = vpop.permute.xlu0 %1313
        %1315 = vset.pattern.permute.xlu0 0
        %1316 = vperm.xlu0 %1315, %v383
        %v1317 = vpop.permute.xlu0 %1316
        %1318 = vset.pattern.permute.xlu0 0
        %1319 = vperm.xlu0 %1318, %v384
        %v1320 = vpop.permute.xlu0 %1319
        %1321 = vset.pattern.permute.xlu0 0
        %1322 = vperm.xlu0 %1321, %v385
        %v1323 = vpop.permute.xlu0 %1322
        %1324 = vset.pattern.permute.xlu0 0
        %1325 = vperm.xlu0 %1324, %v386
        %v1326 = vpop.permute.xlu0 %1325
        %1327 = vset.pattern.permute.xlu0 0
        %1328 = vperm.xlu0 %1327, %v387
        %v1329 = vpop.permute.xlu0 %1328
        %1330 = vset.pattern.permute.xlu0 0
        %1331 = vperm.xlu0 %1330, %v388
        %v1332 = vpop.permute.xlu0 %1331
        %1333 = vset.pattern.permute.xlu0 0
        %1334 = vperm.xlu0 %1333, %v389
        %v1335 = vpop.permute.xlu0 %1334
        %1336 = vset.pattern.permute.xlu0 0
        %1337 = vperm.xlu0 %1336, %v390
        %v1338 = vpop.permute.xlu0 %1337
        %1339 = vset.pattern.permute.xlu0 0
        %1340 = vperm.xlu0 %1339, %v391
        %v1341 = vpop.permute.xlu0 %1340
        %1342 = vset.pattern.permute.xlu0 0
        %1343 = vperm.xlu0 %1342, %v392
        %v1344 = vpop.permute.xlu0 %1343
        %1345 = vset.pattern.permute.xlu0 0
        %1346 = vperm.xlu0 %1345, %v393
        %v1347 = vpop.permute.xlu0 %1346
        %1348 = vset.pattern.permute.xlu0 0
        %1349 = vperm.xlu0 %1348, %v394
        %v1350 = vpop.permute.xlu0 %1349
        %1351 = vset.pattern.permute.xlu0 0
        %1352 = vperm.xlu0 %1351, %v395
        %v1353 = vpop.permute.xlu0 %1352
        %1354 = vset.pattern.permute.xlu0 0
        %1355 = vperm.xlu0 %1354, %v396
        %v1356 = vpop.permute.xlu0 %1355
        %1357 = vset.pattern.permute.xlu0 0
        %1358 = vperm.xlu0 %1357, %v397
        %v1359 = vpop.permute.xlu0 %1358
        %1360 = vset.pattern.permute.xlu0 0
        %1361 = vperm.xlu0 %1360, %v398
        %v1362 = vpop.permute.xlu0 %1361
        %1363 = vset.pattern.permute.xlu0 0
        %1364 = vperm.xlu0 %1363, %v399
        %v1365 = vpop.permute.xlu0 %1364
        %1366 = vset.pattern.permute.xlu0 0
        %1367 = vperm.xlu0 %1366, %v400
        %v1368 = vpop.permute.xlu0 %1367
        %1369 = vset.pattern.permute.xlu0 0
        %1370 = vperm.xlu0 %1369, %v401
        %v1371 = vpop.permute.xlu0 %1370
        %1372 = vset.pattern.permute.xlu0 0
        %1373 = vperm.xlu0 %1372, %v402
        %v1374 = vpop.permute.xlu0 %1373
        %1375 = vset.pattern.permute.xlu0 0
        %1376 = vperm.xlu0 %1375, %v403
        %v1377 = vpop.permute.xlu0 %1376
        %1378 = vset.pattern.permute.xlu0 0
        %1379 = vperm.xlu0 %1378, %v404
        %v1380 = vpop.permute.xlu0 %1379
        %1381 = vset.pattern.permute.xlu0 0
        %1382 = vperm.xlu0 %1381, %v405
        %v1383 = vpop.permute.xlu0 %1382
        %1384 = vset.pattern.permute.xlu0 0
        %1385 = vperm.xlu0 %1384, %v406
        %v1386 = vpop.permute.xlu0 %1385
        %1387 = vset.pattern.permute.xlu0 0
        %1388 = vperm.xlu0 %1387, %v407
        %v1389 = vpop.permute.xlu0 %1388
        %1390 = vset.pattern.permute.xlu0 0
        %1391 = vperm.xlu0 %1390, %v408
        %v1392 = vpop.permute.xlu0 %1391
        %1393 = vset.pattern.permute.xlu0 0
        %1394 = vperm.xlu0 %1393, %v409
        %v1395 = vpop.permute.xlu0 %1394
        %1396 = vset.pattern.permute.xlu0 0
        %1397 = vperm.xlu0 %1396, %v410
        %v1398 = vpop.permute.xlu0 %1397
        %1399 = vset.pattern.permute.xlu0 0
        %1400 = vperm.xlu0 %1399, %v411
        %v1401 = vpop.permute.xlu0 %1400
        %1402 = vset.pattern.permute.xlu0 0
        %1403 = vperm.xlu0 %1402, %v412
        %v1404 = vpop.permute.xlu0 %1403
        %1405 = vset.pattern.permute.xlu0 0
        %1406 = vperm.xlu0 %1405, %v413
        %v1407 = vpop.permute.xlu0 %1406
        %1408 = vset.pattern.permute.xlu0 0
        %1409 = vperm.xlu0 %1408, %v414
        %v1410 = vpop.permute.xlu0 %1409
        %1411 = vset.pattern.permute.xlu0 0
        %1412 = vperm.xlu0 %1411, %v415
        %v1413 = vpop.permute.xlu0 %1412
        %1414 = vset.pattern.permute.xlu0 0
        %1415 = vperm.xlu0 %1414, %v416
        %v1416 = vpop.permute.xlu0 %1415
        %1417 = vset.pattern.permute.xlu0 0
        %1418 = vperm.xlu0 %1417, %v417
        %v1419 = vpop.permute.xlu0 %1418
        %1420 = vset.pattern.permute.xlu0 0
        %1421 = vperm.xlu0 %1420, %v418
        %v1422 = vpop.permute.xlu0 %1421
        %1423 = vset.pattern.permute.xlu0 0
        %1424 = vperm.xlu0 %1423, %v419
        %v1425 = vpop.permute.xlu0 %1424
        %1426 = vset.pattern.permute.xlu0 0
        %1427 = vperm.xlu0 %1426, %v420
        %v1428 = vpop.permute.xlu0 %1427
        %1429 = vset.pattern.permute.xlu0 0
        %1430 = vperm.xlu0 %1429, %v421
        %v1431 = vpop.permute.xlu0 %1430
        %1432 = vset.pattern.permute.xlu0 0
        %1433 = vperm.xlu0 %1432, %v422
        %v1434 = vpop.permute.xlu0 %1433
        %1435 = vset.pattern.permute.xlu0 0
        %1436 = vperm.xlu0 %1435, %v423
        %v1437 = vpop.permute.xlu0 %1436
        %1438 = vset.pattern.permute.xlu0 0
        %1439 = vperm.xlu0 %1438, %v424
        %v1440 = vpop.permute.xlu0 %1439
        %1441 = vset.pattern.permute.xlu0 0
        %1442 = vperm.xlu0 %1441, %v425
        %v1443 = vpop.permute.xlu0 %1442
        %1444 = vset.pattern.permute.xlu0 0
        %1445 = vperm.xlu0 %1444, %v426
        %v1446 = vpop.permute.xlu0 %1445
        %1447 = vset.pattern.permute.xlu0 0
        %1448 = vperm.xlu0 %1447, %v427
        %v1449 = vpop.permute.xlu0 %1448
        %1450 = vset.pattern.permute.xlu0 0
        %1451 = vperm.xlu0 %1450, %v428
        %v1452 = vpop.permute.xlu0 %1451
        %1453 = vset.pattern.permute.xlu0 0
        %1454 = vperm.xlu0 %1453, %v429
        %v1455 = vpop.permute.xlu0 %1454
        %1456 = vset.pattern.permute.xlu0 0
        %1457 = vperm.xlu0 %1456, %v430
        %v1458 = vpop.permute.xlu0 %1457
        %1459 = vset.pattern.permute.xlu0 0
        %1460 = vperm.xlu0 %1459, %v431
        %v1461 = vpop.permute.xlu0 %1460
        %1462 = vset.pattern.permute.xlu0 0
        %1463 = vperm.xlu0 %1462, %v432
        %v1464 = vpop.permute.xlu0 %1463
        %1465 = vset.pattern.permute.xlu0 0
        %1466 = vperm.xlu0 %1465, %v433
        %v1467 = vpop.permute.xlu0 %1466
        %1468 = vset.pattern.permute.xlu0 0
        %1469 = vperm.xlu0 %1468, %v434
        %v1470 = vpop.permute.xlu0 %1469
        %1471 = vset.pattern.permute.xlu0 0
        %1472 = vperm.xlu0 %1471, %v435
        %v1473 = vpop.permute.xlu0 %1472
        %1474 = vset.pattern.permute.xlu0 0
        %1475 = vperm.xlu0 %1474, %v436
        %v1476 = vpop.permute.xlu0 %1475
        %1477 = vset.pattern.permute.xlu0 0
        %1478 = vperm.xlu0 %1477, %v437
        %v1479 = vpop.permute.xlu0 %1478
        %1480 = vset.pattern.permute.xlu0 0
        %1481 = vperm.xlu0 %1480, %v438
        %v1482 = vpop.permute.xlu0 %1481
        %1483 = vset.pattern.permute.xlu0 0
        %1484 = vperm.xlu0 %1483, %v439
        %v1485 = vpop.permute.xlu0 %1484
        %1486 = vset.pattern.permute.xlu0 0
        %1487 = vperm.xlu0 %1486, %v440
        %v1488 = vpop.permute.xlu0 %1487
        %1489 = vset.pattern.permute.xlu0 0
        %1490 = vperm.xlu0 %1489, %v441
        %v1491 = vpop.permute.xlu0 %1490
        %1492 = vset.pattern.permute.xlu0 0
        %1493 = vperm.xlu0 %1492, %v442
        %v1494 = vpop.permute.xlu0 %1493
        %1495 = vset.pattern.permute.xlu0 0
        %1496 = vperm.xlu0 %1495, %v443
        %v1497 = vpop.permute.xlu0 %1496
        %1498 = vset.pattern.permute.xlu0 0
        %1499 = vperm.xlu0 %1498, %v444
        %v1500 = vpop.permute.xlu0 %1499
        %1501 = vset.pattern.permute.xlu0 0
        %1502 = vperm.xlu0 %1501, %v445
        %v1503 = vpop.permute.xlu0 %1502
        %vm1504 = vcmp.eq.s32.totalorder %v1122, %v1119
        %vm1505 = vcmp.eq.s32.totalorder %v1125, %v1119
        %vm1506 = vcmp.eq.s32.totalorder %v1128, %v1119
        %vm1507 = vcmp.eq.s32.totalorder %v1131, %v1119
        %vm1508 = vcmp.eq.s32.totalorder %v1134, %v1119
        %vm1509 = vcmp.eq.s32.totalorder %v1137, %v1119
        %vm1510 = vcmp.eq.s32.totalorder %v1140, %v1119
        %vm1511 = vcmp.eq.s32.totalorder %v1143, %v1119
        %vm1512 = vcmp.eq.s32.totalorder %v1146, %v1119
        %vm1513 = vcmp.eq.s32.totalorder %v1149, %v1119
        %vm1514 = vcmp.eq.s32.totalorder %v1152, %v1119
        %vm1515 = vcmp.eq.s32.totalorder %v1155, %v1119
        %vm1516 = vcmp.eq.s32.totalorder %v1158, %v1119
        %vm1517 = vcmp.eq.s32.totalorder %v1161, %v1119
        %vm1518 = vcmp.eq.s32.totalorder %v1164, %v1119
        %vm1519 = vcmp.eq.s32.totalorder %v1167, %v1119
        %vm1520 = vcmp.eq.s32.totalorder %v1170, %v1119
        %vm1521 = vcmp.eq.s32.totalorder %v1173, %v1119
        %vm1522 = vcmp.eq.s32.totalorder %v1176, %v1119
        %vm1523 = vcmp.eq.s32.totalorder %v1179, %v1119
        %vm1524 = vcmp.eq.s32.totalorder %v1182, %v1119
        %vm1525 = vcmp.eq.s32.totalorder %v1185, %v1119
        %vm1526 = vcmp.eq.s32.totalorder %v1188, %v1119
        %vm1527 = vcmp.eq.s32.totalorder %v1191, %v1119
        %vm1528 = vcmp.eq.s32.totalorder %v1194, %v1119
        %vm1529 = vcmp.eq.s32.totalorder %v1197, %v1119
        %vm1530 = vcmp.eq.s32.totalorder %v1200, %v1119
        %vm1531 = vcmp.eq.s32.totalorder %v1203, %v1119
        %vm1532 = vcmp.eq.s32.totalorder %v1206, %v1119
        %vm1533 = vcmp.eq.s32.totalorder %v1209, %v1119
        %vm1534 = vcmp.eq.s32.totalorder %v1212, %v1119
        %vm1535 = vcmp.eq.s32.totalorder %v1215, %v1119
        %vm1536 = vcmp.eq.s32.totalorder %v1218, %v1119
        %vm1537 = vcmp.eq.s32.totalorder %v1221, %v1119
        %vm1538 = vcmp.eq.s32.totalorder %v1224, %v1119
        %vm1539 = vcmp.eq.s32.totalorder %v1227, %v1119
        %vm1540 = vcmp.eq.s32.totalorder %v1230, %v1119
        %vm1541 = vcmp.eq.s32.totalorder %v1233, %v1119
        %vm1542 = vcmp.eq.s32.totalorder %v1236, %v1119
        %vm1543 = vcmp.eq.s32.totalorder %v1239, %v1119
        %vm1544 = vcmp.eq.s32.totalorder %v1242, %v1119
        %vm1545 = vcmp.eq.s32.totalorder %v1245, %v1119
        %vm1546 = vcmp.eq.s32.totalorder %v1248, %v1119
        %vm1547 = vcmp.eq.s32.totalorder %v1251, %v1119
        %vm1548 = vcmp.eq.s32.totalorder %v1254, %v1119
        %vm1549 = vcmp.eq.s32.totalorder %v1257, %v1119
        %vm1550 = vcmp.eq.s32.totalorder %v1260, %v1119
        %vm1551 = vcmp.eq.s32.totalorder %v1263, %v1119
        %vm1552 = vcmp.eq.s32.totalorder %v1266, %v1119
        %vm1553 = vcmp.eq.s32.totalorder %v1269, %v1119
        %vm1554 = vcmp.eq.s32.totalorder %v1272, %v1119
        %vm1555 = vcmp.eq.s32.totalorder %v1275, %v1119
        %vm1556 = vcmp.eq.s32.totalorder %v1278, %v1119
        %vm1557 = vcmp.eq.s32.totalorder %v1281, %v1119
        %vm1558 = vcmp.eq.s32.totalorder %v1284, %v1119
        %vm1559 = vcmp.eq.s32.totalorder %v1287, %v1119
        %vm1560 = vcmp.eq.s32.totalorder %v1290, %v1119
        %vm1561 = vcmp.eq.s32.totalorder %v1293, %v1119
        %vm1562 = vcmp.eq.s32.totalorder %v1296, %v1119
        %vm1563 = vcmp.eq.s32.totalorder %v1299, %v1119
        %vm1564 = vcmp.eq.s32.totalorder %v1302, %v1119
        %vm1565 = vcmp.eq.s32.totalorder %v1305, %v1119
        %vm1566 = vcmp.eq.s32.totalorder %v1308, %v1119
        %vm1567 = vcmp.eq.s32.totalorder %v1311, %v1119
        %vm1568 = vcmp.eq.s32.totalorder %v1314, %v1119
        %vm1569 = vcmp.eq.s32.totalorder %v1317, %v1119
        %vm1570 = vcmp.eq.s32.totalorder %v1320, %v1119
        %vm1571 = vcmp.eq.s32.totalorder %v1323, %v1119
        %vm1572 = vcmp.eq.s32.totalorder %v1326, %v1119
        %vm1573 = vcmp.eq.s32.totalorder %v1329, %v1119
        %vm1574 = vcmp.eq.s32.totalorder %v1332, %v1119
        %vm1575 = vcmp.eq.s32.totalorder %v1335, %v1119
        %vm1576 = vcmp.eq.s32.totalorder %v1338, %v1119
        %vm1577 = vcmp.eq.s32.totalorder %v1341, %v1119
        %vm1578 = vcmp.eq.s32.totalorder %v1344, %v1119
        %vm1579 = vcmp.eq.s32.totalorder %v1347, %v1119
        %vm1580 = vcmp.eq.s32.totalorder %v1350, %v1119
        %vm1581 = vcmp.eq.s32.totalorder %v1353, %v1119
        %vm1582 = vcmp.eq.s32.totalorder %v1356, %v1119
        %vm1583 = vcmp.eq.s32.totalorder %v1359, %v1119
        %vm1584 = vcmp.eq.s32.totalorder %v1362, %v1119
        %vm1585 = vcmp.eq.s32.totalorder %v1365, %v1119
        %vm1586 = vcmp.eq.s32.totalorder %v1368, %v1119
        %vm1587 = vcmp.eq.s32.totalorder %v1371, %v1119
        %vm1588 = vcmp.eq.s32.totalorder %v1374, %v1119
        %vm1589 = vcmp.eq.s32.totalorder %v1377, %v1119
        %vm1590 = vcmp.eq.s32.totalorder %v1380, %v1119
        %vm1591 = vcmp.eq.s32.totalorder %v1383, %v1119
        %vm1592 = vcmp.eq.s32.totalorder %v1386, %v1119
        %vm1593 = vcmp.eq.s32.totalorder %v1389, %v1119
        %vm1594 = vcmp.eq.s32.totalorder %v1392, %v1119
        %vm1595 = vcmp.eq.s32.totalorder %v1395, %v1119
        %vm1596 = vcmp.eq.s32.totalorder %v1398, %v1119
        %vm1597 = vcmp.eq.s32.totalorder %v1401, %v1119
        %vm1598 = vcmp.eq.s32.totalorder %v1404, %v1119
        %vm1599 = vcmp.eq.s32.totalorder %v1407, %v1119
        %vm1600 = vcmp.eq.s32.totalorder %v1410, %v1119
        %vm1601 = vcmp.eq.s32.totalorder %v1413, %v1119
        %vm1602 = vcmp.eq.s32.totalorder %v1416, %v1119
        %vm1603 = vcmp.eq.s32.totalorder %v1419, %v1119
        %vm1604 = vcmp.eq.s32.totalorder %v1422, %v1119
        %vm1605 = vcmp.eq.s32.totalorder %v1425, %v1119
        %vm1606 = vcmp.eq.s32.totalorder %v1428, %v1119
        %vm1607 = vcmp.eq.s32.totalorder %v1431, %v1119
        %vm1608 = vcmp.eq.s32.totalorder %v1434, %v1119
        %vm1609 = vcmp.eq.s32.totalorder %v1437, %v1119
        %vm1610 = vcmp.eq.s32.totalorder %v1440, %v1119
        %vm1611 = vcmp.eq.s32.totalorder %v1443, %v1119
        %vm1612 = vcmp.eq.s32.totalorder %v1446, %v1119
        %vm1613 = vcmp.eq.s32.totalorder %v1449, %v1119
        %vm1614 = vcmp.eq.s32.totalorder %v1452, %v1119
        %vm1615 = vcmp.eq.s32.totalorder %v1455, %v1119
        %vm1616 = vcmp.eq.s32.totalorder %v1458, %v1119
        %vm1617 = vcmp.eq.s32.totalorder %v1461, %v1119
        %vm1618 = vcmp.eq.s32.totalorder %v1464, %v1119
        %vm1619 = vcmp.eq.s32.totalorder %v1467, %v1119
        %vm1620 = vcmp.eq.s32.totalorder %v1470, %v1119
        %vm1621 = vcmp.eq.s32.totalorder %v1473, %v1119
        %vm1622 = vcmp.eq.s32.totalorder %v1476, %v1119
        %vm1623 = vcmp.eq.s32.totalorder %v1479, %v1119
        %vm1624 = vcmp.eq.s32.totalorder %v1482, %v1119
        %vm1625 = vcmp.eq.s32.totalorder %v1485, %v1119
        %vm1626 = vcmp.eq.s32.totalorder %v1488, %v1119
        %vm1627 = vcmp.eq.s32.totalorder %v1491, %v1119
        %vm1628 = vcmp.eq.s32.totalorder %v1494, %v1119
        %vm1629 = vcmp.eq.s32.totalorder %v1497, %v1119
        %vm1630 = vcmp.eq.s32.totalorder %v1500, %v1119
        %vm1631 = vcmp.eq.s32.totalorder %v1503, %v1119
        %v1632 = vsel %vm1504, 1, 0
        %v1633 = vsel %vm1505, 1, 0
        %v1634 = vsel %vm1506, 1, 0
        %v1635 = vsel %vm1507, 1, 0
        %v1636 = vsel %vm1508, 1, 0
        %v1637 = vsel %vm1509, 1, 0
        %v1638 = vsel %vm1510, 1, 0
        %v1639 = vsel %vm1511, 1, 0
        %v1640 = vsel %vm1512, 1, 0
        %v1641 = vsel %vm1513, 1, 0
        %v1642 = vsel %vm1514, 1, 0
        %v1643 = vsel %vm1515, 1, 0
        %v1644 = vsel %vm1516, 1, 0
        %v1645 = vsel %vm1517, 1, 0
        %v1646 = vsel %vm1518, 1, 0
        %v1647 = vsel %vm1519, 1, 0
        %v1648 = vsel %vm1520, 1, 0
        %v1649 = vsel %vm1521, 1, 0
        %v1650 = vsel %vm1522, 1, 0
        %v1651 = vsel %vm1523, 1, 0
        %v1652 = vsel %vm1524, 1, 0
        %v1653 = vsel %vm1525, 1, 0
        %v1654 = vsel %vm1526, 1, 0
        %v1655 = vsel %vm1527, 1, 0
        %v1656 = vsel %vm1528, 1, 0
        %v1657 = vsel %vm1529, 1, 0
        %v1658 = vsel %vm1530, 1, 0
        %v1659 = vsel %vm1531, 1, 0
        %v1660 = vsel %vm1532, 1, 0
        %v1661 = vsel %vm1533, 1, 0
        %v1662 = vsel %vm1534, 1, 0
        %v1663 = vsel %vm1535, 1, 0
        %v1664 = vsel %vm1536, 1, 0
        %v1665 = vsel %vm1537, 1, 0
        %v1666 = vsel %vm1538, 1, 0
        %v1667 = vsel %vm1539, 1, 0
        %v1668 = vsel %vm1540, 1, 0
        %v1669 = vsel %vm1541, 1, 0
        %v1670 = vsel %vm1542, 1, 0
        %v1671 = vsel %vm1543, 1, 0
        %v1672 = vsel %vm1544, 1, 0
        %v1673 = vsel %vm1545, 1, 0
        %v1674 = vsel %vm1546, 1, 0
        %v1675 = vsel %vm1547, 1, 0
        %v1676 = vsel %vm1548, 1, 0
        %v1677 = vsel %vm1549, 1, 0
        %v1678 = vsel %vm1550, 1, 0
        %v1679 = vsel %vm1551, 1, 0
        %v1680 = vsel %vm1552, 1, 0
        %v1681 = vsel %vm1553, 1, 0
        %v1682 = vsel %vm1554, 1, 0
        %v1683 = vsel %vm1555, 1, 0
        %v1684 = vsel %vm1556, 1, 0
        %v1685 = vsel %vm1557, 1, 0
        %v1686 = vsel %vm1558, 1, 0
        %v1687 = vsel %vm1559, 1, 0
        %v1688 = vsel %vm1560, 1, 0
        %v1689 = vsel %vm1561, 1, 0
        %v1690 = vsel %vm1562, 1, 0
        %v1691 = vsel %vm1563, 1, 0
        %v1692 = vsel %vm1564, 1, 0
        %v1693 = vsel %vm1565, 1, 0
        %v1694 = vsel %vm1566, 1, 0
        %v1695 = vsel %vm1567, 1, 0
        %v1696 = vsel %vm1568, 1, 0
        %v1697 = vsel %vm1569, 1, 0
        %v1698 = vsel %vm1570, 1, 0
        %v1699 = vsel %vm1571, 1, 0
        %v1700 = vsel %vm1572, 1, 0
        %v1701 = vsel %vm1573, 1, 0
        %v1702 = vsel %vm1574, 1, 0
        %v1703 = vsel %vm1575, 1, 0
        %v1704 = vsel %vm1576, 1, 0
        %v1705 = vsel %vm1577, 1, 0
        %v1706 = vsel %vm1578, 1, 0
        %v1707 = vsel %vm1579, 1, 0
        %v1708 = vsel %vm1580, 1, 0
        %v1709 = vsel %vm1581, 1, 0
        %v1710 = vsel %vm1582, 1, 0
        %v1711 = vsel %vm1583, 1, 0
        %v1712 = vsel %vm1584, 1, 0
        %v1713 = vsel %vm1585, 1, 0
        %v1714 = vsel %vm1586, 1, 0
        %v1715 = vsel %vm1587, 1, 0
        %v1716 = vsel %vm1588, 1, 0
        %v1717 = vsel %vm1589, 1, 0
        %v1718 = vsel %vm1590, 1, 0
        %v1719 = vsel %vm1591, 1, 0
        %v1720 = vsel %vm1592, 1, 0
        %v1721 = vsel %vm1593, 1, 0
        %v1722 = vsel %vm1594, 1, 0
        %v1723 = vsel %vm1595, 1, 0
        %v1724 = vsel %vm1596, 1, 0
        %v1725 = vsel %vm1597, 1, 0
        %v1726 = vsel %vm1598, 1, 0
        %v1727 = vsel %vm1599, 1, 0
        %v1728 = vsel %vm1600, 1, 0
        %v1729 = vsel %vm1601, 1, 0
        %v1730 = vsel %vm1602, 1, 0
        %v1731 = vsel %vm1603, 1, 0
        %v1732 = vsel %vm1604, 1, 0
        %v1733 = vsel %vm1605, 1, 0
        %v1734 = vsel %vm1606, 1, 0
        %v1735 = vsel %vm1607, 1, 0
        %v1736 = vsel %vm1608, 1, 0
        %v1737 = vsel %vm1609, 1, 0
        %v1738 = vsel %vm1610, 1, 0
        %v1739 = vsel %vm1611, 1, 0
        %v1740 = vsel %vm1612, 1, 0
        %v1741 = vsel %vm1613, 1, 0
        %v1742 = vsel %vm1614, 1, 0
        %v1743 = vsel %vm1615, 1, 0
        %v1744 = vsel %vm1616, 1, 0
        %v1745 = vsel %vm1617, 1, 0
        %v1746 = vsel %vm1618, 1, 0
        %v1747 = vsel %vm1619, 1, 0
        %v1748 = vsel %vm1620, 1, 0
        %v1749 = vsel %vm1621, 1, 0
        %v1750 = vsel %vm1622, 1, 0
        %v1751 = vsel %vm1623, 1, 0
        %v1752 = vsel %vm1624, 1, 0
        %v1753 = vsel %vm1625, 1, 0
        %v1754 = vsel %vm1626, 1, 0
        %v1755 = vsel %vm1627, 1, 0
        %v1756 = vsel %vm1628, 1, 0
        %v1757 = vsel %vm1629, 1, 0
        %v1758 = vsel %vm1630, 1, 0
        %v1759 = vsel %vm1631, 1, 0
        %v1760 = vcvt.s32.f32 %v1632
        %v1761 = vcvt.s32.f32 %v1633
        %v1762 = vcvt.s32.f32 %v1634
        %v1763 = vcvt.s32.f32 %v1635
        %v1764 = vcvt.s32.f32 %v1636
        %v1765 = vcvt.s32.f32 %v1637
        %v1766 = vcvt.s32.f32 %v1638
        %v1767 = vcvt.s32.f32 %v1639
        %v1768 = vcvt.s32.f32 %v1640
        %v1769 = vcvt.s32.f32 %v1641
        %v1770 = vcvt.s32.f32 %v1642
        %v1771 = vcvt.s32.f32 %v1643
        %v1772 = vcvt.s32.f32 %v1644
        %v1773 = vcvt.s32.f32 %v1645
        %v1774 = vcvt.s32.f32 %v1646
        %v1775 = vcvt.s32.f32 %v1647
        %v1776 = vcvt.s32.f32 %v1648
        %v1777 = vcvt.s32.f32 %v1649
        %v1778 = vcvt.s32.f32 %v1650
        %v1779 = vcvt.s32.f32 %v1651
        %v1780 = vcvt.s32.f32 %v1652
        %v1781 = vcvt.s32.f32 %v1653
        %v1782 = vcvt.s32.f32 %v1654
        %v1783 = vcvt.s32.f32 %v1655
        %v1784 = vcvt.s32.f32 %v1656
        %v1785 = vcvt.s32.f32 %v1657
        %v1786 = vcvt.s32.f32 %v1658
        %v1787 = vcvt.s32.f32 %v1659
        %v1788 = vcvt.s32.f32 %v1660
        %v1789 = vcvt.s32.f32 %v1661
        %v1790 = vcvt.s32.f32 %v1662
        %v1791 = vcvt.s32.f32 %v1663
        %v1792 = vcvt.s32.f32 %v1664
        %v1793 = vcvt.s32.f32 %v1665
        %v1794 = vcvt.s32.f32 %v1666
        %v1795 = vcvt.s32.f32 %v1667
        %v1796 = vcvt.s32.f32 %v1668
        %v1797 = vcvt.s32.f32 %v1669
        %v1798 = vcvt.s32.f32 %v1670
        %v1799 = vcvt.s32.f32 %v1671
        %v1800 = vcvt.s32.f32 %v1672
        %v1801 = vcvt.s32.f32 %v1673
        %v1802 = vcvt.s32.f32 %v1674
        %v1803 = vcvt.s32.f32 %v1675
        %v1804 = vcvt.s32.f32 %v1676
        %v1805 = vcvt.s32.f32 %v1677
        %v1806 = vcvt.s32.f32 %v1678
        %v1807 = vcvt.s32.f32 %v1679
        %v1808 = vcvt.s32.f32 %v1680
        %v1809 = vcvt.s32.f32 %v1681
        %v1810 = vcvt.s32.f32 %v1682
        %v1811 = vcvt.s32.f32 %v1683
        %v1812 = vcvt.s32.f32 %v1684
        %v1813 = vcvt.s32.f32 %v1685
        %v1814 = vcvt.s32.f32 %v1686
        %v1815 = vcvt.s32.f32 %v1687
        %v1816 = vcvt.s32.f32 %v1688
        %v1817 = vcvt.s32.f32 %v1689
        %v1818 = vcvt.s32.f32 %v1690
        %v1819 = vcvt.s32.f32 %v1691
        %v1820 = vcvt.s32.f32 %v1692
        %v1821 = vcvt.s32.f32 %v1693
        %v1822 = vcvt.s32.f32 %v1694
        %v1823 = vcvt.s32.f32 %v1695
        %v1824 = vcvt.s32.f32 %v1696
        %v1825 = vcvt.s32.f32 %v1697
        %v1826 = vcvt.s32.f32 %v1698
        %v1827 = vcvt.s32.f32 %v1699
        %v1828 = vcvt.s32.f32 %v1700
        %v1829 = vcvt.s32.f32 %v1701
        %v1830 = vcvt.s32.f32 %v1702
        %v1831 = vcvt.s32.f32 %v1703
        %v1832 = vcvt.s32.f32 %v1704
        %v1833 = vcvt.s32.f32 %v1705
        %v1834 = vcvt.s32.f32 %v1706
        %v1835 = vcvt.s32.f32 %v1707
        %v1836 = vcvt.s32.f32 %v1708
        %v1837 = vcvt.s32.f32 %v1709
        %v1838 = vcvt.s32.f32 %v1710
        %v1839 = vcvt.s32.f32 %v1711
        %v1840 = vcvt.s32.f32 %v1712
        %v1841 = vcvt.s32.f32 %v1713
        %v1842 = vcvt.s32.f32 %v1714
        %v1843 = vcvt.s32.f32 %v1715
        %v1844 = vcvt.s32.f32 %v1716
        %v1845 = vcvt.s32.f32 %v1717
        %v1846 = vcvt.s32.f32 %v1718
        %v1847 = vcvt.s32.f32 %v1719
        %v1848 = vcvt.s32.f32 %v1720
        %v1849 = vcvt.s32.f32 %v1721
        %v1850 = vcvt.s32.f32 %v1722
        %v1851 = vcvt.s32.f32 %v1723
        %v1852 = vcvt.s32.f32 %v1724
        %v1853 = vcvt.s32.f32 %v1725
        %v1854 = vcvt.s32.f32 %v1726
        %v1855 = vcvt.s32.f32 %v1727
        %v1856 = vcvt.s32.f32 %v1728
        %v1857 = vcvt.s32.f32 %v1729
        %v1858 = vcvt.s32.f32 %v1730
        %v1859 = vcvt.s32.f32 %v1731
        %v1860 = vcvt.s32.f32 %v1732
        %v1861 = vcvt.s32.f32 %v1733
        %v1862 = vcvt.s32.f32 %v1734
        %v1863 = vcvt.s32.f32 %v1735
        %v1864 = vcvt.s32.f32 %v1736
        %v1865 = vcvt.s32.f32 %v1737
        %v1866 = vcvt.s32.f32 %v1738
        %v1867 = vcvt.s32.f32 %v1739
        %v1868 = vcvt.s32.f32 %v1740
        %v1869 = vcvt.s32.f32 %v1741
        %v1870 = vcvt.s32.f32 %v1742
        %v1871 = vcvt.s32.f32 %v1743
        %v1872 = vcvt.s32.f32 %v1744
        %v1873 = vcvt.s32.f32 %v1745
        %v1874 = vcvt.s32.f32 %v1746
        %v1875 = vcvt.s32.f32 %v1747
        %v1876 = vcvt.s32.f32 %v1748
        %v1877 = vcvt.s32.f32 %v1749
        %v1878 = vcvt.s32.f32 %v1750
        %v1879 = vcvt.s32.f32 %v1751
        %v1880 = vcvt.s32.f32 %v1752
        %v1881 = vcvt.s32.f32 %v1753
        %v1882 = vcvt.s32.f32 %v1754
        %v1883 = vcvt.s32.f32 %v1755
        %v1884 = vcvt.s32.f32 %v1756
        %v1885 = vcvt.s32.f32 %v1757
        %v1886 = vcvt.s32.f32 %v1758
        %v1887 = vcvt.s32.f32 %v1759
        %v1888 = vld [vmem:[%s2] sm:$0xff]
        %v1889 = vld [vmem:[%s2 + $0x8] sm:$0xff]
        %1892 = vst [vmem:[#allocation1] ss:$2 sm:$0xff] %v1888
        %s1893 = scalar_lea.vmem [#allocation1], 16
        %1894 = vst [vmem:[%s1893] ss:$2 sm:$0xff] %v1889
        %v1895 = vld.sshfl [vmem:[#allocation1] sm:$0xff pattern:$0x75316420]
        %v1896 = vld.sshfl [vmem:[#allocation1 + $0x8] sm:$0xff pattern:$0x75316420]
        %v1897 = vld.sshfl [vmem:[#allocation1 + $0x10] sm:$0xff pattern:$0x75316420]
        %v1898 = vld.sshfl [vmem:[#allocation1 + $0x18] sm:$0xff pattern:$0x75316420]
        %vm1899 = vcmask 31744
        %v1901 = vsel %vm1899, %v1760, 0
        %v1904 = vsel %vm1899, %v1761, 0
        %v1907 = vsel %vm1899, %v1762, 0
        %v1910 = vsel %vm1899, %v1763, 0
        %v1913 = vsel %vm1899, %v1764, 0
        %v1916 = vsel %vm1899, %v1765, 0
        %v1919 = vsel %vm1899, %v1766, 0
        %v1922 = vsel %vm1899, %v1767, 0
        %v1925 = vsel %vm1899, %v1768, 0
        %v1928 = vsel %vm1899, %v1769, 0
        %v1931 = vsel %vm1899, %v1770, 0
        %v1934 = vsel %vm1899, %v1771, 0
        %v1937 = vsel %vm1899, %v1772, 0
        %v1940 = vsel %vm1899, %v1773, 0
        %v1943 = vsel %vm1899, %v1774, 0
        %v1946 = vsel %vm1899, %v1775, 0
        %v1949 = vsel %vm1899, %v1776, 0
        %v1952 = vsel %vm1899, %v1777, 0
        %v1955 = vsel %vm1899, %v1778, 0
        %v1958 = vsel %vm1899, %v1779, 0
        %v1961 = vsel %vm1899, %v1780, 0
        %v1964 = vsel %vm1899, %v1781, 0
        %v1967 = vsel %vm1899, %v1782, 0
        %v1970 = vsel %vm1899, %v1783, 0
        %v1973 = vsel %vm1899, %v1784, 0
        %v1976 = vsel %vm1899, %v1785, 0
        %v1979 = vsel %vm1899, %v1786, 0
        %v1982 = vsel %vm1899, %v1787, 0
        %v1985 = vsel %vm1899, %v1788, 0
        %v1988 = vsel %vm1899, %v1789, 0
        %v1991 = vsel %vm1899, %v1790, 0
        %v1994 = vsel %vm1899, %v1791, 0
        %v1997 = vsel %vm1899, %v1792, 0
        %v2000 = vsel %vm1899, %v1793, 0
        %v2003 = vsel %vm1899, %v1794, 0
        %v2006 = vsel %vm1899, %v1795, 0
        %v2009 = vsel %vm1899, %v1796, 0
        %v2012 = vsel %vm1899, %v1797, 0
        %v2015 = vsel %vm1899, %v1798, 0
        %v2018 = vsel %vm1899, %v1799, 0
        %v2021 = vsel %vm1899, %v1800, 0
        %v2024 = vsel %vm1899, %v1801, 0
        %v2027 = vsel %vm1899, %v1802, 0
        %v2030 = vsel %vm1899, %v1803, 0
        %v2033 = vsel %vm1899, %v1804, 0
        %v2036 = vsel %vm1899, %v1805, 0
        %v2039 = vsel %vm1899, %v1806, 0
        %v2042 = vsel %vm1899, %v1807, 0
        %v2045 = vsel %vm1899, %v1808, 0
        %v2048 = vsel %vm1899, %v1809, 0
        %v2051 = vsel %vm1899, %v1810, 0
        %v2054 = vsel %vm1899, %v1811, 0
        %v2057 = vsel %vm1899, %v1812, 0
        %v2060 = vsel %vm1899, %v1813, 0
        %v2063 = vsel %vm1899, %v1814, 0
        %v2066 = vsel %vm1899, %v1815, 0
        %v2069 = vsel %vm1899, %v1816, 0
        %v2072 = vsel %vm1899, %v1817, 0
        %v2075 = vsel %vm1899, %v1818, 0
        %v2078 = vsel %vm1899, %v1819, 0
        %v2081 = vsel %vm1899, %v1820, 0
        %v2084 = vsel %vm1899, %v1821, 0
        %v2087 = vsel %vm1899, %v1822, 0
        %v2090 = vsel %vm1899, %v1823, 0
        %v2093 = vsel %vm1899, %v1824, 0
        %v2096 = vsel %vm1899, %v1825, 0
        %v2099 = vsel %vm1899, %v1826, 0
        %v2102 = vsel %vm1899, %v1827, 0
        %v2105 = vsel %vm1899, %v1828, 0
        %v2108 = vsel %vm1899, %v1829, 0
        %v2111 = vsel %vm1899, %v1830, 0
        %v2114 = vsel %vm1899, %v1831, 0
        %v2117 = vsel %vm1899, %v1832, 0
        %v2120 = vsel %vm1899, %v1833, 0
        %v2123 = vsel %vm1899, %v1834, 0
        %v2126 = vsel %vm1899, %v1835, 0
        %v2129 = vsel %vm1899, %v1836, 0
        %v2132 = vsel %vm1899, %v1837, 0
        %v2135 = vsel %vm1899, %v1838, 0
        %v2138 = vsel %vm1899, %v1839, 0
        %v2141 = vsel %vm1899, %v1840, 0
        %v2144 = vsel %vm1899, %v1841, 0
        %v2147 = vsel %vm1899, %v1842, 0
        %v2150 = vsel %vm1899, %v1843, 0
        %v2153 = vsel %vm1899, %v1844, 0
        %v2156 = vsel %vm1899, %v1845, 0
        %v2159 = vsel %vm1899, %v1846, 0
        %v2162 = vsel %vm1899, %v1847, 0
        %v2165 = vsel %vm1899, %v1848, 0
        %v2168 = vsel %vm1899, %v1849, 0
        %v2171 = vsel %vm1899, %v1850, 0
        %v2174 = vsel %vm1899, %v1851, 0
        %v2177 = vsel %vm1899, %v1852, 0
        %v2180 = vsel %vm1899, %v1853, 0
        %v2183 = vsel %vm1899, %v1854, 0
        %v2186 = vsel %vm1899, %v1855, 0
        %v2189 = vsel %vm1899, %v1856, 0
        %v2192 = vsel %vm1899, %v1857, 0
        %v2195 = vsel %vm1899, %v1858, 0
        %v2198 = vsel %vm1899, %v1859, 0
        %v2201 = vsel %vm1899, %v1860, 0
        %v2204 = vsel %vm1899, %v1861, 0
        %v2207 = vsel %vm1899, %v1862, 0
        %v2210 = vsel %vm1899, %v1863, 0
        %v2213 = vsel %vm1899, %v1864, 0
        %v2216 = vsel %vm1899, %v1865, 0
        %v2219 = vsel %vm1899, %v1866, 0
        %v2222 = vsel %vm1899, %v1867, 0
        %v2225 = vsel %vm1899, %v1868, 0
        %v2228 = vsel %vm1899, %v1869, 0
        %v2231 = vsel %vm1899, %v1870, 0
        %v2234 = vsel %vm1899, %v1871, 0
        %v2237 = vsel %vm1899, %v1872, 0
        %v2240 = vsel %vm1899, %v1873, 0
        %v2243 = vsel %vm1899, %v1874, 0
        %v2246 = vsel %vm1899, %v1875, 0
        %v2249 = vsel %vm1899, %v1876, 0
        %v2252 = vsel %vm1899, %v1877, 0
        %v2255 = vsel %vm1899, %v1878, 0
        %v2258 = vsel %vm1899, %v1879, 0
        %v2261 = vsel %vm1899, %v1880, 0
        %v2264 = vsel %vm1899, %v1881, 0
        %v2267 = vsel %vm1899, %v1882, 0
        %v2270 = vsel %vm1899, %v1883, 0
        %v2273 = vsel %vm1899, %v1884, 0
        %v2276 = vsel %vm1899, %v1885, 0
        %v2279 = vsel %vm1899, %v1886, 0
        %v2282 = vsel %vm1899, %v1887, 0
        %vm2284 = vcmask 1043456
        %v2285 = vsel %vm2284, %v1895, 0
        %v2287 = vsel %vm2284, %v1896, 0
        %v2289 = vsel %vm2284, %v1897, 0
        %v2291 = vsel %vm2284, %v1898, 0
        %2293 = vmatpush.msra.mxu0 0.0
        %2294 = vmatpush.msra.mxu0 0.0
        %2295 = vmatpush.msra.mxu0 0.0
        %2296 = vmatpush.msra.mxu0 0.0
        %2297 = vmatpush.msra.mxu0 0.0
        %2298 = vmatpush.msra.mxu0 0.0
        %2299 = vmatpush.msra.mxu0 0.0
        %2300 = vmatpush.msra.mxu0 0.0
        %2301 = vmatpush.msra.mxu0 0.0
        %2302 = vmatpush.msra.mxu0 0.0
        %2303 = vmatpush.msra.mxu0 0.0
        %2304 = vmatpush.msra.mxu0 0.0
        %2305 = vmatpush.msra.mxu0 0.0
        %2306 = vmatpush.msra.mxu0 0.0
        %2307 = vmatpush.msra.mxu0 0.0
        %2308 = vmatpush.msra.mxu0 %v2285
        %2309 = vmatmul.f32.gmra.mxu0 %v1901
        %v2310 = vpop.f32.mrf.mxu0
        %v2311 = vadd.f32 0.0, %v2310
        %2312 = vmatmul.f32.gmra.mxu0 %v1904
        %v2313 = vpop.f32.mrf.mxu0
        %v2314 = vadd.f32 0.0, %v2313
        %2315 = vmatmul.f32.gmra.mxu0 %v1907
        %v2316 = vpop.f32.mrf.mxu0
        %v2317 = vadd.f32 0.0, %v2316
        %2318 = vmatmul.f32.gmra.mxu0 %v1910
        %v2319 = vpop.f32.mrf.mxu0
        %v2320 = vadd.f32 0.0, %v2319
        %2321 = vmatmul.f32.gmra.mxu0 %v1913
        %v2322 = vpop.f32.mrf.mxu0
        %v2323 = vadd.f32 0.0, %v2322
        %2324 = vmatmul.f32.gmra.mxu0 %v1916
        %v2325 = vpop.f32.mrf.mxu0
        %v2326 = vadd.f32 0.0, %v2325
        %2327 = vmatmul.f32.gmra.mxu0 %v1919
        %v2328 = vpop.f32.mrf.mxu0
        %v2329 = vadd.f32 0.0, %v2328
        %2330 = vmatmul.f32.gmra.mxu0 %v1922
        %v2331 = vpop.f32.mrf.mxu0
        %v2332 = vadd.f32 0.0, %v2331
        %2333 = vmatmul.f32.gmra.mxu0 %v1925
        %v2334 = vpop.f32.mrf.mxu0
        %v2335 = vadd.f32 0.0, %v2334
        %2336 = vmatmul.f32.gmra.mxu0 %v1928
        %v2337 = vpop.f32.mrf.mxu0
        %v2338 = vadd.f32 0.0, %v2337
        %2339 = vmatmul.f32.gmra.mxu0 %v1931
        %v2340 = vpop.f32.mrf.mxu0
        %v2341 = vadd.f32 0.0, %v2340
        %2342 = vmatmul.f32.gmra.mxu0 %v1934
        %v2343 = vpop.f32.mrf.mxu0
        %v2344 = vadd.f32 0.0, %v2343
        %2345 = vmatmul.f32.gmra.mxu0 %v1937
        %v2346 = vpop.f32.mrf.mxu0
        %v2347 = vadd.f32 0.0, %v2346
        %2348 = vmatmul.f32.gmra.mxu0 %v1940
        %v2349 = vpop.f32.mrf.mxu0
        %v2350 = vadd.f32 0.0, %v2349
        %2351 = vmatmul.f32.gmra.mxu0 %v1943
        %v2352 = vpop.f32.mrf.mxu0
        %v2353 = vadd.f32 0.0, %v2352
        %2354 = vmatmul.f32.gmra.mxu0 %v1946
        %v2355 = vpop.f32.mrf.mxu0
        %v2356 = vadd.f32 0.0, %v2355
        %2357 = vmatmul.f32.gmra.mxu0 %v1949
        %v2358 = vpop.f32.mrf.mxu0
        %v2359 = vadd.f32 0.0, %v2358
        %2360 = vmatmul.f32.gmra.mxu0 %v1952
        %v2361 = vpop.f32.mrf.mxu0
        %v2362 = vadd.f32 0.0, %v2361
        %2363 = vmatmul.f32.gmra.mxu0 %v1955
        %v2364 = vpop.f32.mrf.mxu0
        %v2365 = vadd.f32 0.0, %v2364
        %2366 = vmatmul.f32.gmra.mxu0 %v1958
        %v2367 = vpop.f32.mrf.mxu0
        %v2368 = vadd.f32 0.0, %v2367
        %2369 = vmatmul.f32.gmra.mxu0 %v1961
        %v2370 = vpop.f32.mrf.mxu0
        %v2371 = vadd.f32 0.0, %v2370
        %2372 = vmatmul.f32.gmra.mxu0 %v1964
        %v2373 = vpop.f32.mrf.mxu0
        %v2374 = vadd.f32 0.0, %v2373
        %2375 = vmatmul.f32.gmra.mxu0 %v1967
        %v2376 = vpop.f32.mrf.mxu0
        %v2377 = vadd.f32 0.0, %v2376
        %2378 = vmatmul.f32.gmra.mxu0 %v1970
        %v2379 = vpop.f32.mrf.mxu0
        %v2380 = vadd.f32 0.0, %v2379
        %2381 = vmatmul.f32.gmra.mxu0 %v1973
        %v2382 = vpop.f32.mrf.mxu0
        %v2383 = vadd.f32 0.0, %v2382
        %2384 = vmatmul.f32.gmra.mxu0 %v1976
        %v2385 = vpop.f32.mrf.mxu0
        %v2386 = vadd.f32 0.0, %v2385
        %2387 = vmatmul.f32.gmra.mxu0 %v1979
        %v2388 = vpop.f32.mrf.mxu0
        %v2389 = vadd.f32 0.0, %v2388
        %2390 = vmatmul.f32.gmra.mxu0 %v1982
        %v2391 = vpop.f32.mrf.mxu0
        %v2392 = vadd.f32 0.0, %v2391
        %2393 = vmatmul.f32.gmra.mxu0 %v1985
        %v2394 = vpop.f32.mrf.mxu0
        %v2395 = vadd.f32 0.0, %v2394
        %2396 = vmatmul.f32.gmra.mxu0 %v1988
        %v2397 = vpop.f32.mrf.mxu0
        %v2398 = vadd.f32 0.0, %v2397
        %2399 = vmatmul.f32.gmra.mxu0 %v1991
        %v2400 = vpop.f32.mrf.mxu0
        %v2401 = vadd.f32 0.0, %v2400
        %2402 = vmatmul.f32.gmra.mxu0 %v1994
        %v2403 = vpop.f32.mrf.mxu0
        %v2404 = vadd.f32 0.0, %v2403
        %2405 = vmatmul.f32.gmra.mxu0 %v1997
        %v2406 = vpop.f32.mrf.mxu0
        %v2407 = vadd.f32 0.0, %v2406
        %2408 = vmatmul.f32.gmra.mxu0 %v2000
        %v2409 = vpop.f32.mrf.mxu0
        %v2410 = vadd.f32 0.0, %v2409
        %2411 = vmatmul.f32.gmra.mxu0 %v2003
        %v2412 = vpop.f32.mrf.mxu0
        %v2413 = vadd.f32 0.0, %v2412
        %2414 = vmatmul.f32.gmra.mxu0 %v2006
        %v2415 = vpop.f32.mrf.mxu0
        %v2416 = vadd.f32 0.0, %v2415
        %2417 = vmatmul.f32.gmra.mxu0 %v2009
        %v2418 = vpop.f32.mrf.mxu0
        %v2419 = vadd.f32 0.0, %v2418
        %2420 = vmatmul.f32.gmra.mxu0 %v2012
        %v2421 = vpop.f32.mrf.mxu0
        %v2422 = vadd.f32 0.0, %v2421
        %2423 = vmatmul.f32.gmra.mxu0 %v2015
        %v2424 = vpop.f32.mrf.mxu0
        %v2425 = vadd.f32 0.0, %v2424
        %2426 = vmatmul.f32.gmra.mxu0 %v2018
        %v2427 = vpop.f32.mrf.mxu0
        %v2428 = vadd.f32 0.0, %v2427
        %2429 = vmatmul.f32.gmra.mxu0 %v2021
        %v2430 = vpop.f32.mrf.mxu0
        %v2431 = vadd.f32 0.0, %v2430
        %2432 = vmatmul.f32.gmra.mxu0 %v2024
        %v2433 = vpop.f32.mrf.mxu0
        %v2434 = vadd.f32 0.0, %v2433
        %2435 = vmatmul.f32.gmra.mxu0 %v2027
        %v2436 = vpop.f32.mrf.mxu0
        %v2437 = vadd.f32 0.0, %v2436
        %2438 = vmatmul.f32.gmra.mxu0 %v2030
        %v2439 = vpop.f32.mrf.mxu0
        %v2440 = vadd.f32 0.0, %v2439
        %2441 = vmatmul.f32.gmra.mxu0 %v2033
        %v2442 = vpop.f32.mrf.mxu0
        %v2443 = vadd.f32 0.0, %v2442
        %2444 = vmatmul.f32.gmra.mxu0 %v2036
        %v2445 = vpop.f32.mrf.mxu0
        %v2446 = vadd.f32 0.0, %v2445
        %2447 = vmatmul.f32.gmra.mxu0 %v2039
        %v2448 = vpop.f32.mrf.mxu0
        %v2449 = vadd.f32 0.0, %v2448
        %2450 = vmatmul.f32.gmra.mxu0 %v2042
        %v2451 = vpop.f32.mrf.mxu0
        %v2452 = vadd.f32 0.0, %v2451
        %2453 = vmatmul.f32.gmra.mxu0 %v2045
        %v2454 = vpop.f32.mrf.mxu0
        %v2455 = vadd.f32 0.0, %v2454
        %2456 = vmatmul.f32.gmra.mxu0 %v2048
        %v2457 = vpop.f32.mrf.mxu0
        %v2458 = vadd.f32 0.0, %v2457
        %2459 = vmatmul.f32.gmra.mxu0 %v2051
        %v2460 = vpop.f32.mrf.mxu0
        %v2461 = vadd.f32 0.0, %v2460
        %2462 = vmatmul.f32.gmra.mxu0 %v2054
        %v2463 = vpop.f32.mrf.mxu0
        %v2464 = vadd.f32 0.0, %v2463
        %2465 = vmatmul.f32.gmra.mxu0 %v2057
        %v2466 = vpop.f32.mrf.mxu0
        %v2467 = vadd.f32 0.0, %v2466
        %2468 = vmatmul.f32.gmra.mxu0 %v2060
        %v2469 = vpop.f32.mrf.mxu0
        %v2470 = vadd.f32 0.0, %v2469
        %2471 = vmatmul.f32.gmra.mxu0 %v2063
        %v2472 = vpop.f32.mrf.mxu0
        %v2473 = vadd.f32 0.0, %v2472
        %2474 = vmatmul.f32.gmra.mxu0 %v2066
        %v2475 = vpop.f32.mrf.mxu0
        %v2476 = vadd.f32 0.0, %v2475
        %2477 = vmatmul.f32.gmra.mxu0 %v2069
        %v2478 = vpop.f32.mrf.mxu0
        %v2479 = vadd.f32 0.0, %v2478
        %2480 = vmatmul.f32.gmra.mxu0 %v2072
        %v2481 = vpop.f32.mrf.mxu0
        %v2482 = vadd.f32 0.0, %v2481
        %2483 = vmatmul.f32.gmra.mxu0 %v2075
        %v2484 = vpop.f32.mrf.mxu0
        %v2485 = vadd.f32 0.0, %v2484
        %2486 = vmatmul.f32.gmra.mxu0 %v2078
        %v2487 = vpop.f32.mrf.mxu0
        %v2488 = vadd.f32 0.0, %v2487
        %2489 = vmatmul.f32.gmra.mxu0 %v2081
        %v2490 = vpop.f32.mrf.mxu0
        %v2491 = vadd.f32 0.0, %v2490
        %2492 = vmatmul.f32.gmra.mxu0 %v2084
        %v2493 = vpop.f32.mrf.mxu0
        %v2494 = vadd.f32 0.0, %v2493
        %2495 = vmatmul.f32.gmra.mxu0 %v2087
        %v2496 = vpop.f32.mrf.mxu0
        %v2497 = vadd.f32 0.0, %v2496
        %2498 = vmatmul.f32.gmra.mxu0 %v2090
        %v2499 = vpop.f32.mrf.mxu0
        %v2500 = vadd.f32 0.0, %v2499
        %2501 = vmatmul.f32.gmra.mxu0 %v2093
        %v2502 = vpop.f32.mrf.mxu0
        %v2503 = vadd.f32 0.0, %v2502
        %2504 = vmatmul.f32.gmra.mxu0 %v2096
        %v2505 = vpop.f32.mrf.mxu0
        %v2506 = vadd.f32 0.0, %v2505
        %2507 = vmatmul.f32.gmra.mxu0 %v2099
        %v2508 = vpop.f32.mrf.mxu0
        %v2509 = vadd.f32 0.0, %v2508
        %2510 = vmatmul.f32.gmra.mxu0 %v2102
        %v2511 = vpop.f32.mrf.mxu0
        %v2512 = vadd.f32 0.0, %v2511
        %2513 = vmatmul.f32.gmra.mxu0 %v2105
        %v2514 = vpop.f32.mrf.mxu0
        %v2515 = vadd.f32 0.0, %v2514
        %2516 = vmatmul.f32.gmra.mxu0 %v2108
        %v2517 = vpop.f32.mrf.mxu0
        %v2518 = vadd.f32 0.0, %v2517
        %2519 = vmatmul.f32.gmra.mxu0 %v2111
        %v2520 = vpop.f32.mrf.mxu0
        %v2521 = vadd.f32 0.0, %v2520
        %2522 = vmatmul.f32.gmra.mxu0 %v2114
        %v2523 = vpop.f32.mrf.mxu0
        %v2524 = vadd.f32 0.0, %v2523
        %2525 = vmatmul.f32.gmra.mxu0 %v2117
        %v2526 = vpop.f32.mrf.mxu0
        %v2527 = vadd.f32 0.0, %v2526
        %2528 = vmatmul.f32.gmra.mxu0 %v2120
        %v2529 = vpop.f32.mrf.mxu0
        %v2530 = vadd.f32 0.0, %v2529
        %2531 = vmatmul.f32.gmra.mxu0 %v2123
        %v2532 = vpop.f32.mrf.mxu0
        %v2533 = vadd.f32 0.0, %v2532
        %2534 = vmatmul.f32.gmra.mxu0 %v2126
        %v2535 = vpop.f32.mrf.mxu0
        %v2536 = vadd.f32 0.0, %v2535
        %2537 = vmatmul.f32.gmra.mxu0 %v2129
        %v2538 = vpop.f32.mrf.mxu0
        %v2539 = vadd.f32 0.0, %v2538
        %2540 = vmatmul.f32.gmra.mxu0 %v2132
        %v2541 = vpop.f32.mrf.mxu0
        %v2542 = vadd.f32 0.0, %v2541
        %2543 = vmatmul.f32.gmra.mxu0 %v2135
        %v2544 = vpop.f32.mrf.mxu0
        %v2545 = vadd.f32 0.0, %v2544
        %2546 = vmatmul.f32.gmra.mxu0 %v2138
        %v2547 = vpop.f32.mrf.mxu0
        %v2548 = vadd.f32 0.0, %v2547
        %2549 = vmatmul.f32.gmra.mxu0 %v2141
        %v2550 = vpop.f32.mrf.mxu0
        %v2551 = vadd.f32 0.0, %v2550
        %2552 = vmatmul.f32.gmra.mxu0 %v2144
        %v2553 = vpop.f32.mrf.mxu0
        %v2554 = vadd.f32 0.0, %v2553
        %2555 = vmatmul.f32.gmra.mxu0 %v2147
        %v2556 = vpop.f32.mrf.mxu0
        %v2557 = vadd.f32 0.0, %v2556
        %2558 = vmatmul.f32.gmra.mxu0 %v2150
        %v2559 = vpop.f32.mrf.mxu0
        %v2560 = vadd.f32 0.0, %v2559
        %2561 = vmatmul.f32.gmra.mxu0 %v2153
        %v2562 = vpop.f32.mrf.mxu0
        %v2563 = vadd.f32 0.0, %v2562
        %2564 = vmatmul.f32.gmra.mxu0 %v2156
        %v2565 = vpop.f32.mrf.mxu0
        %v2566 = vadd.f32 0.0, %v2565
        %2567 = vmatmul.f32.gmra.mxu0 %v2159
        %v2568 = vpop.f32.mrf.mxu0
        %v2569 = vadd.f32 0.0, %v2568
        %2570 = vmatmul.f32.gmra.mxu0 %v2162
        %v2571 = vpop.f32.mrf.mxu0
        %v2572 = vadd.f32 0.0, %v2571
        %2573 = vmatmul.f32.gmra.mxu0 %v2165
        %v2574 = vpop.f32.mrf.mxu0
        %v2575 = vadd.f32 0.0, %v2574
        %2576 = vmatmul.f32.gmra.mxu0 %v2168
        %v2577 = vpop.f32.mrf.mxu0
        %v2578 = vadd.f32 0.0, %v2577
        %2579 = vmatmul.f32.gmra.mxu0 %v2171
        %v2580 = vpop.f32.mrf.mxu0
        %v2581 = vadd.f32 0.0, %v2580
        %2582 = vmatmul.f32.gmra.mxu0 %v2174
        %v2583 = vpop.f32.mrf.mxu0
        %v2584 = vadd.f32 0.0, %v2583
        %2585 = vmatmul.f32.gmra.mxu0 %v2177
        %v2586 = vpop.f32.mrf.mxu0
        %v2587 = vadd.f32 0.0, %v2586
        %2588 = vmatmul.f32.gmra.mxu0 %v2180
        %v2589 = vpop.f32.mrf.mxu0
        %v2590 = vadd.f32 0.0, %v2589
        %2591 = vmatmul.f32.gmra.mxu0 %v2183
        %v2592 = vpop.f32.mrf.mxu0
        %v2593 = vadd.f32 0.0, %v2592
        %2594 = vmatmul.f32.gmra.mxu0 %v2186
        %v2595 = vpop.f32.mrf.mxu0
        %v2596 = vadd.f32 0.0, %v2595
        %2597 = vmatmul.f32.gmra.mxu0 %v2189
        %v2598 = vpop.f32.mrf.mxu0
        %v2599 = vadd.f32 0.0, %v2598
        %2600 = vmatmul.f32.gmra.mxu0 %v2192
        %v2601 = vpop.f32.mrf.mxu0
        %v2602 = vadd.f32 0.0, %v2601
        %2603 = vmatmul.f32.gmra.mxu0 %v2195
        %v2604 = vpop.f32.mrf.mxu0
        %v2605 = vadd.f32 0.0, %v2604
        %2606 = vmatmul.f32.gmra.mxu0 %v2198
        %v2607 = vpop.f32.mrf.mxu0
        %v2608 = vadd.f32 0.0, %v2607
        %2609 = vmatmul.f32.gmra.mxu0 %v2201
        %v2610 = vpop.f32.mrf.mxu0
        %v2611 = vadd.f32 0.0, %v2610
        %2612 = vmatmul.f32.gmra.mxu0 %v2204
        %v2613 = vpop.f32.mrf.mxu0
        %v2614 = vadd.f32 0.0, %v2613
        %2615 = vmatmul.f32.gmra.mxu0 %v2207
        %v2616 = vpop.f32.mrf.mxu0
        %v2617 = vadd.f32 0.0, %v2616
        %2618 = vmatmul.f32.gmra.mxu0 %v2210
        %v2619 = vpop.f32.mrf.mxu0
        %v2620 = vadd.f32 0.0, %v2619
        %2621 = vmatmul.f32.gmra.mxu0 %v2213
        %v2622 = vpop.f32.mrf.mxu0
        %v2623 = vadd.f32 0.0, %v2622
        %2624 = vmatmul.f32.gmra.mxu0 %v2216
        %v2625 = vpop.f32.mrf.mxu0
        %v2626 = vadd.f32 0.0, %v2625
        %2627 = vmatmul.f32.gmra.mxu0 %v2219
        %v2628 = vpop.f32.mrf.mxu0
        %v2629 = vadd.f32 0.0, %v2628
        %2630 = vmatmul.f32.gmra.mxu0 %v2222
        %v2631 = vpop.f32.mrf.mxu0
        %v2632 = vadd.f32 0.0, %v2631
        %2633 = vmatmul.f32.gmra.mxu0 %v2225
        %v2634 = vpop.f32.mrf.mxu0
        %v2635 = vadd.f32 0.0, %v2634
        %2636 = vmatmul.f32.gmra.mxu0 %v2228
        %v2637 = vpop.f32.mrf.mxu0
        %v2638 = vadd.f32 0.0, %v2637
        %2639 = vmatmul.f32.gmra.mxu0 %v2231
        %v2640 = vpop.f32.mrf.mxu0
        %v2641 = vadd.f32 0.0, %v2640
        %2642 = vmatmul.f32.gmra.mxu0 %v2234
        %v2643 = vpop.f32.mrf.mxu0
        %v2644 = vadd.f32 0.0, %v2643
        %2645 = vmatmul.f32.gmra.mxu0 %v2237
        %v2646 = vpop.f32.mrf.mxu0
        %v2647 = vadd.f32 0.0, %v2646
        %2648 = vmatmul.f32.gmra.mxu0 %v2240
        %v2649 = vpop.f32.mrf.mxu0
        %v2650 = vadd.f32 0.0, %v2649
        %2651 = vmatmul.f32.gmra.mxu0 %v2243
        %v2652 = vpop.f32.mrf.mxu0
        %v2653 = vadd.f32 0.0, %v2652
        %2654 = vmatmul.f32.gmra.mxu0 %v2246
        %v2655 = vpop.f32.mrf.mxu0
        %v2656 = vadd.f32 0.0, %v2655
        %2657 = vmatmul.f32.gmra.mxu0 %v2249
        %v2658 = vpop.f32.mrf.mxu0
        %v2659 = vadd.f32 0.0, %v2658
        %2660 = vmatmul.f32.gmra.mxu0 %v2252
        %v2661 = vpop.f32.mrf.mxu0
        %v2662 = vadd.f32 0.0, %v2661
        %2663 = vmatmul.f32.gmra.mxu0 %v2255
        %v2664 = vpop.f32.mrf.mxu0
        %v2665 = vadd.f32 0.0, %v2664
        %2666 = vmatmul.f32.gmra.mxu0 %v2258
        %v2667 = vpop.f32.mrf.mxu0
        %v2668 = vadd.f32 0.0, %v2667
        %2669 = vmatmul.f32.gmra.mxu0 %v2261
        %v2670 = vpop.f32.mrf.mxu0
        %v2671 = vadd.f32 0.0, %v2670
        %2672 = vmatmul.f32.gmra.mxu0 %v2264
        %v2673 = vpop.f32.mrf.mxu0
        %v2674 = vadd.f32 0.0, %v2673
        %2675 = vmatmul.f32.gmra.mxu0 %v2267
        %v2676 = vpop.f32.mrf.mxu0
        %v2677 = vadd.f32 0.0, %v2676
        %2678 = vmatmul.f32.gmra.mxu0 %v2270
        %v2679 = vpop.f32.mrf.mxu0
        %v2680 = vadd.f32 0.0, %v2679
        %2681 = vmatmul.f32.gmra.mxu0 %v2273
        %v2682 = vpop.f32.mrf.mxu0
        %v2683 = vadd.f32 0.0, %v2682
        %2684 = vmatmul.f32.gmra.mxu0 %v2276
        %v2685 = vpop.f32.mrf.mxu0
        %v2686 = vadd.f32 0.0, %v2685
        %2687 = vmatmul.f32.gmra.mxu0 %v2279
        %v2688 = vpop.f32.mrf.mxu0
        %v2689 = vadd.f32 0.0, %v2688
        %2690 = vmatmul.f32.gmra.mxu0 %v2282
        %v2691 = vpop.f32.mrf.mxu0
        %v2692 = vadd.f32 0.0, %v2691
        %2693 = vdwg.mxu0
        %2694 = vmatpush.msra.mxu0 0.0
        %2695 = vmatpush.msra.mxu0 0.0
        %2696 = vmatpush.msra.mxu0 0.0
        %2697 = vmatpush.msra.mxu0 0.0
        %2698 = vmatpush.msra.mxu0 0.0
        %2699 = vmatpush.msra.mxu0 0.0
        %2700 = vmatpush.msra.mxu0 0.0
        %2701 = vmatpush.msra.mxu0 0.0
        %2702 = vmatpush.msra.mxu0 0.0
        %2703 = vmatpush.msra.mxu0 0.0
        %2704 = vmatpush.msra.mxu0 0.0
        %2705 = vmatpush.msra.mxu0 0.0
        %2706 = vmatpush.msra.mxu0 0.0
        %2707 = vmatpush.msra.mxu0 0.0
        %2708 = vmatpush.msra.mxu0 0.0
        %2709 = vmatpush.msra.mxu0 %v2287
        %2710 = vmatmul.f32.gmra.mxu0 %v1901
        %v2711 = vpop.f32.mrf.mxu0
        %v2712 = vadd.f32 0.0, %v2711
        %2713 = vmatmul.f32.gmra.mxu0 %v1904
        %v2714 = vpop.f32.mrf.mxu0
        %v2715 = vadd.f32 0.0, %v2714
        %2716 = vmatmul.f32.gmra.mxu0 %v1907
        %v2717 = vpop.f32.mrf.mxu0
        %v2718 = vadd.f32 0.0, %v2717
        %2719 = vmatmul.f32.gmra.mxu0 %v1910
        %v2720 = vpop.f32.mrf.mxu0
        %v2721 = vadd.f32 0.0, %v2720
        %2722 = vmatmul.f32.gmra.mxu0 %v1913
        %v2723 = vpop.f32.mrf.mxu0
        %v2724 = vadd.f32 0.0, %v2723
        %2725 = vmatmul.f32.gmra.mxu0 %v1916
        %v2726 = vpop.f32.mrf.mxu0
        %v2727 = vadd.f32 0.0, %v2726
        %2728 = vmatmul.f32.gmra.mxu0 %v1919
        %v2729 = vpop.f32.mrf.mxu0
        %v2730 = vadd.f32 0.0, %v2729
        %2731 = vmatmul.f32.gmra.mxu0 %v1922
        %v2732 = vpop.f32.mrf.mxu0
        %v2733 = vadd.f32 0.0, %v2732
        %2734 = vmatmul.f32.gmra.mxu0 %v1925
        %v2735 = vpop.f32.mrf.mxu0
        %v2736 = vadd.f32 0.0, %v2735
        %2737 = vmatmul.f32.gmra.mxu0 %v1928
        %v2738 = vpop.f32.mrf.mxu0
        %v2739 = vadd.f32 0.0, %v2738
        %2740 = vmatmul.f32.gmra.mxu0 %v1931
        %v2741 = vpop.f32.mrf.mxu0
        %v2742 = vadd.f32 0.0, %v2741
        %2743 = vmatmul.f32.gmra.mxu0 %v1934
        %v2744 = vpop.f32.mrf.mxu0
        %v2745 = vadd.f32 0.0, %v2744
        %2746 = vmatmul.f32.gmra.mxu0 %v1937
        %v2747 = vpop.f32.mrf.mxu0
        %v2748 = vadd.f32 0.0, %v2747
        %2749 = vmatmul.f32.gmra.mxu0 %v1940
        %v2750 = vpop.f32.mrf.mxu0
        %v2751 = vadd.f32 0.0, %v2750
        %2752 = vmatmul.f32.gmra.mxu0 %v1943
        %v2753 = vpop.f32.mrf.mxu0
        %v2754 = vadd.f32 0.0, %v2753
        %2755 = vmatmul.f32.gmra.mxu0 %v1946
        %v2756 = vpop.f32.mrf.mxu0
        %v2757 = vadd.f32 0.0, %v2756
        %2758 = vmatmul.f32.gmra.mxu0 %v1949
        %v2759 = vpop.f32.mrf.mxu0
        %v2760 = vadd.f32 0.0, %v2759
        %2761 = vmatmul.f32.gmra.mxu0 %v1952
        %v2762 = vpop.f32.mrf.mxu0
        %v2763 = vadd.f32 0.0, %v2762
        %2764 = vmatmul.f32.gmra.mxu0 %v1955
        %v2765 = vpop.f32.mrf.mxu0
        %v2766 = vadd.f32 0.0, %v2765
        %2767 = vmatmul.f32.gmra.mxu0 %v1958
        %v2768 = vpop.f32.mrf.mxu0
        %v2769 = vadd.f32 0.0, %v2768
        %2770 = vmatmul.f32.gmra.mxu0 %v1961
        %v2771 = vpop.f32.mrf.mxu0
        %v2772 = vadd.f32 0.0, %v2771
        %2773 = vmatmul.f32.gmra.mxu0 %v1964
        %v2774 = vpop.f32.mrf.mxu0
        %v2775 = vadd.f32 0.0, %v2774
        %2776 = vmatmul.f32.gmra.mxu0 %v1967
        %v2777 = vpop.f32.mrf.mxu0
        %v2778 = vadd.f32 0.0, %v2777
        %2779 = vmatmul.f32.gmra.mxu0 %v1970
        %v2780 = vpop.f32.mrf.mxu0
        %v2781 = vadd.f32 0.0, %v2780
        %2782 = vmatmul.f32.gmra.mxu0 %v1973
        %v2783 = vpop.f32.mrf.mxu0
        %v2784 = vadd.f32 0.0, %v2783
        %2785 = vmatmul.f32.gmra.mxu0 %v1976
        %v2786 = vpop.f32.mrf.mxu0
        %v2787 = vadd.f32 0.0, %v2786
        %2788 = vmatmul.f32.gmra.mxu0 %v1979
        %v2789 = vpop.f32.mrf.mxu0
        %v2790 = vadd.f32 0.0, %v2789
        %2791 = vmatmul.f32.gmra.mxu0 %v1982
        %v2792 = vpop.f32.mrf.mxu0
        %v2793 = vadd.f32 0.0, %v2792
        %2794 = vmatmul.f32.gmra.mxu0 %v1985
        %v2795 = vpop.f32.mrf.mxu0
        %v2796 = vadd.f32 0.0, %v2795
        %2797 = vmatmul.f32.gmra.mxu0 %v1988
        %v2798 = vpop.f32.mrf.mxu0
        %v2799 = vadd.f32 0.0, %v2798
        %2800 = vmatmul.f32.gmra.mxu0 %v1991
        %v2801 = vpop.f32.mrf.mxu0
        %v2802 = vadd.f32 0.0, %v2801
        %2803 = vmatmul.f32.gmra.mxu0 %v1994
        %v2804 = vpop.f32.mrf.mxu0
        %v2805 = vadd.f32 0.0, %v2804
        %2806 = vmatmul.f32.gmra.mxu0 %v1997
        %v2807 = vpop.f32.mrf.mxu0
        %v2808 = vadd.f32 0.0, %v2807
        %2809 = vmatmul.f32.gmra.mxu0 %v2000
        %v2810 = vpop.f32.mrf.mxu0
        %v2811 = vadd.f32 0.0, %v2810
        %2812 = vmatmul.f32.gmra.mxu0 %v2003
        %v2813 = vpop.f32.mrf.mxu0
        %v2814 = vadd.f32 0.0, %v2813
        %2815 = vmatmul.f32.gmra.mxu0 %v2006
        %v2816 = vpop.f32.mrf.mxu0
        %v2817 = vadd.f32 0.0, %v2816
        %2818 = vmatmul.f32.gmra.mxu0 %v2009
        %v2819 = vpop.f32.mrf.mxu0
        %v2820 = vadd.f32 0.0, %v2819
        %2821 = vmatmul.f32.gmra.mxu0 %v2012
        %v2822 = vpop.f32.mrf.mxu0
        %v2823 = vadd.f32 0.0, %v2822
        %2824 = vmatmul.f32.gmra.mxu0 %v2015
        %v2825 = vpop.f32.mrf.mxu0
        %v2826 = vadd.f32 0.0, %v2825
        %2827 = vmatmul.f32.gmra.mxu0 %v2018
        %v2828 = vpop.f32.mrf.mxu0
        %v2829 = vadd.f32 0.0, %v2828
        %2830 = vmatmul.f32.gmra.mxu0 %v2021
        %v2831 = vpop.f32.mrf.mxu0
        %v2832 = vadd.f32 0.0, %v2831
        %2833 = vmatmul.f32.gmra.mxu0 %v2024
        %v2834 = vpop.f32.mrf.mxu0
        %v2835 = vadd.f32 0.0, %v2834
        %2836 = vmatmul.f32.gmra.mxu0 %v2027
        %v2837 = vpop.f32.mrf.mxu0
        %v2838 = vadd.f32 0.0, %v2837
        %2839 = vmatmul.f32.gmra.mxu0 %v2030
        %v2840 = vpop.f32.mrf.mxu0
        %v2841 = vadd.f32 0.0, %v2840
        %2842 = vmatmul.f32.gmra.mxu0 %v2033
        %v2843 = vpop.f32.mrf.mxu0
        %v2844 = vadd.f32 0.0, %v2843
        %2845 = vmatmul.f32.gmra.mxu0 %v2036
        %v2846 = vpop.f32.mrf.mxu0
        %v2847 = vadd.f32 0.0, %v2846
        %2848 = vmatmul.f32.gmra.mxu0 %v2039
        %v2849 = vpop.f32.mrf.mxu0
        %v2850 = vadd.f32 0.0, %v2849
        %2851 = vmatmul.f32.gmra.mxu0 %v2042
        %v2852 = vpop.f32.mrf.mxu0
        %v2853 = vadd.f32 0.0, %v2852
        %2854 = vmatmul.f32.gmra.mxu0 %v2045
        %v2855 = vpop.f32.mrf.mxu0
        %v2856 = vadd.f32 0.0, %v2855
        %2857 = vmatmul.f32.gmra.mxu0 %v2048
        %v2858 = vpop.f32.mrf.mxu0
        %v2859 = vadd.f32 0.0, %v2858
        %2860 = vmatmul.f32.gmra.mxu0 %v2051
        %v2861 = vpop.f32.mrf.mxu0
        %v2862 = vadd.f32 0.0, %v2861
        %2863 = vmatmul.f32.gmra.mxu0 %v2054
        %v2864 = vpop.f32.mrf.mxu0
        %v2865 = vadd.f32 0.0, %v2864
        %2866 = vmatmul.f32.gmra.mxu0 %v2057
        %v2867 = vpop.f32.mrf.mxu0
        %v2868 = vadd.f32 0.0, %v2867
        %2869 = vmatmul.f32.gmra.mxu0 %v2060
        %v2870 = vpop.f32.mrf.mxu0
        %v2871 = vadd.f32 0.0, %v2870
        %2872 = vmatmul.f32.gmra.mxu0 %v2063
        %v2873 = vpop.f32.mrf.mxu0
        %v2874 = vadd.f32 0.0, %v2873
        %2875 = vmatmul.f32.gmra.mxu0 %v2066
        %v2876 = vpop.f32.mrf.mxu0
        %v2877 = vadd.f32 0.0, %v2876
        %2878 = vmatmul.f32.gmra.mxu0 %v2069
        %v2879 = vpop.f32.mrf.mxu0
        %v2880 = vadd.f32 0.0, %v2879
        %2881 = vmatmul.f32.gmra.mxu0 %v2072
        %v2882 = vpop.f32.mrf.mxu0
        %v2883 = vadd.f32 0.0, %v2882
        %2884 = vmatmul.f32.gmra.mxu0 %v2075
        %v2885 = vpop.f32.mrf.mxu0
        %v2886 = vadd.f32 0.0, %v2885
        %2887 = vmatmul.f32.gmra.mxu0 %v2078
        %v2888 = vpop.f32.mrf.mxu0
        %v2889 = vadd.f32 0.0, %v2888
        %2890 = vmatmul.f32.gmra.mxu0 %v2081
        %v2891 = vpop.f32.mrf.mxu0
        %v2892 = vadd.f32 0.0, %v2891
        %2893 = vmatmul.f32.gmra.mxu0 %v2084
        %v2894 = vpop.f32.mrf.mxu0
        %v2895 = vadd.f32 0.0, %v2894
        %2896 = vmatmul.f32.gmra.mxu0 %v2087
        %v2897 = vpop.f32.mrf.mxu0
        %v2898 = vadd.f32 0.0, %v2897
        %2899 = vmatmul.f32.gmra.mxu0 %v2090
        %v2900 = vpop.f32.mrf.mxu0
        %v2901 = vadd.f32 0.0, %v2900
        %2902 = vmatmul.f32.gmra.mxu0 %v2093
        %v2903 = vpop.f32.mrf.mxu0
        %v2904 = vadd.f32 0.0, %v2903
        %2905 = vmatmul.f32.gmra.mxu0 %v2096
        %v2906 = vpop.f32.mrf.mxu0
        %v2907 = vadd.f32 0.0, %v2906
        %2908 = vmatmul.f32.gmra.mxu0 %v2099
        %v2909 = vpop.f32.mrf.mxu0
        %v2910 = vadd.f32 0.0, %v2909
        %2911 = vmatmul.f32.gmra.mxu0 %v2102
        %v2912 = vpop.f32.mrf.mxu0
        %v2913 = vadd.f32 0.0, %v2912
        %2914 = vmatmul.f32.gmra.mxu0 %v2105
        %v2915 = vpop.f32.mrf.mxu0
        %v2916 = vadd.f32 0.0, %v2915
        %2917 = vmatmul.f32.gmra.mxu0 %v2108
        %v2918 = vpop.f32.mrf.mxu0
        %v2919 = vadd.f32 0.0, %v2918
        %2920 = vmatmul.f32.gmra.mxu0 %v2111
        %v2921 = vpop.f32.mrf.mxu0
        %v2922 = vadd.f32 0.0, %v2921
        %2923 = vmatmul.f32.gmra.mxu0 %v2114
        %v2924 = vpop.f32.mrf.mxu0
        %v2925 = vadd.f32 0.0, %v2924
        %2926 = vmatmul.f32.gmra.mxu0 %v2117
        %v2927 = vpop.f32.mrf.mxu0
        %v2928 = vadd.f32 0.0, %v2927
        %2929 = vmatmul.f32.gmra.mxu0 %v2120
        %v2930 = vpop.f32.mrf.mxu0
        %v2931 = vadd.f32 0.0, %v2930
        %2932 = vmatmul.f32.gmra.mxu0 %v2123
        %v2933 = vpop.f32.mrf.mxu0
        %v2934 = vadd.f32 0.0, %v2933
        %2935 = vmatmul.f32.gmra.mxu0 %v2126
        %v2936 = vpop.f32.mrf.mxu0
        %v2937 = vadd.f32 0.0, %v2936
        %2938 = vmatmul.f32.gmra.mxu0 %v2129
        %v2939 = vpop.f32.mrf.mxu0
        %v2940 = vadd.f32 0.0, %v2939
        %2941 = vmatmul.f32.gmra.mxu0 %v2132
        %v2942 = vpop.f32.mrf.mxu0
        %v2943 = vadd.f32 0.0, %v2942
        %2944 = vmatmul.f32.gmra.mxu0 %v2135
        %v2945 = vpop.f32.mrf.mxu0
        %v2946 = vadd.f32 0.0, %v2945
        %2947 = vmatmul.f32.gmra.mxu0 %v2138
        %v2948 = vpop.f32.mrf.mxu0
        %v2949 = vadd.f32 0.0, %v2948
        %2950 = vmatmul.f32.gmra.mxu0 %v2141
        %v2951 = vpop.f32.mrf.mxu0
        %v2952 = vadd.f32 0.0, %v2951
        %2953 = vmatmul.f32.gmra.mxu0 %v2144
        %v2954 = vpop.f32.mrf.mxu0
        %v2955 = vadd.f32 0.0, %v2954
        %2956 = vmatmul.f32.gmra.mxu0 %v2147
        %v2957 = vpop.f32.mrf.mxu0
        %v2958 = vadd.f32 0.0, %v2957
        %2959 = vmatmul.f32.gmra.mxu0 %v2150
        %v2960 = vpop.f32.mrf.mxu0
        %v2961 = vadd.f32 0.0, %v2960
        %2962 = vmatmul.f32.gmra.mxu0 %v2153
        %v2963 = vpop.f32.mrf.mxu0
        %v2964 = vadd.f32 0.0, %v2963
        %2965 = vmatmul.f32.gmra.mxu0 %v2156
        %v2966 = vpop.f32.mrf.mxu0
        %v2967 = vadd.f32 0.0, %v2966
        %2968 = vmatmul.f32.gmra.mxu0 %v2159
        %v2969 = vpop.f32.mrf.mxu0
        %v2970 = vadd.f32 0.0, %v2969
        %2971 = vmatmul.f32.gmra.mxu0 %v2162
        %v2972 = vpop.f32.mrf.mxu0
        %v2973 = vadd.f32 0.0, %v2972
        %2974 = vmatmul.f32.gmra.mxu0 %v2165
        %v2975 = vpop.f32.mrf.mxu0
        %v2976 = vadd.f32 0.0, %v2975
        %2977 = vmatmul.f32.gmra.mxu0 %v2168
        %v2978 = vpop.f32.mrf.mxu0
        %v2979 = vadd.f32 0.0, %v2978
        %2980 = vmatmul.f32.gmra.mxu0 %v2171
        %v2981 = vpop.f32.mrf.mxu0
        %v2982 = vadd.f32 0.0, %v2981
        %2983 = vmatmul.f32.gmra.mxu0 %v2174
        %v2984 = vpop.f32.mrf.mxu0
        %v2985 = vadd.f32 0.0, %v2984
        %2986 = vmatmul.f32.gmra.mxu0 %v2177
        %v2987 = vpop.f32.mrf.mxu0
        %v2988 = vadd.f32 0.0, %v2987
        %2989 = vmatmul.f32.gmra.mxu0 %v2180
        %v2990 = vpop.f32.mrf.mxu0
        %v2991 = vadd.f32 0.0, %v2990
        %2992 = vmatmul.f32.gmra.mxu0 %v2183
        %v2993 = vpop.f32.mrf.mxu0
        %v2994 = vadd.f32 0.0, %v2993
        %2995 = vmatmul.f32.gmra.mxu0 %v2186
        %v2996 = vpop.f32.mrf.mxu0
        %v2997 = vadd.f32 0.0, %v2996
        %2998 = vmatmul.f32.gmra.mxu0 %v2189
        %v2999 = vpop.f32.mrf.mxu0
        %v3000 = vadd.f32 0.0, %v2999
        %3001 = vmatmul.f32.gmra.mxu0 %v2192
        %v3002 = vpop.f32.mrf.mxu0
        %v3003 = vadd.f32 0.0, %v3002
        %3004 = vmatmul.f32.gmra.mxu0 %v2195
        %v3005 = vpop.f32.mrf.mxu0
        %v3006 = vadd.f32 0.0, %v3005
        %3007 = vmatmul.f32.gmra.mxu0 %v2198
        %v3008 = vpop.f32.mrf.mxu0
        %v3009 = vadd.f32 0.0, %v3008
        %3010 = vmatmul.f32.gmra.mxu0 %v2201
        %v3011 = vpop.f32.mrf.mxu0
        %v3012 = vadd.f32 0.0, %v3011
        %3013 = vmatmul.f32.gmra.mxu0 %v2204
        %v3014 = vpop.f32.mrf.mxu0
        %v3015 = vadd.f32 0.0, %v3014
        %3016 = vmatmul.f32.gmra.mxu0 %v2207
        %v3017 = vpop.f32.mrf.mxu0
        %v3018 = vadd.f32 0.0, %v3017
        %3019 = vmatmul.f32.gmra.mxu0 %v2210
        %v3020 = vpop.f32.mrf.mxu0
        %v3021 = vadd.f32 0.0, %v3020
        %3022 = vmatmul.f32.gmra.mxu0 %v2213
        %v3023 = vpop.f32.mrf.mxu0
        %v3024 = vadd.f32 0.0, %v3023
        %3025 = vmatmul.f32.gmra.mxu0 %v2216
        %v3026 = vpop.f32.mrf.mxu0
        %v3027 = vadd.f32 0.0, %v3026
        %3028 = vmatmul.f32.gmra.mxu0 %v2219
        %v3029 = vpop.f32.mrf.mxu0
        %v3030 = vadd.f32 0.0, %v3029
        %3031 = vmatmul.f32.gmra.mxu0 %v2222
        %v3032 = vpop.f32.mrf.mxu0
        %v3033 = vadd.f32 0.0, %v3032
        %3034 = vmatmul.f32.gmra.mxu0 %v2225
        %v3035 = vpop.f32.mrf.mxu0
        %v3036 = vadd.f32 0.0, %v3035
        %3037 = vmatmul.f32.gmra.mxu0 %v2228
        %v3038 = vpop.f32.mrf.mxu0
        %v3039 = vadd.f32 0.0, %v3038
        %3040 = vmatmul.f32.gmra.mxu0 %v2231
        %v3041 = vpop.f32.mrf.mxu0
        %v3042 = vadd.f32 0.0, %v3041
        %3043 = vmatmul.f32.gmra.mxu0 %v2234
        %v3044 = vpop.f32.mrf.mxu0
        %v3045 = vadd.f32 0.0, %v3044
        %3046 = vmatmul.f32.gmra.mxu0 %v2237
        %v3047 = vpop.f32.mrf.mxu0
        %v3048 = vadd.f32 0.0, %v3047
        %3049 = vmatmul.f32.gmra.mxu0 %v2240
        %v3050 = vpop.f32.mrf.mxu0
        %v3051 = vadd.f32 0.0, %v3050
        %3052 = vmatmul.f32.gmra.mxu0 %v2243
        %v3053 = vpop.f32.mrf.mxu0
        %v3054 = vadd.f32 0.0, %v3053
        %3055 = vmatmul.f32.gmra.mxu0 %v2246
        %v3056 = vpop.f32.mrf.mxu0
        %v3057 = vadd.f32 0.0, %v3056
        %3058 = vmatmul.f32.gmra.mxu0 %v2249
        %v3059 = vpop.f32.mrf.mxu0
        %v3060 = vadd.f32 0.0, %v3059
        %3061 = vmatmul.f32.gmra.mxu0 %v2252
        %v3062 = vpop.f32.mrf.mxu0
        %v3063 = vadd.f32 0.0, %v3062
        %3064 = vmatmul.f32.gmra.mxu0 %v2255
        %v3065 = vpop.f32.mrf.mxu0
        %v3066 = vadd.f32 0.0, %v3065
        %3067 = vmatmul.f32.gmra.mxu0 %v2258
        %v3068 = vpop.f32.mrf.mxu0
        %v3069 = vadd.f32 0.0, %v3068
        %3070 = vmatmul.f32.gmra.mxu0 %v2261
        %v3071 = vpop.f32.mrf.mxu0
        %v3072 = vadd.f32 0.0, %v3071
        %3073 = vmatmul.f32.gmra.mxu0 %v2264
        %v3074 = vpop.f32.mrf.mxu0
        %v3075 = vadd.f32 0.0, %v3074
        %3076 = vmatmul.f32.gmra.mxu0 %v2267
        %v3077 = vpop.f32.mrf.mxu0
        %v3078 = vadd.f32 0.0, %v3077
        %3079 = vmatmul.f32.gmra.mxu0 %v2270
        %v3080 = vpop.f32.mrf.mxu0
        %v3081 = vadd.f32 0.0, %v3080
        %3082 = vmatmul.f32.gmra.mxu0 %v2273
        %v3083 = vpop.f32.mrf.mxu0
        %v3084 = vadd.f32 0.0, %v3083
        %3085 = vmatmul.f32.gmra.mxu0 %v2276
        %v3086 = vpop.f32.mrf.mxu0
        %v3087 = vadd.f32 0.0, %v3086
        %3088 = vmatmul.f32.gmra.mxu0 %v2279
        %v3089 = vpop.f32.mrf.mxu0
        %v3090 = vadd.f32 0.0, %v3089
        %3091 = vmatmul.f32.gmra.mxu0 %v2282
        %v3092 = vpop.f32.mrf.mxu0
        %v3093 = vadd.f32 0.0, %v3092
        %3094 = vdwg.mxu0
        %3095 = vmatpush.msra.mxu0 0.0
        %3096 = vmatpush.msra.mxu0 0.0
        %3097 = vmatpush.msra.mxu0 0.0
        %3098 = vmatpush.msra.mxu0 0.0
        %3099 = vmatpush.msra.mxu0 0.0
        %3100 = vmatpush.msra.mxu0 0.0
        %3101 = vmatpush.msra.mxu0 0.0
        %3102 = vmatpush.msra.mxu0 0.0
        %3103 = vmatpush.msra.mxu0 0.0
        %3104 = vmatpush.msra.mxu0 0.0
        %3105 = vmatpush.msra.mxu0 0.0
        %3106 = vmatpush.msra.mxu0 0.0
        %3107 = vmatpush.msra.mxu0 0.0
        %3108 = vmatpush.msra.mxu0 0.0
        %3109 = vmatpush.msra.mxu0 0.0
        %3110 = vmatpush.msra.mxu0 %v2289
        %3111 = vmatmul.f32.gmra.mxu0 %v1901
        %v3112 = vpop.f32.mrf.mxu0
        %v3113 = vadd.f32 0.0, %v3112
        %3114 = vmatmul.f32.gmra.mxu0 %v1904
        %v3115 = vpop.f32.mrf.mxu0
        %v3116 = vadd.f32 0.0, %v3115
        %3117 = vmatmul.f32.gmra.mxu0 %v1907
        %v3118 = vpop.f32.mrf.mxu0
        %v3119 = vadd.f32 0.0, %v3118
        %3120 = vmatmul.f32.gmra.mxu0 %v1910
        %v3121 = vpop.f32.mrf.mxu0
        %v3122 = vadd.f32 0.0, %v3121
        %3123 = vmatmul.f32.gmra.mxu0 %v1913
        %v3124 = vpop.f32.mrf.mxu0
        %v3125 = vadd.f32 0.0, %v3124
        %3126 = vmatmul.f32.gmra.mxu0 %v1916
        %v3127 = vpop.f32.mrf.mxu0
        %v3128 = vadd.f32 0.0, %v3127
        %3129 = vmatmul.f32.gmra.mxu0 %v1919
        %v3130 = vpop.f32.mrf.mxu0
        %v3131 = vadd.f32 0.0, %v3130
        %3132 = vmatmul.f32.gmra.mxu0 %v1922
        %v3133 = vpop.f32.mrf.mxu0
        %v3134 = vadd.f32 0.0, %v3133
        %3135 = vmatmul.f32.gmra.mxu0 %v1925
        %v3136 = vpop.f32.mrf.mxu0
        %v3137 = vadd.f32 0.0, %v3136
        %3138 = vmatmul.f32.gmra.mxu0 %v1928
        %v3139 = vpop.f32.mrf.mxu0
        %v3140 = vadd.f32 0.0, %v3139
        %3141 = vmatmul.f32.gmra.mxu0 %v1931
        %v3142 = vpop.f32.mrf.mxu0
        %v3143 = vadd.f32 0.0, %v3142
        %3144 = vmatmul.f32.gmra.mxu0 %v1934
        %v3145 = vpop.f32.mrf.mxu0
        %v3146 = vadd.f32 0.0, %v3145
        %3147 = vmatmul.f32.gmra.mxu0 %v1937
        %v3148 = vpop.f32.mrf.mxu0
        %v3149 = vadd.f32 0.0, %v3148
        %3150 = vmatmul.f32.gmra.mxu0 %v1940
        %v3151 = vpop.f32.mrf.mxu0
        %v3152 = vadd.f32 0.0, %v3151
        %3153 = vmatmul.f32.gmra.mxu0 %v1943
        %v3154 = vpop.f32.mrf.mxu0
        %v3155 = vadd.f32 0.0, %v3154
        %3156 = vmatmul.f32.gmra.mxu0 %v1946
        %v3157 = vpop.f32.mrf.mxu0
        %v3158 = vadd.f32 0.0, %v3157
        %3159 = vmatmul.f32.gmra.mxu0 %v1949
        %v3160 = vpop.f32.mrf.mxu0
        %v3161 = vadd.f32 0.0, %v3160
        %3162 = vmatmul.f32.gmra.mxu0 %v1952
        %v3163 = vpop.f32.mrf.mxu0
        %v3164 = vadd.f32 0.0, %v3163
        %3165 = vmatmul.f32.gmra.mxu0 %v1955
        %v3166 = vpop.f32.mrf.mxu0
        %v3167 = vadd.f32 0.0, %v3166
        %3168 = vmatmul.f32.gmra.mxu0 %v1958
        %v3169 = vpop.f32.mrf.mxu0
        %v3170 = vadd.f32 0.0, %v3169
        %3171 = vmatmul.f32.gmra.mxu0 %v1961
        %v3172 = vpop.f32.mrf.mxu0
        %v3173 = vadd.f32 0.0, %v3172
        %3174 = vmatmul.f32.gmra.mxu0 %v1964
        %v3175 = vpop.f32.mrf.mxu0
        %v3176 = vadd.f32 0.0, %v3175
        %3177 = vmatmul.f32.gmra.mxu0 %v1967
        %v3178 = vpop.f32.mrf.mxu0
        %v3179 = vadd.f32 0.0, %v3178
        %3180 = vmatmul.f32.gmra.mxu0 %v1970
        %v3181 = vpop.f32.mrf.mxu0
        %v3182 = vadd.f32 0.0, %v3181
        %3183 = vmatmul.f32.gmra.mxu0 %v1973
        %v3184 = vpop.f32.mrf.mxu0
        %v3185 = vadd.f32 0.0, %v3184
        %3186 = vmatmul.f32.gmra.mxu0 %v1976
        %v3187 = vpop.f32.mrf.mxu0
        %v3188 = vadd.f32 0.0, %v3187
        %3189 = vmatmul.f32.gmra.mxu0 %v1979
        %v3190 = vpop.f32.mrf.mxu0
        %v3191 = vadd.f32 0.0, %v3190
        %3192 = vmatmul.f32.gmra.mxu0 %v1982
        %v3193 = vpop.f32.mrf.mxu0
        %v3194 = vadd.f32 0.0, %v3193
        %3195 = vmatmul.f32.gmra.mxu0 %v1985
        %v3196 = vpop.f32.mrf.mxu0
        %v3197 = vadd.f32 0.0, %v3196
        %3198 = vmatmul.f32.gmra.mxu0 %v1988
        %v3199 = vpop.f32.mrf.mxu0
        %v3200 = vadd.f32 0.0, %v3199
        %3201 = vmatmul.f32.gmra.mxu0 %v1991
        %v3202 = vpop.f32.mrf.mxu0
        %v3203 = vadd.f32 0.0, %v3202
        %3204 = vmatmul.f32.gmra.mxu0 %v1994
        %v3205 = vpop.f32.mrf.mxu0
        %v3206 = vadd.f32 0.0, %v3205
        %3207 = vmatmul.f32.gmra.mxu0 %v1997
        %v3208 = vpop.f32.mrf.mxu0
        %v3209 = vadd.f32 0.0, %v3208
        %3210 = vmatmul.f32.gmra.mxu0 %v2000
        %v3211 = vpop.f32.mrf.mxu0
        %v3212 = vadd.f32 0.0, %v3211
        %3213 = vmatmul.f32.gmra.mxu0 %v2003
        %v3214 = vpop.f32.mrf.mxu0
        %v3215 = vadd.f32 0.0, %v3214
        %3216 = vmatmul.f32.gmra.mxu0 %v2006
        %v3217 = vpop.f32.mrf.mxu0
        %v3218 = vadd.f32 0.0, %v3217
        %3219 = vmatmul.f32.gmra.mxu0 %v2009
        %v3220 = vpop.f32.mrf.mxu0
        %v3221 = vadd.f32 0.0, %v3220
        %3222 = vmatmul.f32.gmra.mxu0 %v2012
        %v3223 = vpop.f32.mrf.mxu0
        %v3224 = vadd.f32 0.0, %v3223
        %3225 = vmatmul.f32.gmra.mxu0 %v2015
        %v3226 = vpop.f32.mrf.mxu0
        %v3227 = vadd.f32 0.0, %v3226
        %3228 = vmatmul.f32.gmra.mxu0 %v2018
        %v3229 = vpop.f32.mrf.mxu0
        %v3230 = vadd.f32 0.0, %v3229
        %3231 = vmatmul.f32.gmra.mxu0 %v2021
        %v3232 = vpop.f32.mrf.mxu0
        %v3233 = vadd.f32 0.0, %v3232
        %3234 = vmatmul.f32.gmra.mxu0 %v2024
        %v3235 = vpop.f32.mrf.mxu0
        %v3236 = vadd.f32 0.0, %v3235
        %3237 = vmatmul.f32.gmra.mxu0 %v2027
        %v3238 = vpop.f32.mrf.mxu0
        %v3239 = vadd.f32 0.0, %v3238
        %3240 = vmatmul.f32.gmra.mxu0 %v2030
        %v3241 = vpop.f32.mrf.mxu0
        %v3242 = vadd.f32 0.0, %v3241
        %3243 = vmatmul.f32.gmra.mxu0 %v2033
        %v3244 = vpop.f32.mrf.mxu0
        %v3245 = vadd.f32 0.0, %v3244
        %3246 = vmatmul.f32.gmra.mxu0 %v2036
        %v3247 = vpop.f32.mrf.mxu0
        %v3248 = vadd.f32 0.0, %v3247
        %3249 = vmatmul.f32.gmra.mxu0 %v2039
        %v3250 = vpop.f32.mrf.mxu0
        %v3251 = vadd.f32 0.0, %v3250
        %3252 = vmatmul.f32.gmra.mxu0 %v2042
        %v3253 = vpop.f32.mrf.mxu0
        %v3254 = vadd.f32 0.0, %v3253
        %3255 = vmatmul.f32.gmra.mxu0 %v2045
        %v3256 = vpop.f32.mrf.mxu0
        %v3257 = vadd.f32 0.0, %v3256
        %3258 = vmatmul.f32.gmra.mxu0 %v2048
        %v3259 = vpop.f32.mrf.mxu0
        %v3260 = vadd.f32 0.0, %v3259
        %3261 = vmatmul.f32.gmra.mxu0 %v2051
        %v3262 = vpop.f32.mrf.mxu0
        %v3263 = vadd.f32 0.0, %v3262
        %3264 = vmatmul.f32.gmra.mxu0 %v2054
        %v3265 = vpop.f32.mrf.mxu0
        %v3266 = vadd.f32 0.0, %v3265
        %3267 = vmatmul.f32.gmra.mxu0 %v2057
        %v3268 = vpop.f32.mrf.mxu0
        %v3269 = vadd.f32 0.0, %v3268
        %3270 = vmatmul.f32.gmra.mxu0 %v2060
        %v3271 = vpop.f32.mrf.mxu0
        %v3272 = vadd.f32 0.0, %v3271
        %3273 = vmatmul.f32.gmra.mxu0 %v2063
        %v3274 = vpop.f32.mrf.mxu0
        %v3275 = vadd.f32 0.0, %v3274
        %3276 = vmatmul.f32.gmra.mxu0 %v2066
        %v3277 = vpop.f32.mrf.mxu0
        %v3278 = vadd.f32 0.0, %v3277
        %3279 = vmatmul.f32.gmra.mxu0 %v2069
        %v3280 = vpop.f32.mrf.mxu0
        %v3281 = vadd.f32 0.0, %v3280
        %3282 = vmatmul.f32.gmra.mxu0 %v2072
        %v3283 = vpop.f32.mrf.mxu0
        %v3284 = vadd.f32 0.0, %v3283
        %3285 = vmatmul.f32.gmra.mxu0 %v2075
        %v3286 = vpop.f32.mrf.mxu0
        %v3287 = vadd.f32 0.0, %v3286
        %3288 = vmatmul.f32.gmra.mxu0 %v2078
        %v3289 = vpop.f32.mrf.mxu0
        %v3290 = vadd.f32 0.0, %v3289
        %3291 = vmatmul.f32.gmra.mxu0 %v2081
        %v3292 = vpop.f32.mrf.mxu0
        %v3293 = vadd.f32 0.0, %v3292
        %3294 = vmatmul.f32.gmra.mxu0 %v2084
        %v3295 = vpop.f32.mrf.mxu0
        %v3296 = vadd.f32 0.0, %v3295
        %3297 = vmatmul.f32.gmra.mxu0 %v2087
        %v3298 = vpop.f32.mrf.mxu0
        %v3299 = vadd.f32 0.0, %v3298
        %3300 = vmatmul.f32.gmra.mxu0 %v2090
        %v3301 = vpop.f32.mrf.mxu0
        %v3302 = vadd.f32 0.0, %v3301
        %3303 = vmatmul.f32.gmra.mxu0 %v2093
        %v3304 = vpop.f32.mrf.mxu0
        %v3305 = vadd.f32 0.0, %v3304
        %3306 = vmatmul.f32.gmra.mxu0 %v2096
        %v3307 = vpop.f32.mrf.mxu0
        %v3308 = vadd.f32 0.0, %v3307
        %3309 = vmatmul.f32.gmra.mxu0 %v2099
        %v3310 = vpop.f32.mrf.mxu0
        %v3311 = vadd.f32 0.0, %v3310
        %3312 = vmatmul.f32.gmra.mxu0 %v2102
        %v3313 = vpop.f32.mrf.mxu0
        %v3314 = vadd.f32 0.0, %v3313
        %3315 = vmatmul.f32.gmra.mxu0 %v2105
        %v3316 = vpop.f32.mrf.mxu0
        %v3317 = vadd.f32 0.0, %v3316
        %3318 = vmatmul.f32.gmra.mxu0 %v2108
        %v3319 = vpop.f32.mrf.mxu0
        %v3320 = vadd.f32 0.0, %v3319
        %3321 = vmatmul.f32.gmra.mxu0 %v2111
        %v3322 = vpop.f32.mrf.mxu0
        %v3323 = vadd.f32 0.0, %v3322
        %3324 = vmatmul.f32.gmra.mxu0 %v2114
        %v3325 = vpop.f32.mrf.mxu0
        %v3326 = vadd.f32 0.0, %v3325
        %3327 = vmatmul.f32.gmra.mxu0 %v2117
        %v3328 = vpop.f32.mrf.mxu0
        %v3329 = vadd.f32 0.0, %v3328
        %3330 = vmatmul.f32.gmra.mxu0 %v2120
        %v3331 = vpop.f32.mrf.mxu0
        %v3332 = vadd.f32 0.0, %v3331
        %3333 = vmatmul.f32.gmra.mxu0 %v2123
        %v3334 = vpop.f32.mrf.mxu0
        %v3335 = vadd.f32 0.0, %v3334
        %3336 = vmatmul.f32.gmra.mxu0 %v2126
        %v3337 = vpop.f32.mrf.mxu0
        %v3338 = vadd.f32 0.0, %v3337
        %3339 = vmatmul.f32.gmra.mxu0 %v2129
        %v3340 = vpop.f32.mrf.mxu0
        %v3341 = vadd.f32 0.0, %v3340
        %3342 = vmatmul.f32.gmra.mxu0 %v2132
        %v3343 = vpop.f32.mrf.mxu0
        %v3344 = vadd.f32 0.0, %v3343
        %3345 = vmatmul.f32.gmra.mxu0 %v2135
        %v3346 = vpop.f32.mrf.mxu0
        %v3347 = vadd.f32 0.0, %v3346
        %3348 = vmatmul.f32.gmra.mxu0 %v2138
        %v3349 = vpop.f32.mrf.mxu0
        %v3350 = vadd.f32 0.0, %v3349
        %3351 = vmatmul.f32.gmra.mxu0 %v2141
        %v3352 = vpop.f32.mrf.mxu0
        %v3353 = vadd.f32 0.0, %v3352
        %3354 = vmatmul.f32.gmra.mxu0 %v2144
        %v3355 = vpop.f32.mrf.mxu0
        %v3356 = vadd.f32 0.0, %v3355
        %3357 = vmatmul.f32.gmra.mxu0 %v2147
        %v3358 = vpop.f32.mrf.mxu0
        %v3359 = vadd.f32 0.0, %v3358
        %3360 = vmatmul.f32.gmra.mxu0 %v2150
        %v3361 = vpop.f32.mrf.mxu0
        %v3362 = vadd.f32 0.0, %v3361
        %3363 = vmatmul.f32.gmra.mxu0 %v2153
        %v3364 = vpop.f32.mrf.mxu0
        %v3365 = vadd.f32 0.0, %v3364
        %3366 = vmatmul.f32.gmra.mxu0 %v2156
        %v3367 = vpop.f32.mrf.mxu0
        %v3368 = vadd.f32 0.0, %v3367
        %3369 = vmatmul.f32.gmra.mxu0 %v2159
        %v3370 = vpop.f32.mrf.mxu0
        %v3371 = vadd.f32 0.0, %v3370
        %3372 = vmatmul.f32.gmra.mxu0 %v2162
        %v3373 = vpop.f32.mrf.mxu0
        %v3374 = vadd.f32 0.0, %v3373
        %3375 = vmatmul.f32.gmra.mxu0 %v2165
        %v3376 = vpop.f32.mrf.mxu0
        %v3377 = vadd.f32 0.0, %v3376
        %3378 = vmatmul.f32.gmra.mxu0 %v2168
        %v3379 = vpop.f32.mrf.mxu0
        %v3380 = vadd.f32 0.0, %v3379
        %3381 = vmatmul.f32.gmra.mxu0 %v2171
        %v3382 = vpop.f32.mrf.mxu0
        %v3383 = vadd.f32 0.0, %v3382
        %3384 = vmatmul.f32.gmra.mxu0 %v2174
        %v3385 = vpop.f32.mrf.mxu0
        %v3386 = vadd.f32 0.0, %v3385
        %3387 = vmatmul.f32.gmra.mxu0 %v2177
        %v3388 = vpop.f32.mrf.mxu0
        %v3389 = vadd.f32 0.0, %v3388
        %3390 = vmatmul.f32.gmra.mxu0 %v2180
        %v3391 = vpop.f32.mrf.mxu0
        %v3392 = vadd.f32 0.0, %v3391
        %3393 = vmatmul.f32.gmra.mxu0 %v2183
        %v3394 = vpop.f32.mrf.mxu0
        %v3395 = vadd.f32 0.0, %v3394
        %3396 = vmatmul.f32.gmra.mxu0 %v2186
        %v3397 = vpop.f32.mrf.mxu0
        %v3398 = vadd.f32 0.0, %v3397
        %3399 = vmatmul.f32.gmra.mxu0 %v2189
        %v3400 = vpop.f32.mrf.mxu0
        %v3401 = vadd.f32 0.0, %v3400
        %3402 = vmatmul.f32.gmra.mxu0 %v2192
        %v3403 = vpop.f32.mrf.mxu0
        %v3404 = vadd.f32 0.0, %v3403
        %3405 = vmatmul.f32.gmra.mxu0 %v2195
        %v3406 = vpop.f32.mrf.mxu0
        %v3407 = vadd.f32 0.0, %v3406
        %3408 = vmatmul.f32.gmra.mxu0 %v2198
        %v3409 = vpop.f32.mrf.mxu0
        %v3410 = vadd.f32 0.0, %v3409
        %3411 = vmatmul.f32.gmra.mxu0 %v2201
        %v3412 = vpop.f32.mrf.mxu0
        %v3413 = vadd.f32 0.0, %v3412
        %3414 = vmatmul.f32.gmra.mxu0 %v2204
        %v3415 = vpop.f32.mrf.mxu0
        %v3416 = vadd.f32 0.0, %v3415
        %3417 = vmatmul.f32.gmra.mxu0 %v2207
        %v3418 = vpop.f32.mrf.mxu0
        %v3419 = vadd.f32 0.0, %v3418
        %3420 = vmatmul.f32.gmra.mxu0 %v2210
        %v3421 = vpop.f32.mrf.mxu0
        %v3422 = vadd.f32 0.0, %v3421
        %3423 = vmatmul.f32.gmra.mxu0 %v2213
        %v3424 = vpop.f32.mrf.mxu0
        %v3425 = vadd.f32 0.0, %v3424
        %3426 = vmatmul.f32.gmra.mxu0 %v2216
        %v3427 = vpop.f32.mrf.mxu0
        %v3428 = vadd.f32 0.0, %v3427
        %3429 = vmatmul.f32.gmra.mxu0 %v2219
        %v3430 = vpop.f32.mrf.mxu0
        %v3431 = vadd.f32 0.0, %v3430
        %3432 = vmatmul.f32.gmra.mxu0 %v2222
        %v3433 = vpop.f32.mrf.mxu0
        %v3434 = vadd.f32 0.0, %v3433
        %3435 = vmatmul.f32.gmra.mxu0 %v2225
        %v3436 = vpop.f32.mrf.mxu0
        %v3437 = vadd.f32 0.0, %v3436
        %3438 = vmatmul.f32.gmra.mxu0 %v2228
        %v3439 = vpop.f32.mrf.mxu0
        %v3440 = vadd.f32 0.0, %v3439
        %3441 = vmatmul.f32.gmra.mxu0 %v2231
        %v3442 = vpop.f32.mrf.mxu0
        %v3443 = vadd.f32 0.0, %v3442
        %3444 = vmatmul.f32.gmra.mxu0 %v2234
        %v3445 = vpop.f32.mrf.mxu0
        %v3446 = vadd.f32 0.0, %v3445
        %3447 = vmatmul.f32.gmra.mxu0 %v2237
        %v3448 = vpop.f32.mrf.mxu0
        %v3449 = vadd.f32 0.0, %v3448
        %3450 = vmatmul.f32.gmra.mxu0 %v2240
        %v3451 = vpop.f32.mrf.mxu0
        %v3452 = vadd.f32 0.0, %v3451
        %3453 = vmatmul.f32.gmra.mxu0 %v2243
        %v3454 = vpop.f32.mrf.mxu0
        %v3455 = vadd.f32 0.0, %v3454
        %3456 = vmatmul.f32.gmra.mxu0 %v2246
        %v3457 = vpop.f32.mrf.mxu0
        %v3458 = vadd.f32 0.0, %v3457
        %3459 = vmatmul.f32.gmra.mxu0 %v2249
        %v3460 = vpop.f32.mrf.mxu0
        %v3461 = vadd.f32 0.0, %v3460
        %3462 = vmatmul.f32.gmra.mxu0 %v2252
        %v3463 = vpop.f32.mrf.mxu0
        %v3464 = vadd.f32 0.0, %v3463
        %3465 = vmatmul.f32.gmra.mxu0 %v2255
        %v3466 = vpop.f32.mrf.mxu0
        %v3467 = vadd.f32 0.0, %v3466
        %3468 = vmatmul.f32.gmra.mxu0 %v2258
        %v3469 = vpop.f32.mrf.mxu0
        %v3470 = vadd.f32 0.0, %v3469
        %3471 = vmatmul.f32.gmra.mxu0 %v2261
        %v3472 = vpop.f32.mrf.mxu0
        %v3473 = vadd.f32 0.0, %v3472
        %3474 = vmatmul.f32.gmra.mxu0 %v2264
        %v3475 = vpop.f32.mrf.mxu0
        %v3476 = vadd.f32 0.0, %v3475
        %3477 = vmatmul.f32.gmra.mxu0 %v2267
        %v3478 = vpop.f32.mrf.mxu0
        %v3479 = vadd.f32 0.0, %v3478
        %3480 = vmatmul.f32.gmra.mxu0 %v2270
        %v3481 = vpop.f32.mrf.mxu0
        %v3482 = vadd.f32 0.0, %v3481
        %3483 = vmatmul.f32.gmra.mxu0 %v2273
        %v3484 = vpop.f32.mrf.mxu0
        %v3485 = vadd.f32 0.0, %v3484
        %3486 = vmatmul.f32.gmra.mxu0 %v2276
        %v3487 = vpop.f32.mrf.mxu0
        %v3488 = vadd.f32 0.0, %v3487
        %3489 = vmatmul.f32.gmra.mxu0 %v2279
        %v3490 = vpop.f32.mrf.mxu0
        %v3491 = vadd.f32 0.0, %v3490
        %3492 = vmatmul.f32.gmra.mxu0 %v2282
        %v3493 = vpop.f32.mrf.mxu0
        %v3494 = vadd.f32 0.0, %v3493
        %3495 = vdwg.mxu0
        %3496 = vmatpush.msra.mxu0 0.0
        %3497 = vmatpush.msra.mxu0 0.0
        %3498 = vmatpush.msra.mxu0 0.0
        %3499 = vmatpush.msra.mxu0 0.0
        %3500 = vmatpush.msra.mxu0 0.0
        %3501 = vmatpush.msra.mxu0 0.0
        %3502 = vmatpush.msra.mxu0 0.0
        %3503 = vmatpush.msra.mxu0 0.0
        %3504 = vmatpush.msra.mxu0 0.0
        %3505 = vmatpush.msra.mxu0 0.0
        %3506 = vmatpush.msra.mxu0 0.0
        %3507 = vmatpush.msra.mxu0 0.0
        %3508 = vmatpush.msra.mxu0 0.0
        %3509 = vmatpush.msra.mxu0 0.0
        %3510 = vmatpush.msra.mxu0 0.0
        %3511 = vmatpush.msra.mxu0 %v2291
        %3512 = vmatmul.f32.gmra.mxu0 %v1901
        %v3513 = vpop.f32.mrf.mxu0
        %v3514 = vadd.f32 0.0, %v3513
        %3515 = vmatmul.f32.gmra.mxu0 %v1904
        %v3516 = vpop.f32.mrf.mxu0
        %v3517 = vadd.f32 0.0, %v3516
        %3518 = vmatmul.f32.gmra.mxu0 %v1907
        %v3519 = vpop.f32.mrf.mxu0
        %v3520 = vadd.f32 0.0, %v3519
        %3521 = vmatmul.f32.gmra.mxu0 %v1910
        %v3522 = vpop.f32.mrf.mxu0
        %v3523 = vadd.f32 0.0, %v3522
        %3524 = vmatmul.f32.gmra.mxu0 %v1913
        %v3525 = vpop.f32.mrf.mxu0
        %v3526 = vadd.f32 0.0, %v3525
        %3527 = vmatmul.f32.gmra.mxu0 %v1916
        %v3528 = vpop.f32.mrf.mxu0
        %v3529 = vadd.f32 0.0, %v3528
        %3530 = vmatmul.f32.gmra.mxu0 %v1919
        %v3531 = vpop.f32.mrf.mxu0
        %v3532 = vadd.f32 0.0, %v3531
        %3533 = vmatmul.f32.gmra.mxu0 %v1922
        %v3534 = vpop.f32.mrf.mxu0
        %v3535 = vadd.f32 0.0, %v3534
        %3536 = vmatmul.f32.gmra.mxu0 %v1925
        %v3537 = vpop.f32.mrf.mxu0
        %v3538 = vadd.f32 0.0, %v3537
        %3539 = vmatmul.f32.gmra.mxu0 %v1928
        %v3540 = vpop.f32.mrf.mxu0
        %v3541 = vadd.f32 0.0, %v3540
        %3542 = vmatmul.f32.gmra.mxu0 %v1931
        %v3543 = vpop.f32.mrf.mxu0
        %v3544 = vadd.f32 0.0, %v3543
        %3545 = vmatmul.f32.gmra.mxu0 %v1934
        %v3546 = vpop.f32.mrf.mxu0
        %v3547 = vadd.f32 0.0, %v3546
        %3548 = vmatmul.f32.gmra.mxu0 %v1937
        %v3549 = vpop.f32.mrf.mxu0
        %v3550 = vadd.f32 0.0, %v3549
        %3551 = vmatmul.f32.gmra.mxu0 %v1940
        %v3552 = vpop.f32.mrf.mxu0
        %v3553 = vadd.f32 0.0, %v3552
        %3554 = vmatmul.f32.gmra.mxu0 %v1943
        %v3555 = vpop.f32.mrf.mxu0
        %v3556 = vadd.f32 0.0, %v3555
        %3557 = vmatmul.f32.gmra.mxu0 %v1946
        %v3558 = vpop.f32.mrf.mxu0
        %v3559 = vadd.f32 0.0, %v3558
        %3560 = vmatmul.f32.gmra.mxu0 %v1949
        %v3561 = vpop.f32.mrf.mxu0
        %v3562 = vadd.f32 0.0, %v3561
        %3563 = vmatmul.f32.gmra.mxu0 %v1952
        %v3564 = vpop.f32.mrf.mxu0
        %v3565 = vadd.f32 0.0, %v3564
        %3566 = vmatmul.f32.gmra.mxu0 %v1955
        %v3567 = vpop.f32.mrf.mxu0
        %v3568 = vadd.f32 0.0, %v3567
        %3569 = vmatmul.f32.gmra.mxu0 %v1958
        %v3570 = vpop.f32.mrf.mxu0
        %v3571 = vadd.f32 0.0, %v3570
        %3572 = vmatmul.f32.gmra.mxu0 %v1961
        %v3573 = vpop.f32.mrf.mxu0
        %v3574 = vadd.f32 0.0, %v3573
        %3575 = vmatmul.f32.gmra.mxu0 %v1964
        %v3576 = vpop.f32.mrf.mxu0
        %v3577 = vadd.f32 0.0, %v3576
        %3578 = vmatmul.f32.gmra.mxu0 %v1967
        %v3579 = vpop.f32.mrf.mxu0
        %v3580 = vadd.f32 0.0, %v3579
        %3581 = vmatmul.f32.gmra.mxu0 %v1970
        %v3582 = vpop.f32.mrf.mxu0
        %v3583 = vadd.f32 0.0, %v3582
        %3584 = vmatmul.f32.gmra.mxu0 %v1973
        %v3585 = vpop.f32.mrf.mxu0
        %v3586 = vadd.f32 0.0, %v3585
        %3587 = vmatmul.f32.gmra.mxu0 %v1976
        %v3588 = vpop.f32.mrf.mxu0
        %v3589 = vadd.f32 0.0, %v3588
        %3590 = vmatmul.f32.gmra.mxu0 %v1979
        %v3591 = vpop.f32.mrf.mxu0
        %v3592 = vadd.f32 0.0, %v3591
        %3593 = vmatmul.f32.gmra.mxu0 %v1982
        %v3594 = vpop.f32.mrf.mxu0
        %v3595 = vadd.f32 0.0, %v3594
        %3596 = vmatmul.f32.gmra.mxu0 %v1985
        %v3597 = vpop.f32.mrf.mxu0
        %v3598 = vadd.f32 0.0, %v3597
        %3599 = vmatmul.f32.gmra.mxu0 %v1988
        %v3600 = vpop.f32.mrf.mxu0
        %v3601 = vadd.f32 0.0, %v3600
        %3602 = vmatmul.f32.gmra.mxu0 %v1991
        %v3603 = vpop.f32.mrf.mxu0
        %v3604 = vadd.f32 0.0, %v3603
        %3605 = vmatmul.f32.gmra.mxu0 %v1994
        %v3606 = vpop.f32.mrf.mxu0
        %v3607 = vadd.f32 0.0, %v3606
        %3608 = vmatmul.f32.gmra.mxu0 %v1997
        %v3609 = vpop.f32.mrf.mxu0
        %v3610 = vadd.f32 0.0, %v3609
        %3611 = vmatmul.f32.gmra.mxu0 %v2000
        %v3612 = vpop.f32.mrf.mxu0
        %v3613 = vadd.f32 0.0, %v3612
        %3614 = vmatmul.f32.gmra.mxu0 %v2003
        %v3615 = vpop.f32.mrf.mxu0
        %v3616 = vadd.f32 0.0, %v3615
        %3617 = vmatmul.f32.gmra.mxu0 %v2006
        %v3618 = vpop.f32.mrf.mxu0
        %v3619 = vadd.f32 0.0, %v3618
        %3620 = vmatmul.f32.gmra.mxu0 %v2009
        %v3621 = vpop.f32.mrf.mxu0
        %v3622 = vadd.f32 0.0, %v3621
        %3623 = vmatmul.f32.gmra.mxu0 %v2012
        %v3624 = vpop.f32.mrf.mxu0
        %v3625 = vadd.f32 0.0, %v3624
        %3626 = vmatmul.f32.gmra.mxu0 %v2015
        %v3627 = vpop.f32.mrf.mxu0
        %v3628 = vadd.f32 0.0, %v3627
        %3629 = vmatmul.f32.gmra.mxu0 %v2018
        %v3630 = vpop.f32.mrf.mxu0
        %v3631 = vadd.f32 0.0, %v3630
        %3632 = vmatmul.f32.gmra.mxu0 %v2021
        %v3633 = vpop.f32.mrf.mxu0
        %v3634 = vadd.f32 0.0, %v3633
        %3635 = vmatmul.f32.gmra.mxu0 %v2024
        %v3636 = vpop.f32.mrf.mxu0
        %v3637 = vadd.f32 0.0, %v3636
        %3638 = vmatmul.f32.gmra.mxu0 %v2027
        %v3639 = vpop.f32.mrf.mxu0
        %v3640 = vadd.f32 0.0, %v3639
        %3641 = vmatmul.f32.gmra.mxu0 %v2030
        %v3642 = vpop.f32.mrf.mxu0
        %v3643 = vadd.f32 0.0, %v3642
        %3644 = vmatmul.f32.gmra.mxu0 %v2033
        %v3645 = vpop.f32.mrf.mxu0
        %v3646 = vadd.f32 0.0, %v3645
        %3647 = vmatmul.f32.gmra.mxu0 %v2036
        %v3648 = vpop.f32.mrf.mxu0
        %v3649 = vadd.f32 0.0, %v3648
        %3650 = vmatmul.f32.gmra.mxu0 %v2039
        %v3651 = vpop.f32.mrf.mxu0
        %v3652 = vadd.f32 0.0, %v3651
        %3653 = vmatmul.f32.gmra.mxu0 %v2042
        %v3654 = vpop.f32.mrf.mxu0
        %v3655 = vadd.f32 0.0, %v3654
        %3656 = vmatmul.f32.gmra.mxu0 %v2045
        %v3657 = vpop.f32.mrf.mxu0
        %v3658 = vadd.f32 0.0, %v3657
        %3659 = vmatmul.f32.gmra.mxu0 %v2048
        %v3660 = vpop.f32.mrf.mxu0
        %v3661 = vadd.f32 0.0, %v3660
        %3662 = vmatmul.f32.gmra.mxu0 %v2051
        %v3663 = vpop.f32.mrf.mxu0
        %v3664 = vadd.f32 0.0, %v3663
        %3665 = vmatmul.f32.gmra.mxu0 %v2054
        %v3666 = vpop.f32.mrf.mxu0
        %v3667 = vadd.f32 0.0, %v3666
        %3668 = vmatmul.f32.gmra.mxu0 %v2057
        %v3669 = vpop.f32.mrf.mxu0
        %v3670 = vadd.f32 0.0, %v3669
        %3671 = vmatmul.f32.gmra.mxu0 %v2060
        %v3672 = vpop.f32.mrf.mxu0
        %v3673 = vadd.f32 0.0, %v3672
        %3674 = vmatmul.f32.gmra.mxu0 %v2063
        %v3675 = vpop.f32.mrf.mxu0
        %v3676 = vadd.f32 0.0, %v3675
        %3677 = vmatmul.f32.gmra.mxu0 %v2066
        %v3678 = vpop.f32.mrf.mxu0
        %v3679 = vadd.f32 0.0, %v3678
        %3680 = vmatmul.f32.gmra.mxu0 %v2069
        %v3681 = vpop.f32.mrf.mxu0
        %v3682 = vadd.f32 0.0, %v3681
        %3683 = vmatmul.f32.gmra.mxu0 %v2072
        %v3684 = vpop.f32.mrf.mxu0
        %v3685 = vadd.f32 0.0, %v3684
        %3686 = vmatmul.f32.gmra.mxu0 %v2075
        %v3687 = vpop.f32.mrf.mxu0
        %v3688 = vadd.f32 0.0, %v3687
        %3689 = vmatmul.f32.gmra.mxu0 %v2078
        %v3690 = vpop.f32.mrf.mxu0
        %v3691 = vadd.f32 0.0, %v3690
        %3692 = vmatmul.f32.gmra.mxu0 %v2081
        %v3693 = vpop.f32.mrf.mxu0
        %v3694 = vadd.f32 0.0, %v3693
        %3695 = vmatmul.f32.gmra.mxu0 %v2084
        %v3696 = vpop.f32.mrf.mxu0
        %v3697 = vadd.f32 0.0, %v3696
        %3698 = vmatmul.f32.gmra.mxu0 %v2087
        %v3699 = vpop.f32.mrf.mxu0
        %v3700 = vadd.f32 0.0, %v3699
        %3701 = vmatmul.f32.gmra.mxu0 %v2090
        %v3702 = vpop.f32.mrf.mxu0
        %v3703 = vadd.f32 0.0, %v3702
        %3704 = vmatmul.f32.gmra.mxu0 %v2093
        %v3705 = vpop.f32.mrf.mxu0
        %v3706 = vadd.f32 0.0, %v3705
        %3707 = vmatmul.f32.gmra.mxu0 %v2096
        %v3708 = vpop.f32.mrf.mxu0
        %v3709 = vadd.f32 0.0, %v3708
        %3710 = vmatmul.f32.gmra.mxu0 %v2099
        %v3711 = vpop.f32.mrf.mxu0
        %v3712 = vadd.f32 0.0, %v3711
        %3713 = vmatmul.f32.gmra.mxu0 %v2102
        %v3714 = vpop.f32.mrf.mxu0
        %v3715 = vadd.f32 0.0, %v3714
        %3716 = vmatmul.f32.gmra.mxu0 %v2105
        %v3717 = vpop.f32.mrf.mxu0
        %v3718 = vadd.f32 0.0, %v3717
        %3719 = vmatmul.f32.gmra.mxu0 %v2108
        %v3720 = vpop.f32.mrf.mxu0
        %v3721 = vadd.f32 0.0, %v3720
        %3722 = vmatmul.f32.gmra.mxu0 %v2111
        %v3723 = vpop.f32.mrf.mxu0
        %v3724 = vadd.f32 0.0, %v3723
        %3725 = vmatmul.f32.gmra.mxu0 %v2114
        %v3726 = vpop.f32.mrf.mxu0
        %v3727 = vadd.f32 0.0, %v3726
        %3728 = vmatmul.f32.gmra.mxu0 %v2117
        %v3729 = vpop.f32.mrf.mxu0
        %v3730 = vadd.f32 0.0, %v3729
        %3731 = vmatmul.f32.gmra.mxu0 %v2120
        %v3732 = vpop.f32.mrf.mxu0
        %v3733 = vadd.f32 0.0, %v3732
        %3734 = vmatmul.f32.gmra.mxu0 %v2123
        %v3735 = vpop.f32.mrf.mxu0
        %v3736 = vadd.f32 0.0, %v3735
        %3737 = vmatmul.f32.gmra.mxu0 %v2126
        %v3738 = vpop.f32.mrf.mxu0
        %v3739 = vadd.f32 0.0, %v3738
        %3740 = vmatmul.f32.gmra.mxu0 %v2129
        %v3741 = vpop.f32.mrf.mxu0
        %v3742 = vadd.f32 0.0, %v3741
        %3743 = vmatmul.f32.gmra.mxu0 %v2132
        %v3744 = vpop.f32.mrf.mxu0
        %v3745 = vadd.f32 0.0, %v3744
        %3746 = vmatmul.f32.gmra.mxu0 %v2135
        %v3747 = vpop.f32.mrf.mxu0
        %v3748 = vadd.f32 0.0, %v3747
        %3749 = vmatmul.f32.gmra.mxu0 %v2138
        %v3750 = vpop.f32.mrf.mxu0
        %v3751 = vadd.f32 0.0, %v3750
        %3752 = vmatmul.f32.gmra.mxu0 %v2141
        %v3753 = vpop.f32.mrf.mxu0
        %v3754 = vadd.f32 0.0, %v3753
        %3755 = vmatmul.f32.gmra.mxu0 %v2144
        %v3756 = vpop.f32.mrf.mxu0
        %v3757 = vadd.f32 0.0, %v3756
        %3758 = vmatmul.f32.gmra.mxu0 %v2147
        %v3759 = vpop.f32.mrf.mxu0
        %v3760 = vadd.f32 0.0, %v3759
        %3761 = vmatmul.f32.gmra.mxu0 %v2150
        %v3762 = vpop.f32.mrf.mxu0
        %v3763 = vadd.f32 0.0, %v3762
        %3764 = vmatmul.f32.gmra.mxu0 %v2153
        %v3765 = vpop.f32.mrf.mxu0
        %v3766 = vadd.f32 0.0, %v3765
        %3767 = vmatmul.f32.gmra.mxu0 %v2156
        %v3768 = vpop.f32.mrf.mxu0
        %v3769 = vadd.f32 0.0, %v3768
        %3770 = vmatmul.f32.gmra.mxu0 %v2159
        %v3771 = vpop.f32.mrf.mxu0
        %v3772 = vadd.f32 0.0, %v3771
        %3773 = vmatmul.f32.gmra.mxu0 %v2162
        %v3774 = vpop.f32.mrf.mxu0
        %v3775 = vadd.f32 0.0, %v3774
        %3776 = vmatmul.f32.gmra.mxu0 %v2165
        %v3777 = vpop.f32.mrf.mxu0
        %v3778 = vadd.f32 0.0, %v3777
        %3779 = vmatmul.f32.gmra.mxu0 %v2168
        %v3780 = vpop.f32.mrf.mxu0
        %v3781 = vadd.f32 0.0, %v3780
        %3782 = vmatmul.f32.gmra.mxu0 %v2171
        %v3783 = vpop.f32.mrf.mxu0
        %v3784 = vadd.f32 0.0, %v3783
        %3785 = vmatmul.f32.gmra.mxu0 %v2174
        %v3786 = vpop.f32.mrf.mxu0
        %v3787 = vadd.f32 0.0, %v3786
        %3788 = vmatmul.f32.gmra.mxu0 %v2177
        %v3789 = vpop.f32.mrf.mxu0
        %v3790 = vadd.f32 0.0, %v3789
        %3791 = vmatmul.f32.gmra.mxu0 %v2180
        %v3792 = vpop.f32.mrf.mxu0
        %v3793 = vadd.f32 0.0, %v3792
        %3794 = vmatmul.f32.gmra.mxu0 %v2183
        %v3795 = vpop.f32.mrf.mxu0
        %v3796 = vadd.f32 0.0, %v3795
        %3797 = vmatmul.f32.gmra.mxu0 %v2186
        %v3798 = vpop.f32.mrf.mxu0
        %v3799 = vadd.f32 0.0, %v3798
        %3800 = vmatmul.f32.gmra.mxu0 %v2189
        %v3801 = vpop.f32.mrf.mxu0
        %v3802 = vadd.f32 0.0, %v3801
        %3803 = vmatmul.f32.gmra.mxu0 %v2192
        %v3804 = vpop.f32.mrf.mxu0
        %v3805 = vadd.f32 0.0, %v3804
        %3806 = vmatmul.f32.gmra.mxu0 %v2195
        %v3807 = vpop.f32.mrf.mxu0
        %v3808 = vadd.f32 0.0, %v3807
        %3809 = vmatmul.f32.gmra.mxu0 %v2198
        %v3810 = vpop.f32.mrf.mxu0
        %v3811 = vadd.f32 0.0, %v3810
        %3812 = vmatmul.f32.gmra.mxu0 %v2201
        %v3813 = vpop.f32.mrf.mxu0
        %v3814 = vadd.f32 0.0, %v3813
        %3815 = vmatmul.f32.gmra.mxu0 %v2204
        %v3816 = vpop.f32.mrf.mxu0
        %v3817 = vadd.f32 0.0, %v3816
        %3818 = vmatmul.f32.gmra.mxu0 %v2207
        %v3819 = vpop.f32.mrf.mxu0
        %v3820 = vadd.f32 0.0, %v3819
        %3821 = vmatmul.f32.gmra.mxu0 %v2210
        %v3822 = vpop.f32.mrf.mxu0
        %v3823 = vadd.f32 0.0, %v3822
        %3824 = vmatmul.f32.gmra.mxu0 %v2213
        %v3825 = vpop.f32.mrf.mxu0
        %v3826 = vadd.f32 0.0, %v3825
        %3827 = vmatmul.f32.gmra.mxu0 %v2216
        %v3828 = vpop.f32.mrf.mxu0
        %v3829 = vadd.f32 0.0, %v3828
        %3830 = vmatmul.f32.gmra.mxu0 %v2219
        %v3831 = vpop.f32.mrf.mxu0
        %v3832 = vadd.f32 0.0, %v3831
        %3833 = vmatmul.f32.gmra.mxu0 %v2222
        %v3834 = vpop.f32.mrf.mxu0
        %v3835 = vadd.f32 0.0, %v3834
        %3836 = vmatmul.f32.gmra.mxu0 %v2225
        %v3837 = vpop.f32.mrf.mxu0
        %v3838 = vadd.f32 0.0, %v3837
        %3839 = vmatmul.f32.gmra.mxu0 %v2228
        %v3840 = vpop.f32.mrf.mxu0
        %v3841 = vadd.f32 0.0, %v3840
        %3842 = vmatmul.f32.gmra.mxu0 %v2231
        %v3843 = vpop.f32.mrf.mxu0
        %v3844 = vadd.f32 0.0, %v3843
        %3845 = vmatmul.f32.gmra.mxu0 %v2234
        %v3846 = vpop.f32.mrf.mxu0
        %v3847 = vadd.f32 0.0, %v3846
        %3848 = vmatmul.f32.gmra.mxu0 %v2237
        %v3849 = vpop.f32.mrf.mxu0
        %v3850 = vadd.f32 0.0, %v3849
        %3851 = vmatmul.f32.gmra.mxu0 %v2240
        %v3852 = vpop.f32.mrf.mxu0
        %v3853 = vadd.f32 0.0, %v3852
        %3854 = vmatmul.f32.gmra.mxu0 %v2243
        %v3855 = vpop.f32.mrf.mxu0
        %v3856 = vadd.f32 0.0, %v3855
        %3857 = vmatmul.f32.gmra.mxu0 %v2246
        %v3858 = vpop.f32.mrf.mxu0
        %v3859 = vadd.f32 0.0, %v3858
        %3860 = vmatmul.f32.gmra.mxu0 %v2249
        %v3861 = vpop.f32.mrf.mxu0
        %v3862 = vadd.f32 0.0, %v3861
        %3863 = vmatmul.f32.gmra.mxu0 %v2252
        %v3864 = vpop.f32.mrf.mxu0
        %v3865 = vadd.f32 0.0, %v3864
        %3866 = vmatmul.f32.gmra.mxu0 %v2255
        %v3867 = vpop.f32.mrf.mxu0
        %v3868 = vadd.f32 0.0, %v3867
        %3869 = vmatmul.f32.gmra.mxu0 %v2258
        %v3870 = vpop.f32.mrf.mxu0
        %v3871 = vadd.f32 0.0, %v3870
        %3872 = vmatmul.f32.gmra.mxu0 %v2261
        %v3873 = vpop.f32.mrf.mxu0
        %v3874 = vadd.f32 0.0, %v3873
        %3875 = vmatmul.f32.gmra.mxu0 %v2264
        %v3876 = vpop.f32.mrf.mxu0
        %v3877 = vadd.f32 0.0, %v3876
        %3878 = vmatmul.f32.gmra.mxu0 %v2267
        %v3879 = vpop.f32.mrf.mxu0
        %v3880 = vadd.f32 0.0, %v3879
        %3881 = vmatmul.f32.gmra.mxu0 %v2270
        %v3882 = vpop.f32.mrf.mxu0
        %v3883 = vadd.f32 0.0, %v3882
        %3884 = vmatmul.f32.gmra.mxu0 %v2273
        %v3885 = vpop.f32.mrf.mxu0
        %v3886 = vadd.f32 0.0, %v3885
        %3887 = vmatmul.f32.gmra.mxu0 %v2276
        %v3888 = vpop.f32.mrf.mxu0
        %v3889 = vadd.f32 0.0, %v3888
        %3890 = vmatmul.f32.gmra.mxu0 %v2279
        %v3891 = vpop.f32.mrf.mxu0
        %v3892 = vadd.f32 0.0, %v3891
        %3893 = vmatmul.f32.gmra.mxu0 %v2282
        %v3894 = vpop.f32.mrf.mxu0
        %v3895 = vadd.f32 0.0, %v3894
        %3896 = vdwg.mxu0
        %3898 = vset.pattern.permute.xlu0 1
        %3899 = vperm.xlu0 %3898, %v590
        %v3900 = vpop.permute.xlu0 %3899
        %3903 = vset.pattern.permute.xlu0 1
        %3904 = vperm.xlu0 %3903, %v591
        %v3905 = vpop.permute.xlu0 %3904
        %3908 = vset.pattern.permute.xlu0 1
        %3909 = vperm.xlu0 %3908, %v592
        %v3910 = vpop.permute.xlu0 %3909
        %3913 = vset.pattern.permute.xlu0 1
        %3914 = vperm.xlu0 %3913, %v593
        %v3915 = vpop.permute.xlu0 %3914
        %3918 = vset.pattern.permute.xlu0 1
        %3919 = vperm.xlu0 %3918, %v594
        %v3920 = vpop.permute.xlu0 %3919
        %3923 = vset.pattern.permute.xlu0 1
        %3924 = vperm.xlu0 %3923, %v595
        %v3925 = vpop.permute.xlu0 %3924
        %3928 = vset.pattern.permute.xlu0 1
        %3929 = vperm.xlu0 %3928, %v596
        %v3930 = vpop.permute.xlu0 %3929
        %3933 = vset.pattern.permute.xlu0 1
        %3934 = vperm.xlu0 %3933, %v597
        %v3935 = vpop.permute.xlu0 %3934
        %3938 = vset.pattern.permute.xlu0 1
        %3939 = vperm.xlu0 %3938, %v598
        %v3940 = vpop.permute.xlu0 %3939
        %3943 = vset.pattern.permute.xlu0 1
        %3944 = vperm.xlu0 %3943, %v599
        %v3945 = vpop.permute.xlu0 %3944
        %3948 = vset.pattern.permute.xlu0 1
        %3949 = vperm.xlu0 %3948, %v600
        %v3950 = vpop.permute.xlu0 %3949
        %3953 = vset.pattern.permute.xlu0 1
        %3954 = vperm.xlu0 %3953, %v601
        %v3955 = vpop.permute.xlu0 %3954
        %3958 = vset.pattern.permute.xlu0 1
        %3959 = vperm.xlu0 %3958, %v602
        %v3960 = vpop.permute.xlu0 %3959
        %3963 = vset.pattern.permute.xlu0 1
        %3964 = vperm.xlu0 %3963, %v603
        %v3965 = vpop.permute.xlu0 %3964
        %3968 = vset.pattern.permute.xlu0 1
        %3969 = vperm.xlu0 %3968, %v604
        %v3970 = vpop.permute.xlu0 %3969
        %3973 = vset.pattern.permute.xlu0 1
        %3974 = vperm.xlu0 %3973, %v605
        %v3975 = vpop.permute.xlu0 %3974
        %3978 = vset.pattern.permute.xlu0 1
        %3979 = vperm.xlu0 %3978, %v606
        %v3980 = vpop.permute.xlu0 %3979
        %3983 = vset.pattern.permute.xlu0 1
        %3984 = vperm.xlu0 %3983, %v607
        %v3985 = vpop.permute.xlu0 %3984
        %3988 = vset.pattern.permute.xlu0 1
        %3989 = vperm.xlu0 %3988, %v608
        %v3990 = vpop.permute.xlu0 %3989
        %3993 = vset.pattern.permute.xlu0 1
        %3994 = vperm.xlu0 %3993, %v609
        %v3995 = vpop.permute.xlu0 %3994
        %3998 = vset.pattern.permute.xlu0 1
        %3999 = vperm.xlu0 %3998, %v610
        %v4000 = vpop.permute.xlu0 %3999
        %4003 = vset.pattern.permute.xlu0 1
        %4004 = vperm.xlu0 %4003, %v611
        %v4005 = vpop.permute.xlu0 %4004
        %4008 = vset.pattern.permute.xlu0 1
        %4009 = vperm.xlu0 %4008, %v612
        %v4010 = vpop.permute.xlu0 %4009
        %4013 = vset.pattern.permute.xlu0 1
        %4014 = vperm.xlu0 %4013, %v613
        %v4015 = vpop.permute.xlu0 %4014
        %4018 = vset.pattern.permute.xlu0 1
        %4019 = vperm.xlu0 %4018, %v614
        %v4020 = vpop.permute.xlu0 %4019
        %4023 = vset.pattern.permute.xlu0 1
        %4024 = vperm.xlu0 %4023, %v615
        %v4025 = vpop.permute.xlu0 %4024
        %4028 = vset.pattern.permute.xlu0 1
        %4029 = vperm.xlu0 %4028, %v616
        %v4030 = vpop.permute.xlu0 %4029
        %4033 = vset.pattern.permute.xlu0 1
        %4034 = vperm.xlu0 %4033, %v617
        %v4035 = vpop.permute.xlu0 %4034
        %4038 = vset.pattern.permute.xlu0 1
        %4039 = vperm.xlu0 %4038, %v618
        %v4040 = vpop.permute.xlu0 %4039
        %4043 = vset.pattern.permute.xlu0 1
        %4044 = vperm.xlu0 %4043, %v619
        %v4045 = vpop.permute.xlu0 %4044
        %4048 = vset.pattern.permute.xlu0 1
        %4049 = vperm.xlu0 %4048, %v620
        %v4050 = vpop.permute.xlu0 %4049
        %4053 = vset.pattern.permute.xlu0 1
        %4054 = vperm.xlu0 %4053, %v621
        %v4055 = vpop.permute.xlu0 %4054
        %4058 = vset.pattern.permute.xlu0 1
        %4059 = vperm.xlu0 %4058, %v622
        %v4060 = vpop.permute.xlu0 %4059
        %4063 = vset.pattern.permute.xlu0 1
        %4064 = vperm.xlu0 %4063, %v623
        %v4065 = vpop.permute.xlu0 %4064
        %4068 = vset.pattern.permute.xlu0 1
        %4069 = vperm.xlu0 %4068, %v624
        %v4070 = vpop.permute.xlu0 %4069
        %4073 = vset.pattern.permute.xlu0 1
        %4074 = vperm.xlu0 %4073, %v625
        %v4075 = vpop.permute.xlu0 %4074
        %4078 = vset.pattern.permute.xlu0 1
        %4079 = vperm.xlu0 %4078, %v626
        %v4080 = vpop.permute.xlu0 %4079
        %4083 = vset.pattern.permute.xlu0 1
        %4084 = vperm.xlu0 %4083, %v627
        %v4085 = vpop.permute.xlu0 %4084
        %4088 = vset.pattern.permute.xlu0 1
        %4089 = vperm.xlu0 %4088, %v628
        %v4090 = vpop.permute.xlu0 %4089
        %4093 = vset.pattern.permute.xlu0 1
        %4094 = vperm.xlu0 %4093, %v629
        %v4095 = vpop.permute.xlu0 %4094
        %4098 = vset.pattern.permute.xlu0 1
        %4099 = vperm.xlu0 %4098, %v630
        %v4100 = vpop.permute.xlu0 %4099
        %4103 = vset.pattern.permute.xlu0 1
        %4104 = vperm.xlu0 %4103, %v631
        %v4105 = vpop.permute.xlu0 %4104
        %4108 = vset.pattern.permute.xlu0 1
        %4109 = vperm.xlu0 %4108, %v632
        %v4110 = vpop.permute.xlu0 %4109
        %4113 = vset.pattern.permute.xlu0 1
        %4114 = vperm.xlu0 %4113, %v633
        %v4115 = vpop.permute.xlu0 %4114
        %4118 = vset.pattern.permute.xlu0 1
        %4119 = vperm.xlu0 %4118, %v634
        %v4120 = vpop.permute.xlu0 %4119
        %4123 = vset.pattern.permute.xlu0 1
        %4124 = vperm.xlu0 %4123, %v635
        %v4125 = vpop.permute.xlu0 %4124
        %4128 = vset.pattern.permute.xlu0 1
        %4129 = vperm.xlu0 %4128, %v636
        %v4130 = vpop.permute.xlu0 %4129
        %4133 = vset.pattern.permute.xlu0 1
        %4134 = vperm.xlu0 %4133, %v637
        %v4135 = vpop.permute.xlu0 %4134
        %4138 = vset.pattern.permute.xlu0 1
        %4139 = vperm.xlu0 %4138, %v638
        %v4140 = vpop.permute.xlu0 %4139
        %4143 = vset.pattern.permute.xlu0 1
        %4144 = vperm.xlu0 %4143, %v639
        %v4145 = vpop.permute.xlu0 %4144
        %4148 = vset.pattern.permute.xlu0 1
        %4149 = vperm.xlu0 %4148, %v640
        %v4150 = vpop.permute.xlu0 %4149
        %4153 = vset.pattern.permute.xlu0 1
        %4154 = vperm.xlu0 %4153, %v641
        %v4155 = vpop.permute.xlu0 %4154
        %4158 = vset.pattern.permute.xlu0 1
        %4159 = vperm.xlu0 %4158, %v642
        %v4160 = vpop.permute.xlu0 %4159
        %4163 = vset.pattern.permute.xlu0 1
        %4164 = vperm.xlu0 %4163, %v643
        %v4165 = vpop.permute.xlu0 %4164
        %4168 = vset.pattern.permute.xlu0 1
        %4169 = vperm.xlu0 %4168, %v644
        %v4170 = vpop.permute.xlu0 %4169
        %4173 = vset.pattern.permute.xlu0 1
        %4174 = vperm.xlu0 %4173, %v645
        %v4175 = vpop.permute.xlu0 %4174
        %4178 = vset.pattern.permute.xlu0 1
        %4179 = vperm.xlu0 %4178, %v646
        %v4180 = vpop.permute.xlu0 %4179
        %4183 = vset.pattern.permute.xlu0 1
        %4184 = vperm.xlu0 %4183, %v647
        %v4185 = vpop.permute.xlu0 %4184
        %4188 = vset.pattern.permute.xlu0 1
        %4189 = vperm.xlu0 %4188, %v648
        %v4190 = vpop.permute.xlu0 %4189
        %4193 = vset.pattern.permute.xlu0 1
        %4194 = vperm.xlu0 %4193, %v649
        %v4195 = vpop.permute.xlu0 %4194
        %4198 = vset.pattern.permute.xlu0 1
        %4199 = vperm.xlu0 %4198, %v650
        %v4200 = vpop.permute.xlu0 %4199
        %4203 = vset.pattern.permute.xlu0 1
        %4204 = vperm.xlu0 %4203, %v651
        %v4205 = vpop.permute.xlu0 %4204
        %4208 = vset.pattern.permute.xlu0 1
        %4209 = vperm.xlu0 %4208, %v652
        %v4210 = vpop.permute.xlu0 %4209
        %4213 = vset.pattern.permute.xlu0 1
        %4214 = vperm.xlu0 %4213, %v653
        %v4215 = vpop.permute.xlu0 %4214
        %4218 = vset.pattern.permute.xlu0 1
        %4219 = vperm.xlu0 %4218, %v654
        %v4220 = vpop.permute.xlu0 %4219
        %4223 = vset.pattern.permute.xlu0 1
        %4224 = vperm.xlu0 %4223, %v655
        %v4225 = vpop.permute.xlu0 %4224
        %4228 = vset.pattern.permute.xlu0 1
        %4229 = vperm.xlu0 %4228, %v656
        %v4230 = vpop.permute.xlu0 %4229
        %4233 = vset.pattern.permute.xlu0 1
        %4234 = vperm.xlu0 %4233, %v657
        %v4235 = vpop.permute.xlu0 %4234
        %4238 = vset.pattern.permute.xlu0 1
        %4239 = vperm.xlu0 %4238, %v658
        %v4240 = vpop.permute.xlu0 %4239
        %4243 = vset.pattern.permute.xlu0 1
        %4244 = vperm.xlu0 %4243, %v659
        %v4245 = vpop.permute.xlu0 %4244
        %4248 = vset.pattern.permute.xlu0 1
        %4249 = vperm.xlu0 %4248, %v660
        %v4250 = vpop.permute.xlu0 %4249
        %4253 = vset.pattern.permute.xlu0 1
        %4254 = vperm.xlu0 %4253, %v661
        %v4255 = vpop.permute.xlu0 %4254
        %4258 = vset.pattern.permute.xlu0 1
        %4259 = vperm.xlu0 %4258, %v662
        %v4260 = vpop.permute.xlu0 %4259
        %4263 = vset.pattern.permute.xlu0 1
        %4264 = vperm.xlu0 %4263, %v663
        %v4265 = vpop.permute.xlu0 %4264
        %4268 = vset.pattern.permute.xlu0 1
        %4269 = vperm.xlu0 %4268, %v664
        %v4270 = vpop.permute.xlu0 %4269
        %4273 = vset.pattern.permute.xlu0 1
        %4274 = vperm.xlu0 %4273, %v665
        %v4275 = vpop.permute.xlu0 %4274
        %4278 = vset.pattern.permute.xlu0 1
        %4279 = vperm.xlu0 %4278, %v666
        %v4280 = vpop.permute.xlu0 %4279
        %4283 = vset.pattern.permute.xlu0 1
        %4284 = vperm.xlu0 %4283, %v667
        %v4285 = vpop.permute.xlu0 %4284
        %4288 = vset.pattern.permute.xlu0 1
        %4289 = vperm.xlu0 %4288, %v668
        %v4290 = vpop.permute.xlu0 %4289
        %4293 = vset.pattern.permute.xlu0 1
        %4294 = vperm.xlu0 %4293, %v669
        %v4295 = vpop.permute.xlu0 %4294
        %4298 = vset.pattern.permute.xlu0 1
        %4299 = vperm.xlu0 %4298, %v670
        %v4300 = vpop.permute.xlu0 %4299
        %4303 = vset.pattern.permute.xlu0 1
        %4304 = vperm.xlu0 %4303, %v671
        %v4305 = vpop.permute.xlu0 %4304
        %4308 = vset.pattern.permute.xlu0 1
        %4309 = vperm.xlu0 %4308, %v672
        %v4310 = vpop.permute.xlu0 %4309
        %4313 = vset.pattern.permute.xlu0 1
        %4314 = vperm.xlu0 %4313, %v673
        %v4315 = vpop.permute.xlu0 %4314
        %4318 = vset.pattern.permute.xlu0 1
        %4319 = vperm.xlu0 %4318, %v674
        %v4320 = vpop.permute.xlu0 %4319
        %4323 = vset.pattern.permute.xlu0 1
        %4324 = vperm.xlu0 %4323, %v675
        %v4325 = vpop.permute.xlu0 %4324
        %4328 = vset.pattern.permute.xlu0 1
        %4329 = vperm.xlu0 %4328, %v676
        %v4330 = vpop.permute.xlu0 %4329
        %4333 = vset.pattern.permute.xlu0 1
        %4334 = vperm.xlu0 %4333, %v677
        %v4335 = vpop.permute.xlu0 %4334
        %4338 = vset.pattern.permute.xlu0 1
        %4339 = vperm.xlu0 %4338, %v678
        %v4340 = vpop.permute.xlu0 %4339
        %4343 = vset.pattern.permute.xlu0 1
        %4344 = vperm.xlu0 %4343, %v679
        %v4345 = vpop.permute.xlu0 %4344
        %4348 = vset.pattern.permute.xlu0 1
        %4349 = vperm.xlu0 %4348, %v680
        %v4350 = vpop.permute.xlu0 %4349
        %4353 = vset.pattern.permute.xlu0 1
        %4354 = vperm.xlu0 %4353, %v681
        %v4355 = vpop.permute.xlu0 %4354
        %4358 = vset.pattern.permute.xlu0 1
        %4359 = vperm.xlu0 %4358, %v682
        %v4360 = vpop.permute.xlu0 %4359
        %4363 = vset.pattern.permute.xlu0 1
        %4364 = vperm.xlu0 %4363, %v683
        %v4365 = vpop.permute.xlu0 %4364
        %4368 = vset.pattern.permute.xlu0 1
        %4369 = vperm.xlu0 %4368, %v684
        %v4370 = vpop.permute.xlu0 %4369
        %4373 = vset.pattern.permute.xlu0 1
        %4374 = vperm.xlu0 %4373, %v685
        %v4375 = vpop.permute.xlu0 %4374
        %4378 = vset.pattern.permute.xlu0 1
        %4379 = vperm.xlu0 %4378, %v686
        %v4380 = vpop.permute.xlu0 %4379
        %4383 = vset.pattern.permute.xlu0 1
        %4384 = vperm.xlu0 %4383, %v687
        %v4385 = vpop.permute.xlu0 %4384
        %4388 = vset.pattern.permute.xlu0 1
        %4389 = vperm.xlu0 %4388, %v688
        %v4390 = vpop.permute.xlu0 %4389
        %4393 = vset.pattern.permute.xlu0 1
        %4394 = vperm.xlu0 %4393, %v689
        %v4395 = vpop.permute.xlu0 %4394
        %4398 = vset.pattern.permute.xlu0 1
        %4399 = vperm.xlu0 %4398, %v690
        %v4400 = vpop.permute.xlu0 %4399
        %4403 = vset.pattern.permute.xlu0 1
        %4404 = vperm.xlu0 %4403, %v691
        %v4405 = vpop.permute.xlu0 %4404
        %4408 = vset.pattern.permute.xlu0 1
        %4409 = vperm.xlu0 %4408, %v692
        %v4410 = vpop.permute.xlu0 %4409
        %4413 = vset.pattern.permute.xlu0 1
        %4414 = vperm.xlu0 %4413, %v693
        %v4415 = vpop.permute.xlu0 %4414
        %4418 = vset.pattern.permute.xlu0 1
        %4419 = vperm.xlu0 %4418, %v694
        %v4420 = vpop.permute.xlu0 %4419
        %4423 = vset.pattern.permute.xlu0 1
        %4424 = vperm.xlu0 %4423, %v695
        %v4425 = vpop.permute.xlu0 %4424
        %4428 = vset.pattern.permute.xlu0 1
        %4429 = vperm.xlu0 %4428, %v696
        %v4430 = vpop.permute.xlu0 %4429
        %4433 = vset.pattern.permute.xlu0 1
        %4434 = vperm.xlu0 %4433, %v697
        %v4435 = vpop.permute.xlu0 %4434
        %4438 = vset.pattern.permute.xlu0 1
        %4439 = vperm.xlu0 %4438, %v698
        %v4440 = vpop.permute.xlu0 %4439
        %4443 = vset.pattern.permute.xlu0 1
        %4444 = vperm.xlu0 %4443, %v699
        %v4445 = vpop.permute.xlu0 %4444
        %4448 = vset.pattern.permute.xlu0 1
        %4449 = vperm.xlu0 %4448, %v700
        %v4450 = vpop.permute.xlu0 %4449
        %4453 = vset.pattern.permute.xlu0 1
        %4454 = vperm.xlu0 %4453, %v701
        %v4455 = vpop.permute.xlu0 %4454
        %4458 = vset.pattern.permute.xlu0 1
        %4459 = vperm.xlu0 %4458, %v702
        %v4460 = vpop.permute.xlu0 %4459
        %4463 = vset.pattern.permute.xlu0 1
        %4464 = vperm.xlu0 %4463, %v703
        %v4465 = vpop.permute.xlu0 %4464
        %4468 = vset.pattern.permute.xlu0 1
        %4469 = vperm.xlu0 %4468, %v704
        %v4470 = vpop.permute.xlu0 %4469
        %4473 = vset.pattern.permute.xlu0 1
        %4474 = vperm.xlu0 %4473, %v705
        %v4475 = vpop.permute.xlu0 %4474
        %4478 = vset.pattern.permute.xlu0 1
        %4479 = vperm.xlu0 %4478, %v706
        %v4480 = vpop.permute.xlu0 %4479
        %4483 = vset.pattern.permute.xlu0 1
        %4484 = vperm.xlu0 %4483, %v707
        %v4485 = vpop.permute.xlu0 %4484
        %4488 = vset.pattern.permute.xlu0 1
        %4489 = vperm.xlu0 %4488, %v708
        %v4490 = vpop.permute.xlu0 %4489
        %4493 = vset.pattern.permute.xlu0 1
        %4494 = vperm.xlu0 %4493, %v709
        %v4495 = vpop.permute.xlu0 %4494
        %4498 = vset.pattern.permute.xlu0 1
        %4499 = vperm.xlu0 %4498, %v710
        %v4500 = vpop.permute.xlu0 %4499
        %4503 = vset.pattern.permute.xlu0 1
        %4504 = vperm.xlu0 %4503, %v711
        %v4505 = vpop.permute.xlu0 %4504
        %4508 = vset.pattern.permute.xlu0 1
        %4509 = vperm.xlu0 %4508, %v712
        %v4510 = vpop.permute.xlu0 %4509
        %4513 = vset.pattern.permute.xlu0 1
        %4514 = vperm.xlu0 %4513, %v713
        %v4515 = vpop.permute.xlu0 %4514
        %4518 = vset.pattern.permute.xlu0 1
        %4519 = vperm.xlu0 %4518, %v714
        %v4520 = vpop.permute.xlu0 %4519
        %4523 = vset.pattern.permute.xlu0 1
        %4524 = vperm.xlu0 %4523, %v715
        %v4525 = vpop.permute.xlu0 %4524
        %4528 = vset.pattern.permute.xlu0 1
        %4529 = vperm.xlu0 %4528, %v716
        %v4530 = vpop.permute.xlu0 %4529
        %4533 = vset.pattern.permute.xlu0 1
        %4534 = vperm.xlu0 %4533, %v717
        %v4535 = vpop.permute.xlu0 %4534
        %v4537 = vmul.f32 %v3900, %v2311
        %v4538 = vmul.f32 %v3905, %v2314
        %v4539 = vmul.f32 %v3910, %v2317
        %v4540 = vmul.f32 %v3915, %v2320
        %v4541 = vmul.f32 %v3920, %v2323
        %v4542 = vmul.f32 %v3925, %v2326
        %v4543 = vmul.f32 %v3930, %v2329
        %v4544 = vmul.f32 %v3935, %v2332
        %v4545 = vmul.f32 %v3940, %v2335
        %v4546 = vmul.f32 %v3945, %v2338
        %v4547 = vmul.f32 %v3950, %v2341
        %v4548 = vmul.f32 %v3955, %v2344
        %v4549 = vmul.f32 %v3960, %v2347
        %v4550 = vmul.f32 %v3965, %v2350
        %v4551 = vmul.f32 %v3970, %v2353
        %v4552 = vmul.f32 %v3975, %v2356
        %v4553 = vmul.f32 %v3980, %v2359
        %v4554 = vmul.f32 %v3985, %v2362
        %v4555 = vmul.f32 %v3990, %v2365
        %v4556 = vmul.f32 %v3995, %v2368
        %v4557 = vmul.f32 %v4000, %v2371
        %v4558 = vmul.f32 %v4005, %v2374
        %v4559 = vmul.f32 %v4010, %v2377
        %v4560 = vmul.f32 %v4015, %v2380
        %v4561 = vmul.f32 %v4020, %v2383
        %v4562 = vmul.f32 %v4025, %v2386
        %v4563 = vmul.f32 %v4030, %v2389
        %v4564 = vmul.f32 %v4035, %v2392
        %v4565 = vmul.f32 %v4040, %v2395
        %v4566 = vmul.f32 %v4045, %v2398
        %v4567 = vmul.f32 %v4050, %v2401
        %v4568 = vmul.f32 %v4055, %v2404
        %v4569 = vmul.f32 %v4060, %v2407
        %v4570 = vmul.f32 %v4065, %v2410
        %v4571 = vmul.f32 %v4070, %v2413
        %v4572 = vmul.f32 %v4075, %v2416
        %v4573 = vmul.f32 %v4080, %v2419
        %v4574 = vmul.f32 %v4085, %v2422
        %v4575 = vmul.f32 %v4090, %v2425
        %v4576 = vmul.f32 %v4095, %v2428
        %v4577 = vmul.f32 %v4100, %v2431
        %v4578 = vmul.f32 %v4105, %v2434
        %v4579 = vmul.f32 %v4110, %v2437
        %v4580 = vmul.f32 %v4115, %v2440
        %v4581 = vmul.f32 %v4120, %v2443
        %v4582 = vmul.f32 %v4125, %v2446
        %v4583 = vmul.f32 %v4130, %v2449
        %v4584 = vmul.f32 %v4135, %v2452
        %v4585 = vmul.f32 %v4140, %v2455
        %v4586 = vmul.f32 %v4145, %v2458
        %v4587 = vmul.f32 %v4150, %v2461
        %v4588 = vmul.f32 %v4155, %v2464
        %v4589 = vmul.f32 %v4160, %v2467
        %v4590 = vmul.f32 %v4165, %v2470
        %v4591 = vmul.f32 %v4170, %v2473
        %v4592 = vmul.f32 %v4175, %v2476
        %v4593 = vmul.f32 %v4180, %v2479
        %v4594 = vmul.f32 %v4185, %v2482
        %v4595 = vmul.f32 %v4190, %v2485
        %v4596 = vmul.f32 %v4195, %v2488
        %v4597 = vmul.f32 %v4200, %v2491
        %v4598 = vmul.f32 %v4205, %v2494
        %v4599 = vmul.f32 %v4210, %v2497
        %v4600 = vmul.f32 %v4215, %v2500
        %v4601 = vmul.f32 %v4220, %v2503
        %v4602 = vmul.f32 %v4225, %v2506
        %v4603 = vmul.f32 %v4230, %v2509
        %v4604 = vmul.f32 %v4235, %v2512
        %v4605 = vmul.f32 %v4240, %v2515
        %v4606 = vmul.f32 %v4245, %v2518
        %v4607 = vmul.f32 %v4250, %v2521
        %v4608 = vmul.f32 %v4255, %v2524
        %v4609 = vmul.f32 %v4260, %v2527
        %v4610 = vmul.f32 %v4265, %v2530
        %v4611 = vmul.f32 %v4270, %v2533
        %v4612 = vmul.f32 %v4275, %v2536
        %v4613 = vmul.f32 %v4280, %v2539
        %v4614 = vmul.f32 %v4285, %v2542
        %v4615 = vmul.f32 %v4290, %v2545
        %v4616 = vmul.f32 %v4295, %v2548
        %v4617 = vmul.f32 %v4300, %v2551
        %v4618 = vmul.f32 %v4305, %v2554
        %v4619 = vmul.f32 %v4310, %v2557
        %v4620 = vmul.f32 %v4315, %v2560
        %v4621 = vmul.f32 %v4320, %v2563
        %v4622 = vmul.f32 %v4325, %v2566
        %v4623 = vmul.f32 %v4330, %v2569
        %v4624 = vmul.f32 %v4335, %v2572
        %v4625 = vmul.f32 %v4340, %v2575
        %v4626 = vmul.f32 %v4345, %v2578
        %v4627 = vmul.f32 %v4350, %v2581
        %v4628 = vmul.f32 %v4355, %v2584
        %v4629 = vmul.f32 %v4360, %v2587
        %v4630 = vmul.f32 %v4365, %v2590
        %v4631 = vmul.f32 %v4370, %v2593
        %v4632 = vmul.f32 %v4375, %v2596
        %v4633 = vmul.f32 %v4380, %v2599
        %v4634 = vmul.f32 %v4385, %v2602
        %v4635 = vmul.f32 %v4390, %v2605
        %v4636 = vmul.f32 %v4395, %v2608
        %v4637 = vmul.f32 %v4400, %v2611
        %v4638 = vmul.f32 %v4405, %v2614
        %v4639 = vmul.f32 %v4410, %v2617
        %v4640 = vmul.f32 %v4415, %v2620
        %v4641 = vmul.f32 %v4420, %v2623
        %v4642 = vmul.f32 %v4425, %v2626
        %v4643 = vmul.f32 %v4430, %v2629
        %v4644 = vmul.f32 %v4435, %v2632
        %v4645 = vmul.f32 %v4440, %v2635
        %v4646 = vmul.f32 %v4445, %v2638
        %v4647 = vmul.f32 %v4450, %v2641
        %v4648 = vmul.f32 %v4455, %v2644
        %v4649 = vmul.f32 %v4460, %v2647
        %v4650 = vmul.f32 %v4465, %v2650
        %v4651 = vmul.f32 %v4470, %v2653
        %v4652 = vmul.f32 %v4475, %v2656
        %v4653 = vmul.f32 %v4480, %v2659
        %v4654 = vmul.f32 %v4485, %v2662
        %v4655 = vmul.f32 %v4490, %v2665
        %v4656 = vmul.f32 %v4495, %v2668
        %v4657 = vmul.f32 %v4500, %v2671
        %v4658 = vmul.f32 %v4505, %v2674
        %v4659 = vmul.f32 %v4510, %v2677
        %v4660 = vmul.f32 %v4515, %v2680
        %v4661 = vmul.f32 %v4520, %v2683
        %v4662 = vmul.f32 %v4525, %v2686
        %v4663 = vmul.f32 %v4530, %v2689
        %v4664 = vmul.f32 %v4535, %v2692
        %4666 = vset.pattern.permute.xlu0 2
        %4667 = vperm.xlu0 %4666, %v990
        %v4668 = vpop.permute.xlu0 %4667
        %4671 = vset.pattern.permute.xlu0 2
        %4672 = vperm.xlu0 %4671, %v991
        %v4673 = vpop.permute.xlu0 %4672
        %4676 = vset.pattern.permute.xlu0 2
        %4677 = vperm.xlu0 %4676, %v992
        %v4678 = vpop.permute.xlu0 %4677
        %4681 = vset.pattern.permute.xlu0 2
        %4682 = vperm.xlu0 %4681, %v993
        %v4683 = vpop.permute.xlu0 %4682
        %4686 = vset.pattern.permute.xlu0 2
        %4687 = vperm.xlu0 %4686, %v994
        %v4688 = vpop.permute.xlu0 %4687
        %4691 = vset.pattern.permute.xlu0 2
        %4692 = vperm.xlu0 %4691, %v995
        %v4693 = vpop.permute.xlu0 %4692
        %4696 = vset.pattern.permute.xlu0 2
        %4697 = vperm.xlu0 %4696, %v996
        %v4698 = vpop.permute.xlu0 %4697
        %4701 = vset.pattern.permute.xlu0 2
        %4702 = vperm.xlu0 %4701, %v997
        %v4703 = vpop.permute.xlu0 %4702
        %4706 = vset.pattern.permute.xlu0 2
        %4707 = vperm.xlu0 %4706, %v998
        %v4708 = vpop.permute.xlu0 %4707
        %4711 = vset.pattern.permute.xlu0 2
        %4712 = vperm.xlu0 %4711, %v999
        %v4713 = vpop.permute.xlu0 %4712
        %4716 = vset.pattern.permute.xlu0 2
        %4717 = vperm.xlu0 %4716, %v1000
        %v4718 = vpop.permute.xlu0 %4717
        %4721 = vset.pattern.permute.xlu0 2
        %4722 = vperm.xlu0 %4721, %v1001
        %v4723 = vpop.permute.xlu0 %4722
        %4726 = vset.pattern.permute.xlu0 2
        %4727 = vperm.xlu0 %4726, %v1002
        %v4728 = vpop.permute.xlu0 %4727
        %4731 = vset.pattern.permute.xlu0 2
        %4732 = vperm.xlu0 %4731, %v1003
        %v4733 = vpop.permute.xlu0 %4732
        %4736 = vset.pattern.permute.xlu0 2
        %4737 = vperm.xlu0 %4736, %v1004
        %v4738 = vpop.permute.xlu0 %4737
        %4741 = vset.pattern.permute.xlu0 2
        %4742 = vperm.xlu0 %4741, %v1005
        %v4743 = vpop.permute.xlu0 %4742
        %4746 = vset.pattern.permute.xlu0 2
        %4747 = vperm.xlu0 %4746, %v1006
        %v4748 = vpop.permute.xlu0 %4747
        %4751 = vset.pattern.permute.xlu0 2
        %4752 = vperm.xlu0 %4751, %v1007
        %v4753 = vpop.permute.xlu0 %4752
        %4756 = vset.pattern.permute.xlu0 2
        %4757 = vperm.xlu0 %4756, %v1008
        %v4758 = vpop.permute.xlu0 %4757
        %4761 = vset.pattern.permute.xlu0 2
        %4762 = vperm.xlu0 %4761, %v1009
        %v4763 = vpop.permute.xlu0 %4762
        %4766 = vset.pattern.permute.xlu0 2
        %4767 = vperm.xlu0 %4766, %v1010
        %v4768 = vpop.permute.xlu0 %4767
        %4771 = vset.pattern.permute.xlu0 2
        %4772 = vperm.xlu0 %4771, %v1011
        %v4773 = vpop.permute.xlu0 %4772
        %4776 = vset.pattern.permute.xlu0 2
        %4777 = vperm.xlu0 %4776, %v1012
        %v4778 = vpop.permute.xlu0 %4777
        %4781 = vset.pattern.permute.xlu0 2
        %4782 = vperm.xlu0 %4781, %v1013
        %v4783 = vpop.permute.xlu0 %4782
        %4786 = vset.pattern.permute.xlu0 2
        %4787 = vperm.xlu0 %4786, %v1014
        %v4788 = vpop.permute.xlu0 %4787
        %4791 = vset.pattern.permute.xlu0 2
        %4792 = vperm.xlu0 %4791, %v1015
        %v4793 = vpop.permute.xlu0 %4792
        %4796 = vset.pattern.permute.xlu0 2
        %4797 = vperm.xlu0 %4796, %v1016
        %v4798 = vpop.permute.xlu0 %4797
        %4801 = vset.pattern.permute.xlu0 2
        %4802 = vperm.xlu0 %4801, %v1017
        %v4803 = vpop.permute.xlu0 %4802
        %4806 = vset.pattern.permute.xlu0 2
        %4807 = vperm.xlu0 %4806, %v1018
        %v4808 = vpop.permute.xlu0 %4807
        %4811 = vset.pattern.permute.xlu0 2
        %4812 = vperm.xlu0 %4811, %v1019
        %v4813 = vpop.permute.xlu0 %4812
        %4816 = vset.pattern.permute.xlu0 2
        %4817 = vperm.xlu0 %4816, %v1020
        %v4818 = vpop.permute.xlu0 %4817
        %4821 = vset.pattern.permute.xlu0 2
        %4822 = vperm.xlu0 %4821, %v1021
        %v4823 = vpop.permute.xlu0 %4822
        %4826 = vset.pattern.permute.xlu0 2
        %4827 = vperm.xlu0 %4826, %v1022
        %v4828 = vpop.permute.xlu0 %4827
        %4831 = vset.pattern.permute.xlu0 2
        %4832 = vperm.xlu0 %4831, %v1023
        %v4833 = vpop.permute.xlu0 %4832
        %4836 = vset.pattern.permute.xlu0 2
        %4837 = vperm.xlu0 %4836, %v1024
        %v4838 = vpop.permute.xlu0 %4837
        %4841 = vset.pattern.permute.xlu0 2
        %4842 = vperm.xlu0 %4841, %v1025
        %v4843 = vpop.permute.xlu0 %4842
        %4846 = vset.pattern.permute.xlu0 2
        %4847 = vperm.xlu0 %4846, %v1026
        %v4848 = vpop.permute.xlu0 %4847
        %4851 = vset.pattern.permute.xlu0 2
        %4852 = vperm.xlu0 %4851, %v1027
        %v4853 = vpop.permute.xlu0 %4852
        %4856 = vset.pattern.permute.xlu0 2
        %4857 = vperm.xlu0 %4856, %v1028
        %v4858 = vpop.permute.xlu0 %4857
        %4861 = vset.pattern.permute.xlu0 2
        %4862 = vperm.xlu0 %4861, %v1029
        %v4863 = vpop.permute.xlu0 %4862
        %4866 = vset.pattern.permute.xlu0 2
        %4867 = vperm.xlu0 %4866, %v1030
        %v4868 = vpop.permute.xlu0 %4867
        %4871 = vset.pattern.permute.xlu0 2
        %4872 = vperm.xlu0 %4871, %v1031
        %v4873 = vpop.permute.xlu0 %4872
        %4876 = vset.pattern.permute.xlu0 2
        %4877 = vperm.xlu0 %4876, %v1032
        %v4878 = vpop.permute.xlu0 %4877
        %4881 = vset.pattern.permute.xlu0 2
        %4882 = vperm.xlu0 %4881, %v1033
        %v4883 = vpop.permute.xlu0 %4882
        %4886 = vset.pattern.permute.xlu0 2
        %4887 = vperm.xlu0 %4886, %v1034
        %v4888 = vpop.permute.xlu0 %4887
        %4891 = vset.pattern.permute.xlu0 2
        %4892 = vperm.xlu0 %4891, %v1035
        %v4893 = vpop.permute.xlu0 %4892
        %4896 = vset.pattern.permute.xlu0 2
        %4897 = vperm.xlu0 %4896, %v1036
        %v4898 = vpop.permute.xlu0 %4897
        %4901 = vset.pattern.permute.xlu0 2
        %4902 = vperm.xlu0 %4901, %v1037
        %v4903 = vpop.permute.xlu0 %4902
        %4906 = vset.pattern.permute.xlu0 2
        %4907 = vperm.xlu0 %4906, %v1038
        %v4908 = vpop.permute.xlu0 %4907
        %4911 = vset.pattern.permute.xlu0 2
        %4912 = vperm.xlu0 %4911, %v1039
        %v4913 = vpop.permute.xlu0 %4912
        %4916 = vset.pattern.permute.xlu0 2
        %4917 = vperm.xlu0 %4916, %v1040
        %v4918 = vpop.permute.xlu0 %4917
        %4921 = vset.pattern.permute.xlu0 2
        %4922 = vperm.xlu0 %4921, %v1041
        %v4923 = vpop.permute.xlu0 %4922
        %4926 = vset.pattern.permute.xlu0 2
        %4927 = vperm.xlu0 %4926, %v1042
        %v4928 = vpop.permute.xlu0 %4927
        %4931 = vset.pattern.permute.xlu0 2
        %4932 = vperm.xlu0 %4931, %v1043
        %v4933 = vpop.permute.xlu0 %4932
        %4936 = vset.pattern.permute.xlu0 2
        %4937 = vperm.xlu0 %4936, %v1044
        %v4938 = vpop.permute.xlu0 %4937
        %4941 = vset.pattern.permute.xlu0 2
        %4942 = vperm.xlu0 %4941, %v1045
        %v4943 = vpop.permute.xlu0 %4942
        %4946 = vset.pattern.permute.xlu0 2
        %4947 = vperm.xlu0 %4946, %v1046
        %v4948 = vpop.permute.xlu0 %4947
        %4951 = vset.pattern.permute.xlu0 2
        %4952 = vperm.xlu0 %4951, %v1047
        %v4953 = vpop.permute.xlu0 %4952
        %4956 = vset.pattern.permute.xlu0 2
        %4957 = vperm.xlu0 %4956, %v1048
        %v4958 = vpop.permute.xlu0 %4957
        %4961 = vset.pattern.permute.xlu0 2
        %4962 = vperm.xlu0 %4961, %v1049
        %v4963 = vpop.permute.xlu0 %4962
        %4966 = vset.pattern.permute.xlu0 2
        %4967 = vperm.xlu0 %4966, %v1050
        %v4968 = vpop.permute.xlu0 %4967
        %4971 = vset.pattern.permute.xlu0 2
        %4972 = vperm.xlu0 %4971, %v1051
        %v4973 = vpop.permute.xlu0 %4972
        %4976 = vset.pattern.permute.xlu0 2
        %4977 = vperm.xlu0 %4976, %v1052
        %v4978 = vpop.permute.xlu0 %4977
        %4981 = vset.pattern.permute.xlu0 2
        %4982 = vperm.xlu0 %4981, %v1053
        %v4983 = vpop.permute.xlu0 %4982
        %4986 = vset.pattern.permute.xlu0 2
        %4987 = vperm.xlu0 %4986, %v1054
        %v4988 = vpop.permute.xlu0 %4987
        %4991 = vset.pattern.permute.xlu0 2
        %4992 = vperm.xlu0 %4991, %v1055
        %v4993 = vpop.permute.xlu0 %4992
        %4996 = vset.pattern.permute.xlu0 2
        %4997 = vperm.xlu0 %4996, %v1056
        %v4998 = vpop.permute.xlu0 %4997
        %5001 = vset.pattern.permute.xlu0 2
        %5002 = vperm.xlu0 %5001, %v1057
        %v5003 = vpop.permute.xlu0 %5002
        %5006 = vset.pattern.permute.xlu0 2
        %5007 = vperm.xlu0 %5006, %v1058
        %v5008 = vpop.permute.xlu0 %5007
        %5011 = vset.pattern.permute.xlu0 2
        %5012 = vperm.xlu0 %5011, %v1059
        %v5013 = vpop.permute.xlu0 %5012
        %5016 = vset.pattern.permute.xlu0 2
        %5017 = vperm.xlu0 %5016, %v1060
        %v5018 = vpop.permute.xlu0 %5017
        %5021 = vset.pattern.permute.xlu0 2
        %5022 = vperm.xlu0 %5021, %v1061
        %v5023 = vpop.permute.xlu0 %5022
        %5026 = vset.pattern.permute.xlu0 2
        %5027 = vperm.xlu0 %5026, %v1062
        %v5028 = vpop.permute.xlu0 %5027
        %5031 = vset.pattern.permute.xlu0 2
        %5032 = vperm.xlu0 %5031, %v1063
        %v5033 = vpop.permute.xlu0 %5032
        %5036 = vset.pattern.permute.xlu0 2
        %5037 = vperm.xlu0 %5036, %v1064
        %v5038 = vpop.permute.xlu0 %5037
        %5041 = vset.pattern.permute.xlu0 2
        %5042 = vperm.xlu0 %5041, %v1065
        %v5043 = vpop.permute.xlu0 %5042
        %5046 = vset.pattern.permute.xlu0 2
        %5047 = vperm.xlu0 %5046, %v1066
        %v5048 = vpop.permute.xlu0 %5047
        %5051 = vset.pattern.permute.xlu0 2
        %5052 = vperm.xlu0 %5051, %v1067
        %v5053 = vpop.permute.xlu0 %5052
        %5056 = vset.pattern.permute.xlu0 2
        %5057 = vperm.xlu0 %5056, %v1068
        %v5058 = vpop.permute.xlu0 %5057
        %5061 = vset.pattern.permute.xlu0 2
        %5062 = vperm.xlu0 %5061, %v1069
        %v5063 = vpop.permute.xlu0 %5062
        %5066 = vset.pattern.permute.xlu0 2
        %5067 = vperm.xlu0 %5066, %v1070
        %v5068 = vpop.permute.xlu0 %5067
        %5071 = vset.pattern.permute.xlu0 2
        %5072 = vperm.xlu0 %5071, %v1071
        %v5073 = vpop.permute.xlu0 %5072
        %5076 = vset.pattern.permute.xlu0 2
        %5077 = vperm.xlu0 %5076, %v1072
        %v5078 = vpop.permute.xlu0 %5077
        %5081 = vset.pattern.permute.xlu0 2
        %5082 = vperm.xlu0 %5081, %v1073
        %v5083 = vpop.permute.xlu0 %5082
        %5086 = vset.pattern.permute.xlu0 2
        %5087 = vperm.xlu0 %5086, %v1074
        %v5088 = vpop.permute.xlu0 %5087
        %5091 = vset.pattern.permute.xlu0 2
        %5092 = vperm.xlu0 %5091, %v1075
        %v5093 = vpop.permute.xlu0 %5092
        %5096 = vset.pattern.permute.xlu0 2
        %5097 = vperm.xlu0 %5096, %v1076
        %v5098 = vpop.permute.xlu0 %5097
        %5101 = vset.pattern.permute.xlu0 2
        %5102 = vperm.xlu0 %5101, %v1077
        %v5103 = vpop.permute.xlu0 %5102
        %5106 = vset.pattern.permute.xlu0 2
        %5107 = vperm.xlu0 %5106, %v1078
        %v5108 = vpop.permute.xlu0 %5107
        %5111 = vset.pattern.permute.xlu0 2
        %5112 = vperm.xlu0 %5111, %v1079
        %v5113 = vpop.permute.xlu0 %5112
        %5116 = vset.pattern.permute.xlu0 2
        %5117 = vperm.xlu0 %5116, %v1080
        %v5118 = vpop.permute.xlu0 %5117
        %5121 = vset.pattern.permute.xlu0 2
        %5122 = vperm.xlu0 %5121, %v1081
        %v5123 = vpop.permute.xlu0 %5122
        %5126 = vset.pattern.permute.xlu0 2
        %5127 = vperm.xlu0 %5126, %v1082
        %v5128 = vpop.permute.xlu0 %5127
        %5131 = vset.pattern.permute.xlu0 2
        %5132 = vperm.xlu0 %5131, %v1083
        %v5133 = vpop.permute.xlu0 %5132
        %5136 = vset.pattern.permute.xlu0 2
        %5137 = vperm.xlu0 %5136, %v1084
        %v5138 = vpop.permute.xlu0 %5137
        %5141 = vset.pattern.permute.xlu0 2
        %5142 = vperm.xlu0 %5141, %v1085
        %v5143 = vpop.permute.xlu0 %5142
        %5146 = vset.pattern.permute.xlu0 2
        %5147 = vperm.xlu0 %5146, %v1086
        %v5148 = vpop.permute.xlu0 %5147
        %5151 = vset.pattern.permute.xlu0 2
        %5152 = vperm.xlu0 %5151, %v1087
        %v5153 = vpop.permute.xlu0 %5152
        %5156 = vset.pattern.permute.xlu0 2
        %5157 = vperm.xlu0 %5156, %v1088
        %v5158 = vpop.permute.xlu0 %5157
        %5161 = vset.pattern.permute.xlu0 2
        %5162 = vperm.xlu0 %5161, %v1089
        %v5163 = vpop.permute.xlu0 %5162
        %5166 = vset.pattern.permute.xlu0 2
        %5167 = vperm.xlu0 %5166, %v1090
        %v5168 = vpop.permute.xlu0 %5167
        %5171 = vset.pattern.permute.xlu0 2
        %5172 = vperm.xlu0 %5171, %v1091
        %v5173 = vpop.permute.xlu0 %5172
        %5176 = vset.pattern.permute.xlu0 2
        %5177 = vperm.xlu0 %5176, %v1092
        %v5178 = vpop.permute.xlu0 %5177
        %5181 = vset.pattern.permute.xlu0 2
        %5182 = vperm.xlu0 %5181, %v1093
        %v5183 = vpop.permute.xlu0 %5182
        %5186 = vset.pattern.permute.xlu0 2
        %5187 = vperm.xlu0 %5186, %v1094
        %v5188 = vpop.permute.xlu0 %5187
        %5191 = vset.pattern.permute.xlu0 2
        %5192 = vperm.xlu0 %5191, %v1095
        %v5193 = vpop.permute.xlu0 %5192
        %5196 = vset.pattern.permute.xlu0 2
        %5197 = vperm.xlu0 %5196, %v1096
        %v5198 = vpop.permute.xlu0 %5197
        %5201 = vset.pattern.permute.xlu0 2
        %5202 = vperm.xlu0 %5201, %v1097
        %v5203 = vpop.permute.xlu0 %5202
        %5206 = vset.pattern.permute.xlu0 2
        %5207 = vperm.xlu0 %5206, %v1098
        %v5208 = vpop.permute.xlu0 %5207
        %5211 = vset.pattern.permute.xlu0 2
        %5212 = vperm.xlu0 %5211, %v1099
        %v5213 = vpop.permute.xlu0 %5212
        %5216 = vset.pattern.permute.xlu0 2
        %5217 = vperm.xlu0 %5216, %v1100
        %v5218 = vpop.permute.xlu0 %5217
        %5221 = vset.pattern.permute.xlu0 2
        %5222 = vperm.xlu0 %5221, %v1101
        %v5223 = vpop.permute.xlu0 %5222
        %5226 = vset.pattern.permute.xlu0 2
        %5227 = vperm.xlu0 %5226, %v1102
        %v5228 = vpop.permute.xlu0 %5227
        %5231 = vset.pattern.permute.xlu0 2
        %5232 = vperm.xlu0 %5231, %v1103
        %v5233 = vpop.permute.xlu0 %5232
        %5236 = vset.pattern.permute.xlu0 2
        %5237 = vperm.xlu0 %5236, %v1104
        %v5238 = vpop.permute.xlu0 %5237
        %5241 = vset.pattern.permute.xlu0 2
        %5242 = vperm.xlu0 %5241, %v1105
        %v5243 = vpop.permute.xlu0 %5242
        %5246 = vset.pattern.permute.xlu0 2
        %5247 = vperm.xlu0 %5246, %v1106
        %v5248 = vpop.permute.xlu0 %5247
        %5251 = vset.pattern.permute.xlu0 2
        %5252 = vperm.xlu0 %5251, %v1107
        %v5253 = vpop.permute.xlu0 %5252
        %5256 = vset.pattern.permute.xlu0 2
        %5257 = vperm.xlu0 %5256, %v1108
        %v5258 = vpop.permute.xlu0 %5257
        %5261 = vset.pattern.permute.xlu0 2
        %5262 = vperm.xlu0 %5261, %v1109
        %v5263 = vpop.permute.xlu0 %5262
        %5266 = vset.pattern.permute.xlu0 2
        %5267 = vperm.xlu0 %5266, %v1110
        %v5268 = vpop.permute.xlu0 %5267
        %5271 = vset.pattern.permute.xlu0 2
        %5272 = vperm.xlu0 %5271, %v1111
        %v5273 = vpop.permute.xlu0 %5272
        %5276 = vset.pattern.permute.xlu0 2
        %5277 = vperm.xlu0 %5276, %v1112
        %v5278 = vpop.permute.xlu0 %5277
        %5281 = vset.pattern.permute.xlu0 2
        %5282 = vperm.xlu0 %5281, %v1113
        %v5283 = vpop.permute.xlu0 %5282
        %5286 = vset.pattern.permute.xlu0 2
        %5287 = vperm.xlu0 %5286, %v1114
        %v5288 = vpop.permute.xlu0 %5287
        %5291 = vset.pattern.permute.xlu0 2
        %5292 = vperm.xlu0 %5291, %v1115
        %v5293 = vpop.permute.xlu0 %5292
        %5296 = vset.pattern.permute.xlu0 2
        %5297 = vperm.xlu0 %5296, %v1116
        %v5298 = vpop.permute.xlu0 %5297
        %5301 = vset.pattern.permute.xlu0 2
        %5302 = vperm.xlu0 %5301, %v1117
        %v5303 = vpop.permute.xlu0 %5302
        %v5305 = vmul.f32 %v4668, %v2712
        %v5306 = vmul.f32 %v4673, %v2715
        %v5307 = vmul.f32 %v4678, %v2718
        %v5308 = vmul.f32 %v4683, %v2721
        %v5309 = vmul.f32 %v4688, %v2724
        %v5310 = vmul.f32 %v4693, %v2727
        %v5311 = vmul.f32 %v4698, %v2730
        %v5312 = vmul.f32 %v4703, %v2733
        %v5313 = vmul.f32 %v4708, %v2736
        %v5314 = vmul.f32 %v4713, %v2739
        %v5315 = vmul.f32 %v4718, %v2742
        %v5316 = vmul.f32 %v4723, %v2745
        %v5317 = vmul.f32 %v4728, %v2748
        %v5318 = vmul.f32 %v4733, %v2751
        %v5319 = vmul.f32 %v4738, %v2754
        %v5320 = vmul.f32 %v4743, %v2757
        %v5321 = vmul.f32 %v4748, %v2760
        %v5322 = vmul.f32 %v4753, %v2763
        %v5323 = vmul.f32 %v4758, %v2766
        %v5324 = vmul.f32 %v4763, %v2769
        %v5325 = vmul.f32 %v4768, %v2772
        %v5326 = vmul.f32 %v4773, %v2775
        %v5327 = vmul.f32 %v4778, %v2778
        %v5328 = vmul.f32 %v4783, %v2781
        %v5329 = vmul.f32 %v4788, %v2784
        %v5330 = vmul.f32 %v4793, %v2787
        %v5331 = vmul.f32 %v4798, %v2790
        %v5332 = vmul.f32 %v4803, %v2793
        %v5333 = vmul.f32 %v4808, %v2796
        %v5334 = vmul.f32 %v4813, %v2799
        %v5335 = vmul.f32 %v4818, %v2802
        %v5336 = vmul.f32 %v4823, %v2805
        %v5337 = vmul.f32 %v4828, %v2808
        %v5338 = vmul.f32 %v4833, %v2811
        %v5339 = vmul.f32 %v4838, %v2814
        %v5340 = vmul.f32 %v4843, %v2817
        %v5341 = vmul.f32 %v4848, %v2820
        %v5342 = vmul.f32 %v4853, %v2823
        %v5343 = vmul.f32 %v4858, %v2826
        %v5344 = vmul.f32 %v4863, %v2829
        %v5345 = vmul.f32 %v4868, %v2832
        %v5346 = vmul.f32 %v4873, %v2835
        %v5347 = vmul.f32 %v4878, %v2838
        %v5348 = vmul.f32 %v4883, %v2841
        %v5349 = vmul.f32 %v4888, %v2844
        %v5350 = vmul.f32 %v4893, %v2847
        %v5351 = vmul.f32 %v4898, %v2850
        %v5352 = vmul.f32 %v4903, %v2853
        %v5353 = vmul.f32 %v4908, %v2856
        %v5354 = vmul.f32 %v4913, %v2859
        %v5355 = vmul.f32 %v4918, %v2862
        %v5356 = vmul.f32 %v4923, %v2865
        %v5357 = vmul.f32 %v4928, %v2868
        %v5358 = vmul.f32 %v4933, %v2871
        %v5359 = vmul.f32 %v4938, %v2874
        %v5360 = vmul.f32 %v4943, %v2877
        %v5361 = vmul.f32 %v4948, %v2880
        %v5362 = vmul.f32 %v4953, %v2883
        %v5363 = vmul.f32 %v4958, %v2886
        %v5364 = vmul.f32 %v4963, %v2889
        %v5365 = vmul.f32 %v4968, %v2892
        %v5366 = vmul.f32 %v4973, %v2895
        %v5367 = vmul.f32 %v4978, %v2898
        %v5368 = vmul.f32 %v4983, %v2901
        %v5369 = vmul.f32 %v4988, %v2904
        %v5370 = vmul.f32 %v4993, %v2907
        %v5371 = vmul.f32 %v4998, %v2910
        %v5372 = vmul.f32 %v5003, %v2913
        %v5373 = vmul.f32 %v5008, %v2916
        %v5374 = vmul.f32 %v5013, %v2919
        %v5375 = vmul.f32 %v5018, %v2922
        %v5376 = vmul.f32 %v5023, %v2925
        %v5377 = vmul.f32 %v5028, %v2928
        %v5378 = vmul.f32 %v5033, %v2931
        %v5379 = vmul.f32 %v5038, %v2934
        %v5380 = vmul.f32 %v5043, %v2937
        %v5381 = vmul.f32 %v5048, %v2940
        %v5382 = vmul.f32 %v5053, %v2943
        %v5383 = vmul.f32 %v5058, %v2946
        %v5384 = vmul.f32 %v5063, %v2949
        %v5385 = vmul.f32 %v5068, %v2952
        %v5386 = vmul.f32 %v5073, %v2955
        %v5387 = vmul.f32 %v5078, %v2958
        %v5388 = vmul.f32 %v5083, %v2961
        %v5389 = vmul.f32 %v5088, %v2964
        %v5390 = vmul.f32 %v5093, %v2967
        %v5391 = vmul.f32 %v5098, %v2970
        %v5392 = vmul.f32 %v5103, %v2973
        %v5393 = vmul.f32 %v5108, %v2976
        %v5394 = vmul.f32 %v5113, %v2979
        %v5395 = vmul.f32 %v5118, %v2982
        %v5396 = vmul.f32 %v5123, %v2985
        %v5397 = vmul.f32 %v5128, %v2988
        %v5398 = vmul.f32 %v5133, %v2991
        %v5399 = vmul.f32 %v5138, %v2994
        %v5400 = vmul.f32 %v5143, %v2997
        %v5401 = vmul.f32 %v5148, %v3000
        %v5402 = vmul.f32 %v5153, %v3003
        %v5403 = vmul.f32 %v5158, %v3006
        %v5404 = vmul.f32 %v5163, %v3009
        %v5405 = vmul.f32 %v5168, %v3012
        %v5406 = vmul.f32 %v5173, %v3015
        %v5407 = vmul.f32 %v5178, %v3018
        %v5408 = vmul.f32 %v5183, %v3021
        %v5409 = vmul.f32 %v5188, %v3024
        %v5410 = vmul.f32 %v5193, %v3027
        %v5411 = vmul.f32 %v5198, %v3030
        %v5412 = vmul.f32 %v5203, %v3033
        %v5413 = vmul.f32 %v5208, %v3036
        %v5414 = vmul.f32 %v5213, %v3039
        %v5415 = vmul.f32 %v5218, %v3042
        %v5416 = vmul.f32 %v5223, %v3045
        %v5417 = vmul.f32 %v5228, %v3048
        %v5418 = vmul.f32 %v5233, %v3051
        %v5419 = vmul.f32 %v5238, %v3054
        %v5420 = vmul.f32 %v5243, %v3057
        %v5421 = vmul.f32 %v5248, %v3060
        %v5422 = vmul.f32 %v5253, %v3063
        %v5423 = vmul.f32 %v5258, %v3066
        %v5424 = vmul.f32 %v5263, %v3069
        %v5425 = vmul.f32 %v5268, %v3072
        %v5426 = vmul.f32 %v5273, %v3075
        %v5427 = vmul.f32 %v5278, %v3078
        %v5428 = vmul.f32 %v5283, %v3081
        %v5429 = vmul.f32 %v5288, %v3084
        %v5430 = vmul.f32 %v5293, %v3087
        %v5431 = vmul.f32 %v5298, %v3090
        %v5432 = vmul.f32 %v5303, %v3093
        %v5433 = vadd.f32 %v4537, %v5305
        %v5434 = vadd.f32 %v4538, %v5306
        %v5435 = vadd.f32 %v4539, %v5307
        %v5436 = vadd.f32 %v4540, %v5308
        %v5437 = vadd.f32 %v4541, %v5309
        %v5438 = vadd.f32 %v4542, %v5310
        %v5439 = vadd.f32 %v4543, %v5311
        %v5440 = vadd.f32 %v4544, %v5312
        %v5441 = vadd.f32 %v4545, %v5313
        %v5442 = vadd.f32 %v4546, %v5314
        %v5443 = vadd.f32 %v4547, %v5315
        %v5444 = vadd.f32 %v4548, %v5316
        %v5445 = vadd.f32 %v4549, %v5317
        %v5446 = vadd.f32 %v4550, %v5318
        %v5447 = vadd.f32 %v4551, %v5319
        %v5448 = vadd.f32 %v4552, %v5320
        %v5449 = vadd.f32 %v4553, %v5321
        %v5450 = vadd.f32 %v4554, %v5322
        %v5451 = vadd.f32 %v4555, %v5323
        %v5452 = vadd.f32 %v4556, %v5324
        %v5453 = vadd.f32 %v4557, %v5325
        %v5454 = vadd.f32 %v4558, %v5326
        %v5455 = vadd.f32 %v4559, %v5327
        %v5456 = vadd.f32 %v4560, %v5328
        %v5457 = vadd.f32 %v4561, %v5329
        %v5458 = vadd.f32 %v4562, %v5330
        %v5459 = vadd.f32 %v4563, %v5331
        %v5460 = vadd.f32 %v4564, %v5332
        %v5461 = vadd.f32 %v4565, %v5333
        %v5462 = vadd.f32 %v4566, %v5334
        %v5463 = vadd.f32 %v4567, %v5335
        %v5464 = vadd.f32 %v4568, %v5336
        %v5465 = vadd.f32 %v4569, %v5337
        %v5466 = vadd.f32 %v4570, %v5338
        %v5467 = vadd.f32 %v4571, %v5339
        %v5468 = vadd.f32 %v4572, %v5340
        %v5469 = vadd.f32 %v4573, %v5341
        %v5470 = vadd.f32 %v4574, %v5342
        %v5471 = vadd.f32 %v4575, %v5343
        %v5472 = vadd.f32 %v4576, %v5344
        %v5473 = vadd.f32 %v4577, %v5345
        %v5474 = vadd.f32 %v4578, %v5346
        %v5475 = vadd.f32 %v4579, %v5347
        %v5476 = vadd.f32 %v4580, %v5348
        %v5477 = vadd.f32 %v4581, %v5349
        %v5478 = vadd.f32 %v4582, %v5350
        %v5479 = vadd.f32 %v4583, %v5351
        %v5480 = vadd.f32 %v4584, %v5352
        %v5481 = vadd.f32 %v4585, %v5353
        %v5482 = vadd.f32 %v4586, %v5354
        %v5483 = vadd.f32 %v4587, %v5355
        %v5484 = vadd.f32 %v4588, %v5356
        %v5485 = vadd.f32 %v4589, %v5357
        %v5486 = vadd.f32 %v4590, %v5358
        %v5487 = vadd.f32 %v4591, %v5359
        %v5488 = vadd.f32 %v4592, %v5360
        %v5489 = vadd.f32 %v4593, %v5361
        %v5490 = vadd.f32 %v4594, %v5362
        %v5491 = vadd.f32 %v4595, %v5363
        %v5492 = vadd.f32 %v4596, %v5364
        %v5493 = vadd.f32 %v4597, %v5365
        %v5494 = vadd.f32 %v4598, %v5366
        %v5495 = vadd.f32 %v4599, %v5367
        %v5496 = vadd.f32 %v4600, %v5368
        %v5497 = vadd.f32 %v4601, %v5369
        %v5498 = vadd.f32 %v4602, %v5370
        %v5499 = vadd.f32 %v4603, %v5371
        %v5500 = vadd.f32 %v4604, %v5372
        %v5501 = vadd.f32 %v4605, %v5373
        %v5502 = vadd.f32 %v4606, %v5374
        %v5503 = vadd.f32 %v4607, %v5375
        %v5504 = vadd.f32 %v4608, %v5376
        %v5505 = vadd.f32 %v4609, %v5377
        %v5506 = vadd.f32 %v4610, %v5378
        %v5507 = vadd.f32 %v4611, %v5379
        %v5508 = vadd.f32 %v4612, %v5380
        %v5509 = vadd.f32 %v4613, %v5381
        %v5510 = vadd.f32 %v4614, %v5382
        %v5511 = vadd.f32 %v4615, %v5383
        %v5512 = vadd.f32 %v4616, %v5384
        %v5513 = vadd.f32 %v4617, %v5385
        %v5514 = vadd.f32 %v4618, %v5386
        %v5515 = vadd.f32 %v4619, %v5387
        %v5516 = vadd.f32 %v4620, %v5388
        %v5517 = vadd.f32 %v4621, %v5389
        %v5518 = vadd.f32 %v4622, %v5390
        %v5519 = vadd.f32 %v4623, %v5391
        %v5520 = vadd.f32 %v4624, %v5392
        %v5521 = vadd.f32 %v4625, %v5393
        %v5522 = vadd.f32 %v4626, %v5394
        %v5523 = vadd.f32 %v4627, %v5395
        %v5524 = vadd.f32 %v4628, %v5396
        %v5525 = vadd.f32 %v4629, %v5397
        %v5526 = vadd.f32 %v4630, %v5398
        %v5527 = vadd.f32 %v4631, %v5399
        %v5528 = vadd.f32 %v4632, %v5400
        %v5529 = vadd.f32 %v4633, %v5401
        %v5530 = vadd.f32 %v4634, %v5402
        %v5531 = vadd.f32 %v4635, %v5403
        %v5532 = vadd.f32 %v4636, %v5404
        %v5533 = vadd.f32 %v4637, %v5405
        %v5534 = vadd.f32 %v4638, %v5406
        %v5535 = vadd.f32 %v4639, %v5407
        %v5536 = vadd.f32 %v4640, %v5408
        %v5537 = vadd.f32 %v4641, %v5409
        %v5538 = vadd.f32 %v4642, %v5410
        %v5539 = vadd.f32 %v4643, %v5411
        %v5540 = vadd.f32 %v4644, %v5412
        %v5541 = vadd.f32 %v4645, %v5413
        %v5542 = vadd.f32 %v4646, %v5414
        %v5543 = vadd.f32 %v4647, %v5415
        %v5544 = vadd.f32 %v4648, %v5416
        %v5545 = vadd.f32 %v4649, %v5417
        %v5546 = vadd.f32 %v4650, %v5418
        %v5547 = vadd.f32 %v4651, %v5419
        %v5548 = vadd.f32 %v4652, %v5420
        %v5549 = vadd.f32 %v4653, %v5421
        %v5550 = vadd.f32 %v4654, %v5422
        %v5551 = vadd.f32 %v4655, %v5423
        %v5552 = vadd.f32 %v4656, %v5424
        %v5553 = vadd.f32 %v4657, %v5425
        %v5554 = vadd.f32 %v4658, %v5426
        %v5555 = vadd.f32 %v4659, %v5427
        %v5556 = vadd.f32 %v4660, %v5428
        %v5557 = vadd.f32 %v4661, %v5429
        %v5558 = vadd.f32 %v4662, %v5430
        %v5559 = vadd.f32 %v4663, %v5431
        %v5560 = vadd.f32 %v4664, %v5432
        %v5561 = vsub.f32 %v5433, %v3113
        %v5562 = vsub.f32 %v5434, %v3116
        %v5563 = vsub.f32 %v5435, %v3119
        %v5564 = vsub.f32 %v5436, %v3122
        %v5565 = vsub.f32 %v5437, %v3125
        %v5566 = vsub.f32 %v5438, %v3128
        %v5567 = vsub.f32 %v5439, %v3131
        %v5568 = vsub.f32 %v5440, %v3134
        %v5569 = vsub.f32 %v5441, %v3137
        %v5570 = vsub.f32 %v5442, %v3140
        %v5571 = vsub.f32 %v5443, %v3143
        %v5572 = vsub.f32 %v5444, %v3146
        %v5573 = vsub.f32 %v5445, %v3149
        %v5574 = vsub.f32 %v5446, %v3152
        %v5575 = vsub.f32 %v5447, %v3155
        %v5576 = vsub.f32 %v5448, %v3158
        %v5577 = vsub.f32 %v5449, %v3161
        %v5578 = vsub.f32 %v5450, %v3164
        %v5579 = vsub.f32 %v5451, %v3167
        %v5580 = vsub.f32 %v5452, %v3170
        %v5581 = vsub.f32 %v5453, %v3173
        %v5582 = vsub.f32 %v5454, %v3176
        %v5583 = vsub.f32 %v5455, %v3179
        %v5584 = vsub.f32 %v5456, %v3182
        %v5585 = vsub.f32 %v5457, %v3185
        %v5586 = vsub.f32 %v5458, %v3188
        %v5587 = vsub.f32 %v5459, %v3191
        %v5588 = vsub.f32 %v5460, %v3194
        %v5589 = vsub.f32 %v5461, %v3197
        %v5590 = vsub.f32 %v5462, %v3200
        %v5591 = vsub.f32 %v5463, %v3203
        %v5592 = vsub.f32 %v5464, %v3206
        %v5593 = vsub.f32 %v5465, %v3209
        %v5594 = vsub.f32 %v5466, %v3212
        %v5595 = vsub.f32 %v5467, %v3215
        %v5596 = vsub.f32 %v5468, %v3218
        %v5597 = vsub.f32 %v5469, %v3221
        %v5598 = vsub.f32 %v5470, %v3224
        %v5599 = vsub.f32 %v5471, %v3227
        %v5600 = vsub.f32 %v5472, %v3230
        %v5601 = vsub.f32 %v5473, %v3233
        %v5602 = vsub.f32 %v5474, %v3236
        %v5603 = vsub.f32 %v5475, %v3239
        %v5604 = vsub.f32 %v5476, %v3242
        %v5605 = vsub.f32 %v5477, %v3245
        %v5606 = vsub.f32 %v5478, %v3248
        %v5607 = vsub.f32 %v5479, %v3251
        %v5608 = vsub.f32 %v5480, %v3254
        %v5609 = vsub.f32 %v5481, %v3257
        %v5610 = vsub.f32 %v5482, %v3260
        %v5611 = vsub.f32 %v5483, %v3263
        %v5612 = vsub.f32 %v5484, %v3266
        %v5613 = vsub.f32 %v5485, %v3269
        %v5614 = vsub.f32 %v5486, %v3272
        %v5615 = vsub.f32 %v5487, %v3275
        %v5616 = vsub.f32 %v5488, %v3278
        %v5617 = vsub.f32 %v5489, %v3281
        %v5618 = vsub.f32 %v5490, %v3284
        %v5619 = vsub.f32 %v5491, %v3287
        %v5620 = vsub.f32 %v5492, %v3290
        %v5621 = vsub.f32 %v5493, %v3293
        %v5622 = vsub.f32 %v5494, %v3296
        %v5623 = vsub.f32 %v5495, %v3299
        %v5624 = vsub.f32 %v5496, %v3302
        %v5625 = vsub.f32 %v5497, %v3305
        %v5626 = vsub.f32 %v5498, %v3308
        %v5627 = vsub.f32 %v5499, %v3311
        %v5628 = vsub.f32 %v5500, %v3314
        %v5629 = vsub.f32 %v5501, %v3317
        %v5630 = vsub.f32 %v5502, %v3320
        %v5631 = vsub.f32 %v5503, %v3323
        %v5632 = vsub.f32 %v5504, %v3326
        %v5633 = vsub.f32 %v5505, %v3329
        %v5634 = vsub.f32 %v5506, %v3332
        %v5635 = vsub.f32 %v5507, %v3335
        %v5636 = vsub.f32 %v5508, %v3338
        %v5637 = vsub.f32 %v5509, %v3341
        %v5638 = vsub.f32 %v5510, %v3344
        %v5639 = vsub.f32 %v5511, %v3347
        %v5640 = vsub.f32 %v5512, %v3350
        %v5641 = vsub.f32 %v5513, %v3353
        %v5642 = vsub.f32 %v5514, %v3356
        %v5643 = vsub.f32 %v5515, %v3359
        %v5644 = vsub.f32 %v5516, %v3362
        %v5645 = vsub.f32 %v5517, %v3365
        %v5646 = vsub.f32 %v5518, %v3368
        %v5647 = vsub.f32 %v5519, %v3371
        %v5648 = vsub.f32 %v5520, %v3374
        %v5649 = vsub.f32 %v5521, %v3377
        %v5650 = vsub.f32 %v5522, %v3380
        %v5651 = vsub.f32 %v5523, %v3383
        %v5652 = vsub.f32 %v5524, %v3386
        %v5653 = vsub.f32 %v5525, %v3389
        %v5654 = vsub.f32 %v5526, %v3392
        %v5655 = vsub.f32 %v5527, %v3395
        %v5656 = vsub.f32 %v5528, %v3398
        %v5657 = vsub.f32 %v5529, %v3401
        %v5658 = vsub.f32 %v5530, %v3404
        %v5659 = vsub.f32 %v5531, %v3407
        %v5660 = vsub.f32 %v5532, %v3410
        %v5661 = vsub.f32 %v5533, %v3413
        %v5662 = vsub.f32 %v5534, %v3416
        %v5663 = vsub.f32 %v5535, %v3419
        %v5664 = vsub.f32 %v5536, %v3422
        %v5665 = vsub.f32 %v5537, %v3425
        %v5666 = vsub.f32 %v5538, %v3428
        %v5667 = vsub.f32 %v5539, %v3431
        %v5668 = vsub.f32 %v5540, %v3434
        %v5669 = vsub.f32 %v5541, %v3437
        %v5670 = vsub.f32 %v5542, %v3440
        %v5671 = vsub.f32 %v5543, %v3443
        %v5672 = vsub.f32 %v5544, %v3446
        %v5673 = vsub.f32 %v5545, %v3449
        %v5674 = vsub.f32 %v5546, %v3452
        %v5675 = vsub.f32 %v5547, %v3455
        %v5676 = vsub.f32 %v5548, %v3458
        %v5677 = vsub.f32 %v5549, %v3461
        %v5678 = vsub.f32 %v5550, %v3464
        %v5679 = vsub.f32 %v5551, %v3467
        %v5680 = vsub.f32 %v5552, %v3470
        %v5681 = vsub.f32 %v5553, %v3473
        %v5682 = vsub.f32 %v5554, %v3476
        %v5683 = vsub.f32 %v5555, %v3479
        %v5684 = vsub.f32 %v5556, %v3482
        %v5685 = vsub.f32 %v5557, %v3485
        %v5686 = vsub.f32 %v5558, %v3488
        %v5687 = vsub.f32 %v5559, %v3491
        %v5688 = vsub.f32 %v5560, %v3494
        %v5689 = vadd.f32 %v5561, %v3514
        %v5690 = vadd.f32 %v5562, %v3517
        %v5691 = vadd.f32 %v5563, %v3520
        %v5692 = vadd.f32 %v5564, %v3523
        %v5693 = vadd.f32 %v5565, %v3526
        %v5694 = vadd.f32 %v5566, %v3529
        %v5695 = vadd.f32 %v5567, %v3532
        %v5696 = vadd.f32 %v5568, %v3535
        %v5697 = vadd.f32 %v5569, %v3538
        %v5698 = vadd.f32 %v5570, %v3541
        %v5699 = vadd.f32 %v5571, %v3544
        %v5700 = vadd.f32 %v5572, %v3547
        %v5701 = vadd.f32 %v5573, %v3550
        %v5702 = vadd.f32 %v5574, %v3553
        %v5703 = vadd.f32 %v5575, %v3556
        %v5704 = vadd.f32 %v5576, %v3559
        %v5705 = vadd.f32 %v5577, %v3562
        %v5706 = vadd.f32 %v5578, %v3565
        %v5707 = vadd.f32 %v5579, %v3568
        %v5708 = vadd.f32 %v5580, %v3571
        %v5709 = vadd.f32 %v5581, %v3574
        %v5710 = vadd.f32 %v5582, %v3577
        %v5711 = vadd.f32 %v5583, %v3580
        %v5712 = vadd.f32 %v5584, %v3583
        %v5713 = vadd.f32 %v5585, %v3586
        %v5714 = vadd.f32 %v5586, %v3589
        %v5715 = vadd.f32 %v5587, %v3592
        %v5716 = vadd.f32 %v5588, %v3595
        %v5717 = vadd.f32 %v5589, %v3598
        %v5718 = vadd.f32 %v5590, %v3601
        %v5719 = vadd.f32 %v5591, %v3604
        %v5720 = vadd.f32 %v5592, %v3607
        %v5721 = vadd.f32 %v5593, %v3610
        %v5722 = vadd.f32 %v5594, %v3613
        %v5723 = vadd.f32 %v5595, %v3616
        %v5724 = vadd.f32 %v5596, %v3619
        %v5725 = vadd.f32 %v5597, %v3622
        %v5726 = vadd.f32 %v5598, %v3625
        %v5727 = vadd.f32 %v5599, %v3628
        %v5728 = vadd.f32 %v5600, %v3631
        %v5729 = vadd.f32 %v5601, %v3634
        %v5730 = vadd.f32 %v5602, %v3637
        %v5731 = vadd.f32 %v5603, %v3640
        %v5732 = vadd.f32 %v5604, %v3643
        %v5733 = vadd.f32 %v5605, %v3646
        %v5734 = vadd.f32 %v5606, %v3649
        %v5735 = vadd.f32 %v5607, %v3652
        %v5736 = vadd.f32 %v5608, %v3655
        %v5737 = vadd.f32 %v5609, %v3658
        %v5738 = vadd.f32 %v5610, %v3661
        %v5739 = vadd.f32 %v5611, %v3664
        %v5740 = vadd.f32 %v5612, %v3667
        %v5741 = vadd.f32 %v5613, %v3670
        %v5742 = vadd.f32 %v5614, %v3673
        %v5743 = vadd.f32 %v5615, %v3676
        %v5744 = vadd.f32 %v5616, %v3679
        %v5745 = vadd.f32 %v5617, %v3682
        %v5746 = vadd.f32 %v5618, %v3685
        %v5747 = vadd.f32 %v5619, %v3688
        %v5748 = vadd.f32 %v5620, %v3691
        %v5749 = vadd.f32 %v5621, %v3694
        %v5750 = vadd.f32 %v5622, %v3697
        %v5751 = vadd.f32 %v5623, %v3700
        %v5752 = vadd.f32 %v5624, %v3703
        %v5753 = vadd.f32 %v5625, %v3706
        %v5754 = vadd.f32 %v5626, %v3709
        %v5755 = vadd.f32 %v5627, %v3712
        %v5756 = vadd.f32 %v5628, %v3715
        %v5757 = vadd.f32 %v5629, %v3718
        %v5758 = vadd.f32 %v5630, %v3721
        %v5759 = vadd.f32 %v5631, %v3724
        %v5760 = vadd.f32 %v5632, %v3727
        %v5761 = vadd.f32 %v5633, %v3730
        %v5762 = vadd.f32 %v5634, %v3733
        %v5763 = vadd.f32 %v5635, %v3736
        %v5764 = vadd.f32 %v5636, %v3739
        %v5765 = vadd.f32 %v5637, %v3742
        %v5766 = vadd.f32 %v5638, %v3745
        %v5767 = vadd.f32 %v5639, %v3748
        %v5768 = vadd.f32 %v5640, %v3751
        %v5769 = vadd.f32 %v5641, %v3754
        %v5770 = vadd.f32 %v5642, %v3757
        %v5771 = vadd.f32 %v5643, %v3760
        %v5772 = vadd.f32 %v5644, %v3763
        %v5773 = vadd.f32 %v5645, %v3766
        %v5774 = vadd.f32 %v5646, %v3769
        %v5775 = vadd.f32 %v5647, %v3772
        %v5776 = vadd.f32 %v5648, %v3775
        %v5777 = vadd.f32 %v5649, %v3778
        %v5778 = vadd.f32 %v5650, %v3781
        %v5779 = vadd.f32 %v5651, %v3784
        %v5780 = vadd.f32 %v5652, %v3787
        %v5781 = vadd.f32 %v5653, %v3790
        %v5782 = vadd.f32 %v5654, %v3793
        %v5783 = vadd.f32 %v5655, %v3796
        %v5784 = vadd.f32 %v5656, %v3799
        %v5785 = vadd.f32 %v5657, %v3802
        %v5786 = vadd.f32 %v5658, %v3805
        %v5787 = vadd.f32 %v5659, %v3808
        %v5788 = vadd.f32 %v5660, %v3811
        %v5789 = vadd.f32 %v5661, %v3814
        %v5790 = vadd.f32 %v5662, %v3817
        %v5791 = vadd.f32 %v5663, %v3820
        %v5792 = vadd.f32 %v5664, %v3823
        %v5793 = vadd.f32 %v5665, %v3826
        %v5794 = vadd.f32 %v5666, %v3829
        %v5795 = vadd.f32 %v5667, %v3832
        %v5796 = vadd.f32 %v5668, %v3835
        %v5797 = vadd.f32 %v5669, %v3838
        %v5798 = vadd.f32 %v5670, %v3841
        %v5799 = vadd.f32 %v5671, %v3844
        %v5800 = vadd.f32 %v5672, %v3847
        %v5801 = vadd.f32 %v5673, %v3850
        %v5802 = vadd.f32 %v5674, %v3853
        %v5803 = vadd.f32 %v5675, %v3856
        %v5804 = vadd.f32 %v5676, %v3859
        %v5805 = vadd.f32 %v5677, %v3862
        %v5806 = vadd.f32 %v5678, %v3865
        %v5807 = vadd.f32 %v5679, %v3868
        %v5808 = vadd.f32 %v5680, %v3871
        %v5809 = vadd.f32 %v5681, %v3874
        %v5810 = vadd.f32 %v5682, %v3877
        %v5811 = vadd.f32 %v5683, %v3880
        %v5812 = vadd.f32 %v5684, %v3883
        %v5813 = vadd.f32 %v5685, %v3886
        %v5814 = vadd.f32 %v5686, %v3889
        %v5815 = vadd.f32 %v5687, %v3892
        %v5816 = vadd.f32 %v5688, %v3895
        %5817 = vst [vmem:[%s178] sm:$0xff] %v5689
        %5818 = vst [vmem:[%s178 + $0x8] sm:$0xff] %v5690
        %5819 = vst [vmem:[%s178 + $0x10] sm:$0xff] %v5691
        %5820 = vst [vmem:[%s178 + $0x18] sm:$0xff] %v5692
        %5821 = vst [vmem:[%s178 + $0x20] sm:$0xff] %v5693
        %5822 = vst [vmem:[%s178 + $0x28] sm:$0xff] %v5694
        %5823 = vst [vmem:[%s178 + $0x30] sm:$0xff] %v5695
        %5824 = vst [vmem:[%s178 + $0x38] sm:$0xff] %v5696
        %5825 = vst [vmem:[%s178 + $0x40] sm:$0xff] %v5697
        %5826 = vst [vmem:[%s178 + $0x48] sm:$0xff] %v5698
        %5827 = vst [vmem:[%s178 + $0x50] sm:$0xff] %v5699
        %5828 = vst [vmem:[%s178 + $0x58] sm:$0xff] %v5700
        %5829 = vst [vmem:[%s178 + $0x60] sm:$0xff] %v5701
        %5830 = vst [vmem:[%s178 + $0x68] sm:$0xff] %v5702
        %5831 = vst [vmem:[%s178 + $0x70] sm:$0xff] %v5703
        %5832 = vst [vmem:[%s178 + $0x78] sm:$0xff] %v5704
        %5833 = vst [vmem:[%s178 + $0x80] sm:$0xff] %v5705
        %5834 = vst [vmem:[%s178 + $0x88] sm:$0xff] %v5706
        %5835 = vst [vmem:[%s178 + $0x90] sm:$0xff] %v5707
        %5836 = vst [vmem:[%s178 + $0x98] sm:$0xff] %v5708
        %5837 = vst [vmem:[%s178 + $0xa0] sm:$0xff] %v5709
        %5838 = vst [vmem:[%s178 + $0xa8] sm:$0xff] %v5710
        %5839 = vst [vmem:[%s178 + $0xb0] sm:$0xff] %v5711
        %5840 = vst [vmem:[%s178 + $0xb8] sm:$0xff] %v5712
        %5841 = vst [vmem:[%s178 + $0xc0] sm:$0xff] %v5713
        %5842 = vst [vmem:[%s178 + $0xc8] sm:$0xff] %v5714
        %5843 = vst [vmem:[%s178 + $0xd0] sm:$0xff] %v5715
        %5844 = vst [vmem:[%s178 + $0xd8] sm:$0xff] %v5716
        %5845 = vst [vmem:[%s178 + $0xe0] sm:$0xff] %v5717
        %5846 = vst [vmem:[%s178 + $0xe8] sm:$0xff] %v5718
        %5847 = vst [vmem:[%s178 + $0xf0] sm:$0xff] %v5719
        %5848 = vst [vmem:[%s178 + $0xf8] sm:$0xff] %v5720
        %5849 = vst [vmem:[%s178 + $0x100] sm:$0xff] %v5721
        %5850 = vst [vmem:[%s178 + $0x108] sm:$0xff] %v5722
        %5851 = vst [vmem:[%s178 + $0x110] sm:$0xff] %v5723
        %5852 = vst [vmem:[%s178 + $0x118] sm:$0xff] %v5724
        %5853 = vst [vmem:[%s178 + $0x120] sm:$0xff] %v5725
        %5854 = vst [vmem:[%s178 + $0x128] sm:$0xff] %v5726
        %5855 = vst [vmem:[%s178 + $0x130] sm:$0xff] %v5727
        %5856 = vst [vmem:[%s178 + $0x138] sm:$0xff] %v5728
        %5857 = vst [vmem:[%s178 + $0x140] sm:$0xff] %v5729
        %5858 = vst [vmem:[%s178 + $0x148] sm:$0xff] %v5730
        %5859 = vst [vmem:[%s178 + $0x150] sm:$0xff] %v5731
        %5860 = vst [vmem:[%s178 + $0x158] sm:$0xff] %v5732
        %5861 = vst [vmem:[%s178 + $0x160] sm:$0xff] %v5733
        %5862 = vst [vmem:[%s178 + $0x168] sm:$0xff] %v5734
        %5863 = vst [vmem:[%s178 + $0x170] sm:$0xff] %v5735
        %5864 = vst [vmem:[%s178 + $0x178] sm:$0xff] %v5736
        %5865 = vst [vmem:[%s178 + $0x180] sm:$0xff] %v5737
        %5866 = vst [vmem:[%s178 + $0x188] sm:$0xff] %v5738
        %5867 = vst [vmem:[%s178 + $0x190] sm:$0xff] %v5739
        %5868 = vst [vmem:[%s178 + $0x198] sm:$0xff] %v5740
        %5869 = vst [vmem:[%s178 + $0x1a0] sm:$0xff] %v5741
        %5870 = vst [vmem:[%s178 + $0x1a8] sm:$0xff] %v5742
        %5871 = vst [vmem:[%s178 + $0x1b0] sm:$0xff] %v5743
        %5872 = vst [vmem:[%s178 + $0x1b8] sm:$0xff] %v5744
        %5873 = vst [vmem:[%s178 + $0x1c0] sm:$0xff] %v5745
        %5874 = vst [vmem:[%s178 + $0x1c8] sm:$0xff] %v5746
        %5875 = vst [vmem:[%s178 + $0x1d0] sm:$0xff] %v5747
        %5876 = vst [vmem:[%s178 + $0x1d8] sm:$0xff] %v5748
        %5877 = vst [vmem:[%s178 + $0x1e0] sm:$0xff] %v5749
        %5878 = vst [vmem:[%s178 + $0x1e8] sm:$0xff] %v5750
        %5879 = vst [vmem:[%s178 + $0x1f0] sm:$0xff] %v5751
        %5880 = vst [vmem:[%s178 + $0x1f8] sm:$0xff] %v5752
        %5881 = vst [vmem:[%s178 + $0x200] sm:$0xff] %v5753
        %5882 = vst [vmem:[%s178 + $0x208] sm:$0xff] %v5754
        %5883 = vst [vmem:[%s178 + $0x210] sm:$0xff] %v5755
        %5884 = vst [vmem:[%s178 + $0x218] sm:$0xff] %v5756
        %5885 = vst [vmem:[%s178 + $0x220] sm:$0xff] %v5757
        %5886 = vst [vmem:[%s178 + $0x228] sm:$0xff] %v5758
        %5887 = vst [vmem:[%s178 + $0x230] sm:$0xff] %v5759
        %5888 = vst [vmem:[%s178 + $0x238] sm:$0xff] %v5760
        %5889 = vst [vmem:[%s178 + $0x240] sm:$0xff] %v5761
        %5890 = vst [vmem:[%s178 + $0x248] sm:$0xff] %v5762
        %5891 = vst [vmem:[%s178 + $0x250] sm:$0xff] %v5763
        %5892 = vst [vmem:[%s178 + $0x258] sm:$0xff] %v5764
        %5893 = vst [vmem:[%s178 + $0x260] sm:$0xff] %v5765
        %5894 = vst [vmem:[%s178 + $0x268] sm:$0xff] %v5766
        %5895 = vst [vmem:[%s178 + $0x270] sm:$0xff] %v5767
        %5896 = vst [vmem:[%s178 + $0x278] sm:$0xff] %v5768
        %5897 = vst [vmem:[%s178 + $0x280] sm:$0xff] %v5769
        %5898 = vst [vmem:[%s178 + $0x288] sm:$0xff] %v5770
        %5899 = vst [vmem:[%s178 + $0x290] sm:$0xff] %v5771
        %5900 = vst [vmem:[%s178 + $0x298] sm:$0xff] %v5772
        %5901 = vst [vmem:[%s178 + $0x2a0] sm:$0xff] %v5773
        %5902 = vst [vmem:[%s178 + $0x2a8] sm:$0xff] %v5774
        %5903 = vst [vmem:[%s178 + $0x2b0] sm:$0xff] %v5775
        %5904 = vst [vmem:[%s178 + $0x2b8] sm:$0xff] %v5776
        %5905 = vst [vmem:[%s178 + $0x2c0] sm:$0xff] %v5777
        %5906 = vst [vmem:[%s178 + $0x2c8] sm:$0xff] %v5778
        %5907 = vst [vmem:[%s178 + $0x2d0] sm:$0xff] %v5779
        %5908 = vst [vmem:[%s178 + $0x2d8] sm:$0xff] %v5780
        %5909 = vst [vmem:[%s178 + $0x2e0] sm:$0xff] %v5781
        %5910 = vst [vmem:[%s178 + $0x2e8] sm:$0xff] %v5782
        %5911 = vst [vmem:[%s178 + $0x2f0] sm:$0xff] %v5783
        %5912 = vst [vmem:[%s178 + $0x2f8] sm:$0xff] %v5784
        %5913 = vst [vmem:[%s178 + $0x300] sm:$0xff] %v5785
        %5914 = vst [vmem:[%s178 + $0x308] sm:$0xff] %v5786
        %5915 = vst [vmem:[%s178 + $0x310] sm:$0xff] %v5787
        %5916 = vst [vmem:[%s178 + $0x318] sm:$0xff] %v5788
        %5917 = vst [vmem:[%s178 + $0x320] sm:$0xff] %v5789
        %5918 = vst [vmem:[%s178 + $0x328] sm:$0xff] %v5790
        %5919 = vst [vmem:[%s178 + $0x330] sm:$0xff] %v5791
        %5920 = vst [vmem:[%s178 + $0x338] sm:$0xff] %v5792
        %5921 = vst [vmem:[%s178 + $0x340] sm:$0xff] %v5793
        %5922 = vst [vmem:[%s178 + $0x348] sm:$0xff] %v5794
        %5923 = vst [vmem:[%s178 + $0x350] sm:$0xff] %v5795
        %5924 = vst [vmem:[%s178 + $0x358] sm:$0xff] %v5796
        %5925 = vst [vmem:[%s178 + $0x360] sm:$0xff] %v5797
        %5926 = vst [vmem:[%s178 + $0x368] sm:$0xff] %v5798
        %5927 = vst [vmem:[%s178 + $0x370] sm:$0xff] %v5799
        %5928 = vst [vmem:[%s178 + $0x378] sm:$0xff] %v5800
        %5929 = vst [vmem:[%s178 + $0x380] sm:$0xff] %v5801
        %5930 = vst [vmem:[%s178 + $0x388] sm:$0xff] %v5802
        %5931 = vst [vmem:[%s178 + $0x390] sm:$0xff] %v5803
        %5932 = vst [vmem:[%s178 + $0x398] sm:$0xff] %v5804
        %5933 = vst [vmem:[%s178 + $0x3a0] sm:$0xff] %v5805
        %5934 = vst [vmem:[%s178 + $0x3a8] sm:$0xff] %v5806
        %5935 = vst [vmem:[%s178 + $0x3b0] sm:$0xff] %v5807
        %5936 = vst [vmem:[%s178 + $0x3b8] sm:$0xff] %v5808
        %5937 = vst [vmem:[%s178 + $0x3c0] sm:$0xff] %v5809
        %5938 = vst [vmem:[%s178 + $0x3c8] sm:$0xff] %v5810
        %5939 = vst [vmem:[%s178 + $0x3d0] sm:$0xff] %v5811
        %5940 = vst [vmem:[%s178 + $0x3d8] sm:$0xff] %v5812
        %5941 = vst [vmem:[%s178 + $0x3e0] sm:$0xff] %v5813
        %5942 = vst [vmem:[%s178 + $0x3e8] sm:$0xff] %v5814
        %5943 = vst [vmem:[%s178 + $0x3f0] sm:$0xff] %v5815
        %5944 = vst [vmem:[%s178 + $0x3f8] sm:$0xff] %v5816
        %s5945 = sand.u32 %s94, 1
        %s5946 = scalar_lea.sflag [#allocation3], %s5945
        %s5947 = sand.u32 %s94, 1
        %s5948 = smul.addr %s5947, 1024
        %s5949 = scalar_lea.vmem [#allocation5], %s5948
        // Predicated region
        $region37: #{tpu_custom_call.1} parent=31 // pred_check
          %p5950 = pneg %p104
        $region38: #{tpu_custom_call.1} parent=31 // pred_check_branch
          %5952 = sbr.rel (%p5950) target = $region40
        $region39: #{tpu_custom_call.1} parent=31 // pred_region
          %s5953 = smul.u32 128, %s18
          %5955 = vsyncadd %s5946, 0
          %s5956 = smul.addr %s5953, 8
          %s5957 = scalar_lea.hbm %s3, %s5956
          %s5958 = sshll.u32 %s5949, 4
          %s5959 = int_to_ptr.vmem [resolvable:$true] %s5958
          %s5960 = sshll.u32 %s5957, 4
          %s5961 = int_to_ptr.hbm [resolvable:$true] %s5960
          %5966 = dma.vmem_to_hbm [thread:$0]  %s5959, 16384, %s5961, %s5946, 128, 128, 8
        $region40: #{tpu_custom_call.1} parent=31 // pred_fallthru
          _
      $region32: #{tpu_custom_call.1} parent=5 // pred_fallthru
        _
      %p5967 = scmp.le.s32.totalorder 2, %s13
      // Predicated region
      $region41: #{tpu_custom_call.1} parent=5 // pred_check
        %p5968 = pneg %p5967
      $region42: #{tpu_custom_call.1} parent=5 // pred_check_branch
        %5970 = sbr.rel (%p5968) target = $region44
      $region43: #{tpu_custom_call.1} parent=5 // pred_region
        %s5971 = ssub.s32 %s13, 2
        // Predicated region
        $region45: #{tpu_custom_call.1} parent=43 // pred_check
          %p5972 = pneg %p110
        $region46: #{tpu_custom_call.1} parent=43 // pred_check_branch
          %5974 = sbr.rel (%p5972) target = $region48
        $region47: #{tpu_custom_call.1} parent=43 // pred_region
          %s5975 = sand.u32 %s95, 1
          %s5976 = scalar_lea.sflag [#allocation3], %s5975
          %s5977 = sand.u32 %s95, 1
          %s5978 = smul.addr %s5977, 1024
          %s5979 = scalar_lea.vmem [#allocation5], %s5978
          %5981 = dma.done %s5976, 16384
        $region48: #{tpu_custom_call.1} parent=43 // pred_fallthru
          _
      $region44: #{tpu_custom_call.1} parent=5 // pred_fallthru
        _
    $region6: #{tpu_custom_call.1} parent=1 // loop_footer
      %s17 = sadd.s32 1, %s13
    $region7: #{tpu_custom_call.1} parent=1 // loop_footer_branch
      %12 = sbr.rel target = $region3
    $region8: #{tpu_custom_call.1} parent=1 // loop_exit
      _
    %5982 = vsyncpa [#allocation3], 1
    %s5983 = scalar_lea.sflag [#allocation3], 1
    %5984 = vsyncpa %s5983, 1
    %5985 = vsyncpa [#allocation4], 1
    %s5986 = scalar_lea.sflag [#allocation4], 1
    %5987 = vsyncpa %s5986, 1

</llo_original>
